<compile_context>
chip_gen: v7x
topology: tpu7x:2x2x1
jax: 0.10.0
libtpu: 0.0.40
codegen_flags: <defaults>
</compile_context>

<pallas_src>
from functools import lru_cache

import numpy as np
import jax
import jax.numpy as jnp
from jax.experimental import pallas as pl
from jax.experimental.pallas import tpu as pltpu


# ---------------------------------------------------------------------------
# Static edge-index constants (cached; built once per max_nodes).
# ---------------------------------------------------------------------------
@lru_cache(maxsize=None)
def _edge_constants(max_nodes):
    # torch.combinations(arange(N), r=2), then both directions (columns = edges)
    pairs = np.array([(i, j) for i in range(max_nodes)
                      for j in range(i + 1, max_nodes)], dtype=np.int64)
    src_ids = np.concatenate([pairs[:, 0], pairs[:, 1]])
    dst_ids = np.concatenate([pairs[:, 1], pairs[:, 0]])
    eye = np.eye(max_nodes, dtype=np.float32)
    src_oh = eye[src_ids]          # (E, N)  x_src = src_oh @ nodes
    dst_oh = eye[dst_ids]          # (E, N)  x_dst = dst_oh @ nodes
    scat = eye[dst_ids].T          # (N, E)  out   = scat @ per_edge
    return src_oh, dst_oh, scat


# ---------------------------------------------------------------------------
# Parameter init (deterministic, PyTorch-style uniform(-1/sqrt(fan_in), ...))
# ---------------------------------------------------------------------------
def _uniform(key, shape, bound):
    return jax.random.uniform(key, shape, jnp.float32, -bound, bound)


def _linear(key, fan_in, fan_out):
    k1, k2 = jax.random.split(key)
    bound = 1.0 / np.sqrt(fan_in)
    return _uniform(k1, (fan_in, fan_out), bound), _uniform(k2, (1, fan_out), bound)


def init_params(key, dim_z, edge_dim, layers, max_nodes):
    H0 = layers[0]
    keys = iter(jax.random.split(key, 64))
    bound = 1.0 / np.sqrt(H0)

    # GRU weights fused along the gate axis: [reset | update | new]
    gru = dict(
        w_ih=_uniform(next(keys), (dim_z, 3 * H0), bound),
        w_hh=_uniform(next(keys), (H0, 3 * H0), bound),
        b_ih=_uniform(next(keys), (1, 3 * H0), bound),
        b_hh=_uniform(next(keys), (1, 3 * H0), bound),
    )

    # Edge generator MLP([2*H0, 4*H0, edge_dim])
    w1, b1 = _linear(next(keys), 2 * H0, 4 * H0)
    w2, b2 = _linear(next(keys), 4 * H0, edge_dim)
    edge_gen = dict(w1=w1, b1=b1, w2=w2, b2=b2)

    # EdgeConv layers + attention MLP([edge_dim + cin, edge_dim//2, 1])
    convs = []
    for i in range(len(layers) - 1):
        cin, cout = layers[i], layers[i + 1]
        w, b = _linear(next(keys), cin, cout)
        wa1, ba1 = _linear(next(keys), edge_dim + cin, edge_dim // 2)
        wa2, ba2 = _linear(next(keys), edge_dim // 2, 1)
        convs.append(dict(w=w, b=b, wa1=wa1, ba1=ba1, wa2=wa2, ba2=ba2))
    return dict(gru=gru, edge_gen=edge_gen, convs=convs)


# ---------------------------------------------------------------------------
# Host-side packing: one f32 slab, every entry at an (8,128)-aligned offset.
# Done ONCE at init time; forward calls do zero host work.
# ---------------------------------------------------------------------------
def pack_mpgg(params, layers, max_nodes, edge_dim):
    H0 = layers[0]
    g, eg = params["gru"], params["edge_gen"]
    src_oh, dst_oh, scat = _edge_constants(max_nodes)

    # Fold the hidden-gate biases for r/z into the (precomputed) input
    # projection bias; only the n-gate hidden bias is needed per step.
    b_ih = np.asarray(g["b_ih"], np.float32)
    b_hh = np.asarray(g["b_hh"], np.float32)
    b_gi = b_ih.copy()
    b_gi[:, :2 * H0] += b_hh[:, :2 * H0]
    b_hn = b_hh[:, 2 * H0:]

    entries = [
        ("w_ih", g["w_ih"]), ("w_hh", g["w_hh"]),
        ("b_gi", b_gi), ("b_hn", b_hn),
        ("src_oh", src_oh), ("dst_oh", dst_oh), ("scat", scat),
        ("w1", eg["w1"]), ("b1", eg["b1"]), ("w2", eg["w2"]), ("b2", eg["b2"]),
    ]
    for i, cv in enumerate(params["convs"]):
        entries += [(f"w_{i}", cv["w"]), (f"b_{i}", cv["b"]),
                    (f"wa1_{i}", cv["wa1"]), (f"ba1_{i}", cv["ba1"]),
                    (f"wa2_{i}", cv["wa2"]), (f"ba2_{i}", cv["ba2"])]

    width = max(int(np.asarray(a).shape[1]) for _, a in entries)
    width = max(128, ((width + 127) // 128) * 128)

    layout = {}
    blocks = []
    offset = 0
    for name, a in entries:
        a = np.asarray(a, np.float32)
        nr, nc = a.shape
        nr_pad = ((nr + 7) // 8) * 8
        blk = np.zeros((nr_pad, width), np.float32)
        blk[:nr, :nc] = a
        layout[name] = (offset, nr, nc)
        blocks.append(blk)
        offset += nr_pad
    slab = jnp.asarray(np.concatenate(blocks, axis=0))
    return slab, layout


# ---------------------------------------------------------------------------
# Fused kernel: GRU node generation -> edge generator MLP -> EdgeConv stack.
# One grid step == one graph (one latent z row).
# ---------------------------------------------------------------------------
def make_mpgg_kernel(layout, max_nodes, H0, n_convs):
    def kernel(z_all_ref, slab_ref, out_ref):
        def get(name):
            r0, nr, nc = layout[name]            # static -> free ref view
            return slab_ref[r0:r0 + nr, :nc]

        b = pl.program_id(0)
        z = z_all_ref[pl.ds(b, 1), :]                                # (1, dz)

        # ---- stage 1: GRU over max_nodes steps on the repeated latent z ----
        gi = (jnp.dot(z, get("w_ih"), preferred_element_type=jnp.float32)
              + get("b_gi"))                                         # (1, 3H0)
        gi_r, gi_z, gi_n = gi[:, :H0], gi[:, H0:2 * H0], gi[:, 2 * H0:]
        whh = get("w_hh")                                            # (H0, 3H0)
        b_hn = get("b_hn")                                           # (1, H0)

        h = jnp.zeros((1, H0), jnp.float32)
        hs = []
        for _ in range(max_nodes):                   # fully unrolled (static)
            gh = jnp.dot(h, whh, preferred_element_type=jnp.float32)  # (1, 3H0)
            r = jax.nn.sigmoid(gi_r + gh[:, :H0])
            zt = jax.nn.sigmoid(gi_z + gh[:, H0:2 * H0])
            n = jnp.tanh(gi_n + r * (gh[:, 2 * H0:] + b_hn))
            h = (1.0 - zt) * n + zt * h
            hs.append(h)
        nodes = jnp.concatenate(hs, axis=0)                          # (N, H0)

        # ---- stage 2: edge generator MLP over all ordered node pairs -------
        src_oh = get("src_oh")                                       # (E, N)
        dst_oh = get("dst_oh")                                       # (E, N)
        scat = get("scat")                                           # (N, E)
        xs0 = jnp.dot(src_oh, nodes, preferred_element_type=jnp.float32)  # (E, H0)
        xd0 = jnp.dot(dst_oh, nodes, preferred_element_type=jnp.float32)  # (E, H0)
        pair = jnp.concatenate([xs0, xd0], axis=1)                   # (E, 2H0)
        eh = jnp.maximum(
            jnp.dot(pair, get("w1"), preferred_element_type=jnp.float32)
            + get("b1"), 0.0)                                        # ReLU
        edges = (jnp.dot(eh, get("w2"), preferred_element_type=jnp.float32)
                 + get("b2"))                                        # (E, edge_dim)

        # ---- stage 3: EdgeConv stack (ReLU between, none after last) -------
        xs = xs0
        for i in range(n_convs):
            if i > 0:
                xs = jnp.dot(src_oh, nodes,
                             preferred_element_type=jnp.float32)     # (E, Cin)
            cat = jnp.concatenate([edges, xs], axis=1)               # (E, ed+Cin)
            ah = jnp.maximum(
                jnp.dot(cat, get(f"wa1_{i}"), preferred_element_type=jnp.float32)
                + get(f"ba1_{i}"), 0.0)                              # ReLU
            alpha = (jnp.dot(ah, get(f"wa2_{i}"), preferred_element_type=jnp.float32)
                     + get(f"ba2_{i}"))                              # (E, 1)
            msg = (jnp.dot(xs, get(f"w_{i}"), preferred_element_type=jnp.float32)
                   + get(f"b_{i}"))                                  # (E, Cout)
            nodes = jnp.dot(scat, alpha * msg,
                            preferred_element_type=jnp.float32)      # (N, Cout)
            if i < n_convs - 1:
                nodes = jnp.maximum(nodes, 0.0)

        out_ref[0] = nodes                                           # full-block store
    return kernel


# ---------------------------------------------------------------------------
# Forward builder: whole problem in VMEM, grid over the batch of latents.
# ---------------------------------------------------------------------------
def build_forward(layout, layers, max_nodes, edge_dim):
    layers = tuple(layers)
    H0, out_dim = layers[0], layers[-1]
    n_convs = len(layers) - 1
    N = max_nodes

    @jax.jit
    def fwd(slab, z):
        B = z.shape[0]
        kernel = make_mpgg_kernel(layout, N, H0, n_convs)
        return pl.pallas_call(
            kernel,
            out_shape=jax.ShapeDtypeStruct((B, N, out_dim), jnp.float32),
            grid=(B,),
            in_specs=[
                # Constant block index across the grid -> DMA'd once, stays resident.
                pl.BlockSpec(z.shape, lambda b: (0, 0)),
                pl.BlockSpec(slab.shape, lambda b: (0, 0)),
            ],
            out_specs=pl.BlockSpec((1, N, out_dim), lambda b: (b, 0, 0)),
            compiler_params=pltpu.CompilerParams(
                dimension_semantics=("parallel",)),   # shards graphs over v7x's 2 TCs
        )(z, slab)

    return fwd


if __name__ == "__main__":
    dim_z, edge_dim, layers, max_nodes = 8, 16, [32, 16, 8], 8
    batch = 2

    key = jax.random.PRNGKey(0)
    pkey, zkey = jax.random.split(key)
    params = init_params(pkey, dim_z, edge_dim, layers, max_nodes)

    # One-time host-side packing (params + cached gather/scatter constants).
    slab, layout = pack_mpgg(params, layers, max_nodes, edge_dim)
    fwd = build_forward(layout, layers, max_nodes, edge_dim)

    # Batched latents (B, dim_z); B=1 row reproduces the original single-graph forward.
    z = jax.random.normal(zkey, (batch, dim_z), dtype=jnp.float32)

    out = fwd(slab, z)
    jax.block_until_ready(out)
    assert out.shape == (batch, max_nodes, layers[-1])
    assert bool(jnp.all(jnp.isfinite(out)))
    print("KERNEL_OK")
</pallas_src>

<mosaic_0001>
module attributes {stable_mosaic.version = 11 : i64} {
  func.func @kernel(%arg0: i32, %arg1: memref<2x8xf32, #tpu.memory_space<vmem>>, %arg2: memref<576x128xf32, #tpu.memory_space<vmem>>, %arg3: memref<1x8x8xf32, #tpu.memory_space<vmem>>) attributes {dimension_semantics = [#tpu.dimension_semantics<parallel>], iteration_bounds = array<i64: 2>, scalar_prefetch = 0 : i64, scratch_operands = 0 : i64, tpu.core_type = #tpu.core_type<tc>, window_params = [{pipeline_mode = #tpu.pipeline_mode<synchronous>, transform_indices = @transform_0, window_bounds = array<i64: 2, 8>}, {pipeline_mode = #tpu.pipeline_mode<synchronous>, transform_indices = @transform_1, window_bounds = array<i64: 576, 128>}, {transform_indices = @transform_2, window_bounds = array<i64: 1, 8, 8>}]} {
    %0 = arith.index_cast %arg0 : i32 to index
    %c0 = arith.constant 0 : index
    %1 = vector.load %arg1[%0, %c0] : memref<2x8xf32, #tpu.memory_space<vmem>>, vector<1x8xf32>
    %c0_0 = arith.constant 0 : index
    %c0_1 = arith.constant 0 : index
    %2 = vector.load %arg2[%c0_0, %c0_1] : memref<576x128xf32, #tpu.memory_space<vmem>>, vector<8x96xf32>
    %cst = arith.constant dense<0.000000e+00> : vector<1x96xf32>
    %3 = tpu.matmul %1, %2, %cst {dimension_numbers = #tpu.dot_dimension_numbers<[1], [0], [0], [1], [0, 0, 1, 1], [], []>} : vector<1x8xf32>, vector<8x96xf32>, vector<1x96xf32> -> vector<1x96xf32>
    %c40 = arith.constant 40 : index
    %c0_2 = arith.constant 0 : index
    %4 = vector.load %arg2[%c40, %c0_2] : memref<576x128xf32, #tpu.memory_space<vmem>>, vector<1x96xf32>
    %5 = arith.addf %3, %4 : vector<1x96xf32>
    %6 = vector.extract_strided_slice %5 {offsets = [0, 0], sizes = [1, 32], strides = [1, 1]} : vector<1x96xf32> to vector<1x32xf32>
    %7 = vector.extract_strided_slice %5 {offsets = [0, 32], sizes = [1, 32], strides = [1, 1]} : vector<1x96xf32> to vector<1x32xf32>
    %8 = vector.extract_strided_slice %5 {offsets = [0, 64], sizes = [1, 32], strides = [1, 1]} : vector<1x96xf32> to vector<1x32xf32>
    %c8 = arith.constant 8 : index
    %c0_3 = arith.constant 0 : index
    %9 = vector.load %arg2[%c8, %c0_3] : memref<576x128xf32, #tpu.memory_space<vmem>>, vector<32x96xf32>
    %c48 = arith.constant 48 : index
    %c0_4 = arith.constant 0 : index
    %10 = vector.load %arg2[%c48, %c0_4] : memref<576x128xf32, #tpu.memory_space<vmem>>, vector<1x32xf32>
    %cst_5 = arith.constant 0.000000e+00 : f32
    %11 = vector.broadcast %cst_5 : f32 to vector<1x32xf32>
    %cst_6 = arith.constant dense<0.000000e+00> : vector<1x96xf32>
    %12 = tpu.matmul %11, %9, %cst_6 {dimension_numbers = #tpu.dot_dimension_numbers<[1], [0], [0], [1], [0, 0, 1, 1], [], []>} : vector<1x32xf32>, vector<32x96xf32>, vector<1x96xf32> -> vector<1x96xf32>
    %13 = vector.extract_strided_slice %12 {offsets = [0, 0], sizes = [1, 32], strides = [1, 1]} : vector<1x96xf32> to vector<1x32xf32>
    %14 = arith.addf %6, %13 : vector<1x32xf32>
    %15 = arith.negf %14 : vector<1x32xf32>
    %16 = math.exp %15 : vector<1x32xf32>
    %cst_7 = arith.constant 1.000000e+00 : f32
    %17 = vector.broadcast %cst_7 : f32 to vector<1x32xf32>
    %18 = arith.addf %17, %16 : vector<1x32xf32>
    %19 = arith.divf %17, %18 : vector<1x32xf32>
    %20 = vector.extract_strided_slice %12 {offsets = [0, 32], sizes = [1, 32], strides = [1, 1]} : vector<1x96xf32> to vector<1x32xf32>
    %21 = arith.addf %7, %20 : vector<1x32xf32>
    %22 = arith.negf %21 : vector<1x32xf32>
    %23 = math.exp %22 : vector<1x32xf32>
    %cst_8 = arith.constant 1.000000e+00 : f32
    %24 = vector.broadcast %cst_8 : f32 to vector<1x32xf32>
    %25 = arith.addf %24, %23 : vector<1x32xf32>
    %26 = arith.divf %24, %25 : vector<1x32xf32>
    %27 = vector.extract_strided_slice %12 {offsets = [0, 64], sizes = [1, 32], strides = [1, 1]} : vector<1x96xf32> to vector<1x32xf32>
    %28 = arith.addf %27, %10 : vector<1x32xf32>
    %29 = arith.mulf %19, %28 : vector<1x32xf32>
    %30 = arith.addf %8, %29 : vector<1x32xf32>
    %31 = math.tanh %30 : vector<1x32xf32>
    %cst_9 = arith.constant 1.000000e+00 : f32
    %32 = vector.broadcast %cst_9 : f32 to vector<1x32xf32>
    %33 = arith.subf %32, %26 : vector<1x32xf32>
    %34 = arith.mulf %33, %31 : vector<1x32xf32>
    %35 = arith.mulf %26, %11 : vector<1x32xf32>
    %36 = arith.addf %34, %35 : vector<1x32xf32>
    %cst_10 = arith.constant dense<0.000000e+00> : vector<1x96xf32>
    %37 = tpu.matmul %36, %9, %cst_10 {dimension_numbers = #tpu.dot_dimension_numbers<[1], [0], [0], [1], [0, 0, 1, 1], [], []>} : vector<1x32xf32>, vector<32x96xf32>, vector<1x96xf32> -> vector<1x96xf32>
    %38 = vector.extract_strided_slice %37 {offsets = [0, 0], sizes = [1, 32], strides = [1, 1]} : vector<1x96xf32> to vector<1x32xf32>
    %39 = arith.addf %6, %38 : vector<1x32xf32>
    %40 = arith.negf %39 : vector<1x32xf32>
    %41 = math.exp %40 : vector<1x32xf32>
    %cst_11 = arith.constant 1.000000e+00 : f32
    %42 = vector.broadcast %cst_11 : f32 to vector<1x32xf32>
    %43 = arith.addf %42, %41 : vector<1x32xf32>
    %44 = arith.divf %42, %43 : vector<1x32xf32>
    %45 = vector.extract_strided_slice %37 {offsets = [0, 32], sizes = [1, 32], strides = [1, 1]} : vector<1x96xf32> to vector<1x32xf32>
    %46 = arith.addf %7, %45 : vector<1x32xf32>
    %47 = arith.negf %46 : vector<1x32xf32>
    %48 = math.exp %47 : vector<1x32xf32>
    %cst_12 = arith.constant 1.000000e+00 : f32
    %49 = vector.broadcast %cst_12 : f32 to vector<1x32xf32>
    %50 = arith.addf %49, %48 : vector<1x32xf32>
    %51 = arith.divf %49, %50 : vector<1x32xf32>
    %52 = vector.extract_strided_slice %37 {offsets = [0, 64], sizes = [1, 32], strides = [1, 1]} : vector<1x96xf32> to vector<1x32xf32>
    %53 = arith.addf %52, %10 : vector<1x32xf32>
    %54 = arith.mulf %44, %53 : vector<1x32xf32>
    %55 = arith.addf %8, %54 : vector<1x32xf32>
    %56 = math.tanh %55 : vector<1x32xf32>
    %cst_13 = arith.constant 1.000000e+00 : f32
    %57 = vector.broadcast %cst_13 : f32 to vector<1x32xf32>
    %58 = arith.subf %57, %51 : vector<1x32xf32>
    %59 = arith.mulf %58, %56 : vector<1x32xf32>
    %60 = arith.mulf %51, %36 : vector<1x32xf32>
    %61 = arith.addf %59, %60 : vector<1x32xf32>
    %cst_14 = arith.constant dense<0.000000e+00> : vector<1x96xf32>
    %62 = tpu.matmul %61, %9, %cst_14 {dimension_numbers = #tpu.dot_dimension_numbers<[1], [0], [0], [1], [0, 0, 1, 1], [], []>} : vector<1x32xf32>, vector<32x96xf32>, vector<1x96xf32> -> vector<1x96xf32>
    %63 = vector.extract_strided_slice %62 {offsets = [0, 0], sizes = [1, 32], strides = [1, 1]} : vector<1x96xf32> to vector<1x32xf32>
    %64 = arith.addf %6, %63 : vector<1x32xf32>
    %65 = arith.negf %64 : vector<1x32xf32>
    %66 = math.exp %65 : vector<1x32xf32>
    %cst_15 = arith.constant 1.000000e+00 : f32
    %67 = vector.broadcast %cst_15 : f32 to vector<1x32xf32>
    %68 = arith.addf %67, %66 : vector<1x32xf32>
    %69 = arith.divf %67, %68 : vector<1x32xf32>
    %70 = vector.extract_strided_slice %62 {offsets = [0, 32], sizes = [1, 32], strides = [1, 1]} : vector<1x96xf32> to vector<1x32xf32>
    %71 = arith.addf %7, %70 : vector<1x32xf32>
    %72 = arith.negf %71 : vector<1x32xf32>
    %73 = math.exp %72 : vector<1x32xf32>
    %cst_16 = arith.constant 1.000000e+00 : f32
    %74 = vector.broadcast %cst_16 : f32 to vector<1x32xf32>
    %75 = arith.addf %74, %73 : vector<1x32xf32>
    %76 = arith.divf %74, %75 : vector<1x32xf32>
    %77 = vector.extract_strided_slice %62 {offsets = [0, 64], sizes = [1, 32], strides = [1, 1]} : vector<1x96xf32> to vector<1x32xf32>
    %78 = arith.addf %77, %10 : vector<1x32xf32>
    %79 = arith.mulf %69, %78 : vector<1x32xf32>
    %80 = arith.addf %8, %79 : vector<1x32xf32>
    %81 = math.tanh %80 : vector<1x32xf32>
    %cst_17 = arith.constant 1.000000e+00 : f32
    %82 = vector.broadcast %cst_17 : f32 to vector<1x32xf32>
    %83 = arith.subf %82, %76 : vector<1x32xf32>
    %84 = arith.mulf %83, %81 : vector<1x32xf32>
    %85 = arith.mulf %76, %61 : vector<1x32xf32>
    %86 = arith.addf %84, %85 : vector<1x32xf32>
    %cst_18 = arith.constant dense<0.000000e+00> : vector<1x96xf32>
    %87 = tpu.matmul %86, %9, %cst_18 {dimension_numbers = #tpu.dot_dimension_numbers<[1], [0], [0], [1], [0, 0, 1, 1], [], []>} : vector<1x32xf32>, vector<32x96xf32>, vector<1x96xf32> -> vector<1x96xf32>
    %88 = vector.extract_strided_slice %87 {offsets = [0, 0], sizes = [1, 32], strides = [1, 1]} : vector<1x96xf32> to vector<1x32xf32>
    %89 = arith.addf %6, %88 : vector<1x32xf32>
    %90 = arith.negf %89 : vector<1x32xf32>
    %91 = math.exp %90 : vector<1x32xf32>
    %cst_19 = arith.constant 1.000000e+00 : f32
    %92 = vector.broadcast %cst_19 : f32 to vector<1x32xf32>
    %93 = arith.addf %92, %91 : vector<1x32xf32>
    %94 = arith.divf %92, %93 : vector<1x32xf32>
    %95 = vector.extract_strided_slice %87 {offsets = [0, 32], sizes = [1, 32], strides = [1, 1]} : vector<1x96xf32> to vector<1x32xf32>
    %96 = arith.addf %7, %95 : vector<1x32xf32>
    %97 = arith.negf %96 : vector<1x32xf32>
    %98 = math.exp %97 : vector<1x32xf32>
    %cst_20 = arith.constant 1.000000e+00 : f32
    %99 = vector.broadcast %cst_20 : f32 to vector<1x32xf32>
    %100 = arith.addf %99, %98 : vector<1x32xf32>
    %101 = arith.divf %99, %100 : vector<1x32xf32>
    %102 = vector.extract_strided_slice %87 {offsets = [0, 64], sizes = [1, 32], strides = [1, 1]} : vector<1x96xf32> to vector<1x32xf32>
    %103 = arith.addf %102, %10 : vector<1x32xf32>
    %104 = arith.mulf %94, %103 : vector<1x32xf32>
    %105 = arith.addf %8, %104 : vector<1x32xf32>
    %106 = math.tanh %105 : vector<1x32xf32>
    %cst_21 = arith.constant 1.000000e+00 : f32
    %107 = vector.broadcast %cst_21 : f32 to vector<1x32xf32>
    %108 = arith.subf %107, %101 : vector<1x32xf32>
    %109 = arith.mulf %108, %106 : vector<1x32xf32>
    %110 = arith.mulf %101, %86 : vector<1x32xf32>
    %111 = arith.addf %109, %110 : vector<1x32xf32>
    %cst_22 = arith.constant dense<0.000000e+00> : vector<1x96xf32>
    %112 = tpu.matmul %111, %9, %cst_22 {dimension_numbers = #tpu.dot_dimension_numbers<[1], [0], [0], [1], [0, 0, 1, 1], [], []>} : vector<1x32xf32>, vector<32x96xf32>, vector<1x96xf32> -> vector<1x96xf32>
    %113 = vector.extract_strided_slice %112 {offsets = [0, 0], sizes = [1, 32], strides = [1, 1]} : vector<1x96xf32> to vector<1x32xf32>
    %114 = arith.addf %6, %113 : vector<1x32xf32>
    %115 = arith.negf %114 : vector<1x32xf32>
    %116 = math.exp %115 : vector<1x32xf32>
    %cst_23 = arith.constant 1.000000e+00 : f32
    %117 = vector.broadcast %cst_23 : f32 to vector<1x32xf32>
    %118 = arith.addf %117, %116 : vector<1x32xf32>
    %119 = arith.divf %117, %118 : vector<1x32xf32>
    %120 = vector.extract_strided_slice %112 {offsets = [0, 32], sizes = [1, 32], strides = [1, 1]} : vector<1x96xf32> to vector<1x32xf32>
    %121 = arith.addf %7, %120 : vector<1x32xf32>
    %122 = arith.negf %121 : vector<1x32xf32>
    %123 = math.exp %122 : vector<1x32xf32>
    %cst_24 = arith.constant 1.000000e+00 : f32
    %124 = vector.broadcast %cst_24 : f32 to vector<1x32xf32>
    %125 = arith.addf %124, %123 : vector<1x32xf32>
    %126 = arith.divf %124, %125 : vector<1x32xf32>
    %127 = vector.extract_strided_slice %112 {offsets = [0, 64], sizes = [1, 32], strides = [1, 1]} : vector<1x96xf32> to vector<1x32xf32>
    %128 = arith.addf %127, %10 : vector<1x32xf32>
    %129 = arith.mulf %119, %128 : vector<1x32xf32>
    %130 = arith.addf %8, %129 : vector<1x32xf32>
    %131 = math.tanh %130 : vector<1x32xf32>
    %cst_25 = arith.constant 1.000000e+00 : f32
    %132 = vector.broadcast %cst_25 : f32 to vector<1x32xf32>
    %133 = arith.subf %132, %126 : vector<1x32xf32>
    %134 = arith.mulf %133, %131 : vector<1x32xf32>
    %135 = arith.mulf %126, %111 : vector<1x32xf32>
    %136 = arith.addf %134, %135 : vector<1x32xf32>
    %cst_26 = arith.constant dense<0.000000e+00> : vector<1x96xf32>
    %137 = tpu.matmul %136, %9, %cst_26 {dimension_numbers = #tpu.dot_dimension_numbers<[1], [0], [0], [1], [0, 0, 1, 1], [], []>} : vector<1x32xf32>, vector<32x96xf32>, vector<1x96xf32> -> vector<1x96xf32>
    %138 = vector.extract_strided_slice %137 {offsets = [0, 0], sizes = [1, 32], strides = [1, 1]} : vector<1x96xf32> to vector<1x32xf32>
    %139 = arith.addf %6, %138 : vector<1x32xf32>
    %140 = arith.negf %139 : vector<1x32xf32>
    %141 = math.exp %140 : vector<1x32xf32>
    %cst_27 = arith.constant 1.000000e+00 : f32
    %142 = vector.broadcast %cst_27 : f32 to vector<1x32xf32>
    %143 = arith.addf %142, %141 : vector<1x32xf32>
    %144 = arith.divf %142, %143 : vector<1x32xf32>
    %145 = vector.extract_strided_slice %137 {offsets = [0, 32], sizes = [1, 32], strides = [1, 1]} : vector<1x96xf32> to vector<1x32xf32>
    %146 = arith.addf %7, %145 : vector<1x32xf32>
    %147 = arith.negf %146 : vector<1x32xf32>
    %148 = math.exp %147 : vector<1x32xf32>
    %cst_28 = arith.constant 1.000000e+00 : f32
    %149 = vector.broadcast %cst_28 : f32 to vector<1x32xf32>
    %150 = arith.addf %149, %148 : vector<1x32xf32>
    %151 = arith.divf %149, %150 : vector<1x32xf32>
    %152 = vector.extract_strided_slice %137 {offsets = [0, 64], sizes = [1, 32], strides = [1, 1]} : vector<1x96xf32> to vector<1x32xf32>
    %153 = arith.addf %152, %10 : vector<1x32xf32>
    %154 = arith.mulf %144, %153 : vector<1x32xf32>
    %155 = arith.addf %8, %154 : vector<1x32xf32>
    %156 = math.tanh %155 : vector<1x32xf32>
    %cst_29 = arith.constant 1.000000e+00 : f32
    %157 = vector.broadcast %cst_29 : f32 to vector<1x32xf32>
    %158 = arith.subf %157, %151 : vector<1x32xf32>
    %159 = arith.mulf %158, %156 : vector<1x32xf32>
    %160 = arith.mulf %151, %136 : vector<1x32xf32>
    %161 = arith.addf %159, %160 : vector<1x32xf32>
    %cst_30 = arith.constant dense<0.000000e+00> : vector<1x96xf32>
    %162 = tpu.matmul %161, %9, %cst_30 {dimension_numbers = #tpu.dot_dimension_numbers<[1], [0], [0], [1], [0, 0, 1, 1], [], []>} : vector<1x32xf32>, vector<32x96xf32>, vector<1x96xf32> -> vector<1x96xf32>
    %163 = vector.extract_strided_slice %162 {offsets = [0, 0], sizes = [1, 32], strides = [1, 1]} : vector<1x96xf32> to vector<1x32xf32>
    %164 = arith.addf %6, %163 : vector<1x32xf32>
    %165 = arith.negf %164 : vector<1x32xf32>
    %166 = math.exp %165 : vector<1x32xf32>
    %cst_31 = arith.constant 1.000000e+00 : f32
    %167 = vector.broadcast %cst_31 : f32 to vector<1x32xf32>
    %168 = arith.addf %167, %166 : vector<1x32xf32>
    %169 = arith.divf %167, %168 : vector<1x32xf32>
    %170 = vector.extract_strided_slice %162 {offsets = [0, 32], sizes = [1, 32], strides = [1, 1]} : vector<1x96xf32> to vector<1x32xf32>
    %171 = arith.addf %7, %170 : vector<1x32xf32>
    %172 = arith.negf %171 : vector<1x32xf32>
    %173 = math.exp %172 : vector<1x32xf32>
    %cst_32 = arith.constant 1.000000e+00 : f32
    %174 = vector.broadcast %cst_32 : f32 to vector<1x32xf32>
    %175 = arith.addf %174, %173 : vector<1x32xf32>
    %176 = arith.divf %174, %175 : vector<1x32xf32>
    %177 = vector.extract_strided_slice %162 {offsets = [0, 64], sizes = [1, 32], strides = [1, 1]} : vector<1x96xf32> to vector<1x32xf32>
    %178 = arith.addf %177, %10 : vector<1x32xf32>
    %179 = arith.mulf %169, %178 : vector<1x32xf32>
    %180 = arith.addf %8, %179 : vector<1x32xf32>
    %181 = math.tanh %180 : vector<1x32xf32>
    %cst_33 = arith.constant 1.000000e+00 : f32
    %182 = vector.broadcast %cst_33 : f32 to vector<1x32xf32>
    %183 = arith.subf %182, %176 : vector<1x32xf32>
    %184 = arith.mulf %183, %181 : vector<1x32xf32>
    %185 = arith.mulf %176, %161 : vector<1x32xf32>
    %186 = arith.addf %184, %185 : vector<1x32xf32>
    %cst_34 = arith.constant dense<0.000000e+00> : vector<1x96xf32>
    %187 = tpu.matmul %186, %9, %cst_34 {dimension_numbers = #tpu.dot_dimension_numbers<[1], [0], [0], [1], [0, 0, 1, 1], [], []>} : vector<1x32xf32>, vector<32x96xf32>, vector<1x96xf32> -> vector<1x96xf32>
    %188 = vector.extract_strided_slice %187 {offsets = [0, 0], sizes = [1, 32], strides = [1, 1]} : vector<1x96xf32> to vector<1x32xf32>
    %189 = arith.addf %6, %188 : vector<1x32xf32>
    %190 = arith.negf %189 : vector<1x32xf32>
    %191 = math.exp %190 : vector<1x32xf32>
    %cst_35 = arith.constant 1.000000e+00 : f32
    %192 = vector.broadcast %cst_35 : f32 to vector<1x32xf32>
    %193 = arith.addf %192, %191 : vector<1x32xf32>
    %194 = arith.divf %192, %193 : vector<1x32xf32>
    %195 = vector.extract_strided_slice %187 {offsets = [0, 32], sizes = [1, 32], strides = [1, 1]} : vector<1x96xf32> to vector<1x32xf32>
    %196 = arith.addf %7, %195 : vector<1x32xf32>
    %197 = arith.negf %196 : vector<1x32xf32>
    %198 = math.exp %197 : vector<1x32xf32>
    %cst_36 = arith.constant 1.000000e+00 : f32
    %199 = vector.broadcast %cst_36 : f32 to vector<1x32xf32>
    %200 = arith.addf %199, %198 : vector<1x32xf32>
    %201 = arith.divf %199, %200 : vector<1x32xf32>
    %202 = vector.extract_strided_slice %187 {offsets = [0, 64], sizes = [1, 32], strides = [1, 1]} : vector<1x96xf32> to vector<1x32xf32>
    %203 = arith.addf %202, %10 : vector<1x32xf32>
    %204 = arith.mulf %194, %203 : vector<1x32xf32>
    %205 = arith.addf %8, %204 : vector<1x32xf32>
    %206 = math.tanh %205 : vector<1x32xf32>
    %cst_37 = arith.constant 1.000000e+00 : f32
    %207 = vector.broadcast %cst_37 : f32 to vector<1x32xf32>
    %208 = arith.subf %207, %201 : vector<1x32xf32>
    %209 = arith.mulf %208, %206 : vector<1x32xf32>
    %210 = arith.mulf %201, %186 : vector<1x32xf32>
    %211 = arith.addf %209, %210 : vector<1x32xf32>
    %212 = tpu.concatenate %36, %61, %86, %111, %136, %161, %186, %211 in 0 : vector<1x32xf32>, vector<1x32xf32>, vector<1x32xf32>, vector<1x32xf32>, vector<1x32xf32>, vector<1x32xf32>, vector<1x32xf32>, vector<1x32xf32> -> vector<8x32xf32>
    %c56 = arith.constant 56 : index
    %c0_38 = arith.constant 0 : index
    %213 = vector.load %arg2[%c56, %c0_38] : memref<576x128xf32, #tpu.memory_space<vmem>>, vector<56x8xf32>
    %c112 = arith.constant 112 : index
    %c0_39 = arith.constant 0 : index
    %214 = vector.load %arg2[%c112, %c0_39] : memref<576x128xf32, #tpu.memory_space<vmem>>, vector<56x8xf32>
    %c168 = arith.constant 168 : index
    %c0_40 = arith.constant 0 : index
    %215 = vector.load %arg2[%c168, %c0_40] : memref<576x128xf32, #tpu.memory_space<vmem>>, vector<8x56xf32>
    %cst_41 = arith.constant dense<0.000000e+00> : vector<56x32xf32>
    %216 = tpu.matmul %213, %212, %cst_41 {dimension_numbers = #tpu.dot_dimension_numbers<[1], [0], [0], [1], [0, 0, 1, 1], [], []>} : vector<56x8xf32>, vector<8x32xf32>, vector<56x32xf32> -> vector<56x32xf32>
    %cst_42 = arith.constant dense<0.000000e+00> : vector<56x32xf32>
    %217 = tpu.matmul %214, %212, %cst_42 {dimension_numbers = #tpu.dot_dimension_numbers<[1], [0], [0], [1], [0, 0, 1, 1], [], []>} : vector<56x8xf32>, vector<8x32xf32>, vector<56x32xf32> -> vector<56x32xf32>
    %218 = tpu.concatenate %216, %217 in 1 : vector<56x32xf32>, vector<56x32xf32> -> vector<56x64xf32>
    %c176 = arith.constant 176 : index
    %c0_43 = arith.constant 0 : index
    %219 = vector.load %arg2[%c176, %c0_43] : memref<576x128xf32, #tpu.memory_space<vmem>>, vector<64x128xf32>
    %cst_44 = arith.constant dense<0.000000e+00> : vector<56x128xf32>
    %220 = tpu.matmul %218, %219, %cst_44 {dimension_numbers = #tpu.dot_dimension_numbers<[1], [0], [0], [1], [0, 0, 1, 1], [], []>} : vector<56x64xf32>, vector<64x128xf32>, vector<56x128xf32> -> vector<56x128xf32>
    %c240 = arith.constant 240 : index
    %c0_45 = arith.constant 0 : index
    %221 = vector.load %arg2[%c240, %c0_45] : memref<576x128xf32, #tpu.memory_space<vmem>>, vector<1x128xf32>
    %222 = vector.broadcast %221 : vector<1x128xf32> to vector<56x128xf32>
    %223 = arith.addf %220, %222 : vector<56x128xf32>
    %cst_46 = arith.constant 0.000000e+00 : f32
    %224 = vector.broadcast %cst_46 : f32 to vector<56x128xf32>
    %225 = arith.maximumf %223, %224 : vector<56x128xf32>
    %c248 = arith.constant 248 : index
    %c0_47 = arith.constant 0 : index
    %226 = vector.load %arg2[%c248, %c0_47] : memref<576x128xf32, #tpu.memory_space<vmem>>, vector<128x16xf32>
    %cst_48 = arith.constant dense<0.000000e+00> : vector<56x16xf32>
    %227 = tpu.matmul %225, %226, %cst_48 {dimension_numbers = #tpu.dot_dimension_numbers<[1], [0], [0], [1], [0, 0, 1, 1], [], []>} : vector<56x128xf32>, vector<128x16xf32>, vector<56x16xf32> -> vector<56x16xf32>
    %c376 = arith.constant 376 : index
    %c0_49 = arith.constant 0 : index
    %228 = vector.load %arg2[%c376, %c0_49] : memref<576x128xf32, #tpu.memory_space<vmem>>, vector<1x16xf32>
    %229 = vector.broadcast %228 : vector<1x16xf32> to vector<56x16xf32>
    %230 = arith.addf %227, %229 : vector<56x16xf32>
    %231 = tpu.concatenate %230, %216 in 1 : vector<56x16xf32>, vector<56x32xf32> -> vector<56x48xf32>
    %c424 = arith.constant 424 : index
    %c0_50 = arith.constant 0 : index
    %232 = vector.load %arg2[%c424, %c0_50] : memref<576x128xf32, #tpu.memory_space<vmem>>, vector<48x8xf32>
    %cst_51 = arith.constant dense<0.000000e+00> : vector<56x8xf32>
    %233 = tpu.matmul %231, %232, %cst_51 {dimension_numbers = #tpu.dot_dimension_numbers<[1], [0], [0], [1], [0, 0, 1, 1], [], []>} : vector<56x48xf32>, vector<48x8xf32>, vector<56x8xf32> -> vector<56x8xf32>
    %c472 = arith.constant 472 : index
    %c0_52 = arith.constant 0 : index
    %234 = vector.load %arg2[%c472, %c0_52] : memref<576x128xf32, #tpu.memory_space<vmem>>, vector<1x8xf32>
    %235 = vector.broadcast %234 : vector<1x8xf32> to vector<56x8xf32>
    %236 = arith.addf %233, %235 : vector<56x8xf32>
    %cst_53 = arith.constant 0.000000e+00 : f32
    %237 = vector.broadcast %cst_53 : f32 to vector<56x8xf32>
    %238 = arith.maximumf %236, %237 : vector<56x8xf32>
    %c480 = arith.constant 480 : index
    %c0_54 = arith.constant 0 : index
    %239 = vector.load %arg2[%c480, %c0_54] : memref<576x128xf32, #tpu.memory_space<vmem>>, vector<8x1xf32>
    %cst_55 = arith.constant dense<0.000000e+00> : vector<56x1xf32>
    %240 = tpu.matmul %238, %239, %cst_55 {dimension_numbers = #tpu.dot_dimension_numbers<[1], [0], [0], [1], [0, 0, 1, 1], [], []>} : vector<56x8xf32>, vector<8x1xf32>, vector<56x1xf32> -> vector<56x1xf32>
    %c488 = arith.constant 488 : index
    %c0_56 = arith.constant 0 : index
    %241 = vector.load %arg2[%c488, %c0_56] : memref<576x128xf32, #tpu.memory_space<vmem>>, vector<1x1xf32>
    %242 = vector.broadcast %241 : vector<1x1xf32> to vector<56x1xf32>
    %243 = arith.addf %240, %242 : vector<56x1xf32>
    %c384 = arith.constant 384 : index
    %c0_57 = arith.constant 0 : index
    %244 = vector.load %arg2[%c384, %c0_57] : memref<576x128xf32, #tpu.memory_space<vmem>>, vector<32x16xf32>
    %cst_58 = arith.constant dense<0.000000e+00> : vector<56x16xf32>
    %245 = tpu.matmul %216, %244, %cst_58 {dimension_numbers = #tpu.dot_dimension_numbers<[1], [0], [0], [1], [0, 0, 1, 1], [], []>} : vector<56x32xf32>, vector<32x16xf32>, vector<56x16xf32> -> vector<56x16xf32>
    %c416 = arith.constant 416 : index
    %c0_59 = arith.constant 0 : index
    %246 = vector.load %arg2[%c416, %c0_59] : memref<576x128xf32, #tpu.memory_space<vmem>>, vector<1x16xf32>
    %247 = vector.broadcast %246 : vector<1x16xf32> to vector<56x16xf32>
    %248 = arith.addf %245, %247 : vector<56x16xf32>
    %249 = vector.broadcast %243 : vector<56x1xf32> to vector<56x16xf32>
    %250 = arith.mulf %249, %248 : vector<56x16xf32>
    %cst_60 = arith.constant dense<0.000000e+00> : vector<8x16xf32>
    %251 = tpu.matmul %215, %250, %cst_60 {dimension_numbers = #tpu.dot_dimension_numbers<[1], [0], [0], [1], [0, 0, 1, 1], [], []>} : vector<8x56xf32>, vector<56x16xf32>, vector<8x16xf32> -> vector<8x16xf32>
    %cst_61 = arith.constant 0.000000e+00 : f32
    %252 = vector.broadcast %cst_61 : f32 to vector<8x16xf32>
    %253 = arith.maximumf %251, %252 : vector<8x16xf32>
    %cst_62 = arith.constant dense<0.000000e+00> : vector<56x16xf32>
    %254 = tpu.matmul %213, %253, %cst_62 {dimension_numbers = #tpu.dot_dimension_numbers<[1], [0], [0], [1], [0, 0, 1, 1], [], []>} : vector<56x8xf32>, vector<8x16xf32>, vector<56x16xf32> -> vector<56x16xf32>
    %255 = tpu.concatenate %230, %254 in 1 : vector<56x16xf32>, vector<56x16xf32> -> vector<56x32xf32>
    %c520 = arith.constant 520 : index
    %c0_63 = arith.constant 0 : index
    %256 = vector.load %arg2[%c520, %c0_63] : memref<576x128xf32, #tpu.memory_space<vmem>>, vector<32x8xf32>
    %cst_64 = arith.constant dense<0.000000e+00> : vector<56x8xf32>
    %257 = tpu.matmul %255, %256, %cst_64 {dimension_numbers = #tpu.dot_dimension_numbers<[1], [0], [0], [1], [0, 0, 1, 1], [], []>} : vector<56x32xf32>, vector<32x8xf32>, vector<56x8xf32> -> vector<56x8xf32>
    %c552 = arith.constant 552 : index
    %c0_65 = arith.constant 0 : index
    %258 = vector.load %arg2[%c552, %c0_65] : memref<576x128xf32, #tpu.memory_space<vmem>>, vector<1x8xf32>
    %259 = vector.broadcast %258 : vector<1x8xf32> to vector<56x8xf32>
    %260 = arith.addf %257, %259 : vector<56x8xf32>
    %cst_66 = arith.constant 0.000000e+00 : f32
    %261 = vector.broadcast %cst_66 : f32 to vector<56x8xf32>
    %262 = arith.maximumf %260, %261 : vector<56x8xf32>
    %c560 = arith.constant 560 : index
    %c0_67 = arith.constant 0 : index
    %263 = vector.load %arg2[%c560, %c0_67] : memref<576x128xf32, #tpu.memory_space<vmem>>, vector<8x1xf32>
    %cst_68 = arith.constant dense<0.000000e+00> : vector<56x1xf32>
    %264 = tpu.matmul %262, %263, %cst_68 {dimension_numbers = #tpu.dot_dimension_numbers<[1], [0], [0], [1], [0, 0, 1, 1], [], []>} : vector<56x8xf32>, vector<8x1xf32>, vector<56x1xf32> -> vector<56x1xf32>
    %c568 = arith.constant 568 : index
    %c0_69 = arith.constant 0 : index
    %265 = vector.load %arg2[%c568, %c0_69] : memref<576x128xf32, #tpu.memory_space<vmem>>, vector<1x1xf32>
    %266 = vector.broadcast %265 : vector<1x1xf32> to vector<56x1xf32>
    %267 = arith.addf %264, %266 : vector<56x1xf32>
    %c496 = arith.constant 496 : index
    %c0_70 = arith.constant 0 : index
    %268 = vector.load %arg2[%c496, %c0_70] : memref<576x128xf32, #tpu.memory_space<vmem>>, vector<16x8xf32>
    %cst_71 = arith.constant dense<0.000000e+00> : vector<56x8xf32>
    %269 = tpu.matmul %254, %268, %cst_71 {dimension_numbers = #tpu.dot_dimension_numbers<[1], [0], [0], [1], [0, 0, 1, 1], [], []>} : vector<56x16xf32>, vector<16x8xf32>, vector<56x8xf32> -> vector<56x8xf32>
    %c512 = arith.constant 512 : index
    %c0_72 = arith.constant 0 : index
    %270 = vector.load %arg2[%c512, %c0_72] : memref<576x128xf32, #tpu.memory_space<vmem>>, vector<1x8xf32>
    %271 = vector.broadcast %270 : vector<1x8xf32> to vector<56x8xf32>
    %272 = arith.addf %269, %271 : vector<56x8xf32>
    %273 = vector.broadcast %267 : vector<56x1xf32> to vector<56x8xf32>
    %274 = arith.mulf %273, %272 : vector<56x8xf32>
    %cst_73 = arith.constant dense<0.000000e+00> : vector<8x8xf32>
    %275 = tpu.matmul %215, %274, %cst_73 {dimension_numbers = #tpu.dot_dimension_numbers<[1], [0], [0], [1], [0, 0, 1, 1], [], []>} : vector<8x56xf32>, vector<56x8xf32>, vector<8x8xf32> -> vector<8x8xf32>
    %c0_74 = arith.constant 0 : index
    %c0_75 = arith.constant 0 : index
    %c0_76 = arith.constant 0 : index
    %276 = vector.load %arg3[%c0_74, %c0_75, %c0_76] : memref<1x8x8xf32, #tpu.memory_space<vmem>>, vector<1x8x8xf32>
    %277 = vector.shape_cast %276 : vector<1x8x8xf32> to vector<8x8xf32>
    %278 = vector.shape_cast %275 : vector<8x8xf32> to vector<1x8x8xf32>
    tpu.vector_store %arg3[%c0_74, %c0_75, %c0_76], %278 {strides = array<i32>} : memref<1x8x8xf32, #tpu.memory_space<vmem>>, vector<1x8x8xf32>,
    return
  }
  func.func @transform_0(%arg0: i32) -> (i32, i32) {
    %c0_i32 = arith.constant 0 : i32
    %c0_i32_0 = arith.constant 0 : i32
    %c0_i32_1 = arith.constant 0 : i32
    return %c0_i32, %c0_i32_0 : i32, i32
  }
  func.func @transform_1(%arg0: i32) -> (i32, i32) {
    %c0_i32 = arith.constant 0 : i32
    %c0_i32_0 = arith.constant 0 : i32
    %c0_i32_1 = arith.constant 0 : i32
    return %c0_i32, %c0_i32_0 : i32, i32
  }
  func.func @transform_2(%arg0: i32) -> (i32, i32, i32) {
    %c0_i32 = arith.constant 0 : i32
    %c0_i32_0 = arith.constant 0 : i32
    %c0_i32_1 = arith.constant 0 : i32
    return %arg0, %c0_i32, %c0_i32_0 : i32, i32, i32
  }
}

</mosaic_0001>

<llo_original>
// kernel: fwd.1
$region0: #{fwd.1}
  #allocation0 [shape = 'u32[]', space=smem, size = 0x4, offset = 0x4, fixed_abs, tag = 'smem constant byte address 0x4 - core index']
  #allocation1 [shape = 'u32[144,128]{1,0:T(1,128)}', space=vmem, size = 0x12000, scoped, tag = 'internal scratch']
  %s0 = inlined_call_operand.vmem [shape: f32[2,8], index: 0, kind: input, shape index: {}]
  %s1 = inlined_call_operand.hbm [shape: f32[576,128], index: 1, kind: input, shape index: {}]
  %s2 = inlined_call_operand.hbm [shape: f32[2,8,8], index: 2, kind: output, shape index: {}]
  %s3 = sld [smem:[#allocation0]]
  $region45: #{fwd.1} parent=0
    _
  %s5 = ssub.s32 1, %s3
  %s6 = scalar_select 0, %s5, %s3
  $region1: #{fwd.1} parent=0
    #allocation2 [shape = 'u8[294912]{0}', space=vmem, size = 0x48000, scoped, tag = 'input window, operand 1, single buffered']
    #allocation3 [shape = 's32[2]{0}', space=sflag, size = 0x8, scoped, tag = 'scoped memory for fwd.1']
    #allocation4 [shape = 's32[2]{0}', space=sflag, size = 0x8, scoped, tag = 'scoped memory for fwd.1']
    #allocation5 [shape = 'u8[8192]{0}', space=vmem, size = 0x2000, scoped, tag = 'output window, operand 0']
    %7 = vsyncpa [#allocation3], 0
    %8 = vsyncpa [#allocation4], 0
    %s9 = scalar_lea.sflag [#allocation4], 1
    %10 = vsyncpa %s9, 0
    loop: start=0, step=1, limit=4
    $region2: #{fwd.1} parent=1 // loop_pre_header
      _
    $region3: #{fwd.1} parent=1 // loop_header
      %s12 = sphi 0, %s16
      %p13 = scmp.ge.s32.totalorder %s12, 4
      %s20 = sphi 0, %s20
      %s22 = sphi 0, %s20
      %s23 = sphi 0, %s22
      %s37 = sphi 0, %s23
      %s41 = sphi 0, %s41
      %s43 = sphi 0, %s41
      %s44 = sphi 0, %s43
      %s58 = sphi 0, %s44
      %s64 = sphi 0, %s66
      %s67 = sphi 0, %s64
      %s68 = sphi 0, %s67
      %s84 = sphi 0, %s68
    $region4: #{fwd.1} parent=1 // loop_header_branch
      %15 = sbr.rel (%p13) target = $region8
    $region5: #{fwd.1} parent=1 // loop_body
      %s17 = ssub.s32 %s12, 1
      %s18 = ssub.s32 %s12, 2
      %s19 = sadd.s32 %s12, 1
      %s21 = sadd.s32 %s20, 1
      %p24 = scmp.eq.s32.totalorder %s12, 1
      %p25 = scmp.ne.s32.totalorder %s20, %s22
      %p26 = scmp.eq.s32.totalorder %s12, 0
      %p27 = por %p25, %p26
      %p28 = scmp.ne.s32.totalorder %s20, %s22
      %p29 = scmp.eq.s32.totalorder %s17, 1
      %p30 = por %p28, %p29
      %p31 = scmp.ne.s32.totalorder %s22, %s23
      %p32 = scmp.eq.s32.totalorder %s17, 0
      %p33 = por %p31, %p32
      %p34 = scmp.ne.s32.totalorder %s22, %s23
      %p35 = scmp.eq.s32.totalorder %s18, 1
      %p36 = por %p34, %p35
      %p38 = scmp.ne.s32.totalorder %s23, %s37
      %p39 = scmp.eq.s32.totalorder %s18, 0
      %p40 = por %p38, %p39
      %s42 = sadd.s32 %s41, 1
      %p45 = scmp.eq.s32.totalorder %s12, 1
      %p46 = scmp.ne.s32.totalorder %s41, %s43
      %p47 = scmp.eq.s32.totalorder %s12, 0
      %p48 = por %p46, %p47
      %p49 = scmp.ne.s32.totalorder %s41, %s43
      %p50 = scmp.eq.s32.totalorder %s17, 1
      %p51 = por %p49, %p50
      %p52 = scmp.ne.s32.totalorder %s43, %s44
      %p53 = scmp.eq.s32.totalorder %s17, 0
      %p54 = por %p52, %p53
      %p55 = scmp.ne.s32.totalorder %s43, %s44
      %p56 = scmp.eq.s32.totalorder %s18, 1
      %p57 = por %p55, %p56
      %p59 = scmp.ne.s32.totalorder %s44, %s58
      %p60 = scmp.eq.s32.totalorder %s18, 0
      %p61 = por %p59, %p60
      %s62 = ssub.s32 %s12, %s19
      %p63 = scmp.eq.s32.totalorder %s62, 0
      %s65 = sadd.s32 %s64, 1
      %s66 = scalar_select %p63, %s64, %s65
      %p69 = pneg %p63
      %p70 = scmp.eq.s32.totalorder %s12, 1
      %p71 = por %p69, %p70
      %p72 = scmp.ne.s32.totalorder %s64, %s67
      %p73 = scmp.eq.s32.totalorder %s12, 0
      %p74 = por %p72, %p73
      %p75 = scmp.ne.s32.totalorder %s64, %s67
      %p76 = scmp.eq.s32.totalorder %s17, 1
      %p77 = por %p75, %p76
      %p78 = scmp.ne.s32.totalorder %s67, %s68
      %p79 = scmp.eq.s32.totalorder %s17, 0
      %p80 = por %p78, %p79
      %p81 = scmp.ne.s32.totalorder %s67, %s68
      %p82 = scmp.eq.s32.totalorder %s18, 1
      %p83 = por %p81, %p82
      %p85 = scmp.ne.s32.totalorder %s68, %s84
      %p86 = scmp.eq.s32.totalorder %s18, 0
      %p87 = por %p85, %p86
      %p88 = scmp.le.s32.totalorder 1, %s12
      %p89 = scmp.lt.s32.totalorder %s12, 3
      %p90 = pnand %p88, %p89
      %p91 = pneg %p90
      // Predicated region
      $region9: #{fwd.1} parent=5 // pred_check
        _
      $region10: #{fwd.1} parent=5 // pred_check_branch
        %93 = sbr.rel (%p90) target = $region12
      $region11: #{fwd.1} parent=5 // pred_region
        %s94 = ssub.s32 %s12, 1
        // Predicated region
        $region13: #{fwd.1} parent=11 // pred_check
          %p95 = pneg %p33
        $region14: #{fwd.1} parent=11 // pred_check_branch
          %97 = sbr.rel (%p95) target = $region16
        $region15: #{fwd.1} parent=11 // pred_region
          _
        $region16: #{fwd.1} parent=11 // pred_fallthru
          _
        // Predicated region
        $region17: #{fwd.1} parent=11 // pred_check
          %p98 = pneg %p54
        $region18: #{fwd.1} parent=11 // pred_check_branch
          %100 = sbr.rel (%p98) target = $region20
        $region19: #{fwd.1} parent=11 // pred_region
          %s102 = ssub.s32 9216, 9216
          %103 = vsyncadd [#allocation3], %s102
          %s104 = sshll.u32 [#allocation2], 4
          %s105 = int_to_ptr.vmem [resolvable:$true] %s104
          %110 = dma.hbm_to_vmem [thread:$0]  %s1, 9216, %s105, [#allocation3], 128, 128, 8
        $region20: #{fwd.1} parent=11 // pred_fallthru
          _
      $region12: #{fwd.1} parent=5 // pred_fallthru
        _
      %p111 = scmp.lt.s32.totalorder %s12, 2
      // Predicated region
      $region21: #{fwd.1} parent=5 // pred_check
        %p112 = pneg %p111
      $region22: #{fwd.1} parent=5 // pred_check_branch
        %114 = sbr.rel (%p112) target = $region24
      $region23: #{fwd.1} parent=5 // pred_region
        _
      $region24: #{fwd.1} parent=5 // pred_fallthru
        _
      %p115 = scmp.le.s32.totalorder 1, %s12
      %p116 = scmp.lt.s32.totalorder %s12, 3
      %p117 = pnand %p115, %p116
      %p118 = pneg %p117
      // Predicated region
      $region25: #{fwd.1} parent=5 // pred_check
        _
      $region26: #{fwd.1} parent=5 // pred_check_branch
        %120 = sbr.rel (%p117) target = $region28
      $region27: #{fwd.1} parent=5 // pred_region
        %s121 = ssub.s32 %s12, 1
        // Predicated region
        $region29: #{fwd.1} parent=27 // pred_check
          %p122 = pneg %p54
        $region30: #{fwd.1} parent=27 // pred_check_branch
          %124 = sbr.rel (%p122) target = $region32
        $region31: #{fwd.1} parent=27 // pred_region
          %125 = dma.done [#allocation3], 9216
        $region32: #{fwd.1} parent=27 // pred_fallthru
          _
        %p126 = pneg %p33
        %p127 = pneg %p30
        %p128 = pneg %p54
        %p129 = pneg %p51
        %p130 = pneg %p80
        %p131 = pneg %p77
        %s132 = sand.u32 %s67, 1
        %s133 = scalar_lea.sflag [#allocation4], %s132
        %s134 = sand.u32 %s67, 1
        %s135 = smul.addr %s134, 8
        %s136 = scalar_lea.vmem [#allocation5], %s135
        %s137 = scalar_lea.vmem %s0, %s17
        %v138 = vld [vmem:[%s137] sm:$0x1]
        %v139 = vld [vmem:[#allocation2] sm:$0xff]
        %v140 = vld [vmem:[#allocation2 + $0x28] sm:$0x1]
        %vm141 = vcmask 64512
        %v143 = vsel %vm141, %v138, 0
        %145 = vmatprep.subr.mxu0 0.0
        %146 = vmatpush1.msra.mxu0 %v139
        %147 = vmatprep.subr.mxu0 0.0
        %148 = vmatpush1.msra.mxu0 0.0
        %149 = vmatprep.subr.mxu0 0.0
        %150 = vmatpush1.msra.mxu0 0.0
        %151 = vmatprep.subr.mxu0 0.0
        %152 = vmatpush1.msra.mxu0 0.0
        %153 = vmatprep.subr.mxu0 0.0
        %154 = vmatpush1.msra.mxu0 0.0
        %155 = vmatprep.subr.mxu0 0.0
        %156 = vmatpush1.msra.mxu0 0.0
        %157 = vmatprep.subr.mxu0 0.0
        %158 = vmatpush1.msra.mxu0 0.0
        %159 = vmatprep.subr.mxu0 0.0
        %160 = vmatpush1.msra.mxu0 0.0
        %161 = vmatprep.subr.mxu0 0.0
        %162 = vmatpush1.msra.mxu0 0.0
        %163 = vmatprep.subr.mxu0 0.0
        %164 = vmatpush1.msra.mxu0 0.0
        %165 = vmatprep.subr.mxu0 0.0
        %166 = vmatpush1.msra.mxu0 0.0
        %167 = vmatprep.subr.mxu0 0.0
        %168 = vmatpush1.msra.mxu0 0.0
        %169 = vmatprep.subr.mxu0 0.0
        %170 = vmatpush1.msra.mxu0 0.0
        %171 = vmatprep.subr.mxu0 0.0
        %172 = vmatpush1.msra.mxu0 0.0
        %173 = vmatprep.subr.mxu0 0.0
        %174 = vmatpush1.msra.mxu0 0.0
        %175 = vmatprep.subr.mxu0 0.0
        %176 = vmatpush1.msra.mxu0 0.0
        %177 = vmatprep.subr.mxu0 0.0
        %178 = vmatpush1.msra.mxu0 0.0
        %179 = vmatprep.subr.mxu0 0.0
        %180 = vmatpush1.msra.mxu0 0.0
        %181 = vmatprep.subr.mxu0 0.0
        %182 = vmatpush1.msra.mxu0 0.0
        %183 = vmatprep.subr.mxu0 0.0
        %184 = vmatpush1.msra.mxu0 0.0
        %185 = vmatprep.subr.mxu0 0.0
        %186 = vmatpush1.msra.mxu0 0.0
        %187 = vmatprep.subr.mxu0 0.0
        %188 = vmatpush1.msra.mxu0 0.0
        %189 = vmatprep.subr.mxu0 0.0
        %190 = vmatpush1.msra.mxu0 0.0
        %191 = vmatprep.subr.mxu0 0.0
        %192 = vmatpush1.msra.mxu0 0.0
        %193 = vmatprep.subr.mxu0 0.0
        %194 = vmatpush1.msra.mxu0 0.0
        %195 = vmatprep.subr.mxu0 0.0
        %196 = vmatpush1.msra.mxu0 0.0
        %197 = vmatprep.subr.mxu0 0.0
        %198 = vmatpush1.msra.mxu0 0.0
        %199 = vmatprep.subr.mxu0 0.0
        %200 = vmatpush1.msra.mxu0 0.0
        %201 = vmatprep.subr.mxu0 0.0
        %202 = vmatpush1.msra.mxu0 0.0
        %203 = vmatprep.subr.mxu0 0.0
        %204 = vmatpush1.msra.mxu0 0.0
        %205 = vmatprep.subr.mxu0 0.0
        %206 = vmatpush1.msra.mxu0 0.0
        %207 = vmatprep.subr.mxu0 0.0
        %208 = vmatpush1.msra.mxu0 0.0
        %209 = vmatprep.mubr.f32.mxu0 0.0
        %210 = vmatmul.mubr.f32.gmra.mrb[0].mxu0 %v143
        %v211 = vpop.f32.mrb[0].mxu0
        %v212 = vadd.f32 %v140, %v211
        %v213 = vpop.f32.mrb[0].mxu0
        %214 = vdwg.mxu0
        %v215 = vld [vmem:[#allocation2 + $0x8] sm:$0xff]
        %v216 = vld [vmem:[#allocation2 + $0x10] sm:$0xff]
        %v217 = vld [vmem:[#allocation2 + $0x18] sm:$0xff]
        %v218 = vld [vmem:[#allocation2 + $0x20] sm:$0xff]
        %v219 = vld [vmem:[#allocation2 + $0x30] sm:$0x1]
        %vm220 = vcmask 261120
        %v222 = vsel %vm220, 0.0, 0
        %224 = vmatprep.subr.mxu0 0.0
        %225 = vmatpush1.msra.mxu0 %v215
        %226 = vmatprep.subr.mxu0 0.0
        %227 = vmatpush1.msra.mxu0 %v216
        %228 = vmatprep.subr.mxu0 0.0
        %229 = vmatpush1.msra.mxu0 %v217
        %230 = vmatprep.subr.mxu0 0.0
        %231 = vmatpush1.msra.mxu0 %v218
        %232 = vmatprep.subr.mxu0 0.0
        %233 = vmatpush1.msra.mxu0 0.0
        %234 = vmatprep.subr.mxu0 0.0
        %235 = vmatpush1.msra.mxu0 0.0
        %236 = vmatprep.subr.mxu0 0.0
        %237 = vmatpush1.msra.mxu0 0.0
        %238 = vmatprep.subr.mxu0 0.0
        %239 = vmatpush1.msra.mxu0 0.0
        %240 = vmatprep.subr.mxu0 0.0
        %241 = vmatpush1.msra.mxu0 0.0
        %242 = vmatprep.subr.mxu0 0.0
        %243 = vmatpush1.msra.mxu0 0.0
        %244 = vmatprep.subr.mxu0 0.0
        %245 = vmatpush1.msra.mxu0 0.0
        %246 = vmatprep.subr.mxu0 0.0
        %247 = vmatpush1.msra.mxu0 0.0
        %248 = vmatprep.subr.mxu0 0.0
        %249 = vmatpush1.msra.mxu0 0.0
        %250 = vmatprep.subr.mxu0 0.0
        %251 = vmatpush1.msra.mxu0 0.0
        %252 = vmatprep.subr.mxu0 0.0
        %253 = vmatpush1.msra.mxu0 0.0
        %254 = vmatprep.subr.mxu0 0.0
        %255 = vmatpush1.msra.mxu0 0.0
        %256 = vmatprep.subr.mxu0 0.0
        %257 = vmatpush1.msra.mxu0 0.0
        %258 = vmatprep.subr.mxu0 0.0
        %259 = vmatpush1.msra.mxu0 0.0
        %260 = vmatprep.subr.mxu0 0.0
        %261 = vmatpush1.msra.mxu0 0.0
        %262 = vmatprep.subr.mxu0 0.0
        %263 = vmatpush1.msra.mxu0 0.0
        %264 = vmatprep.subr.mxu0 0.0
        %265 = vmatpush1.msra.mxu0 0.0
        %266 = vmatprep.subr.mxu0 0.0
        %267 = vmatpush1.msra.mxu0 0.0
        %268 = vmatprep.subr.mxu0 0.0
        %269 = vmatpush1.msra.mxu0 0.0
        %270 = vmatprep.subr.mxu0 0.0
        %271 = vmatpush1.msra.mxu0 0.0
        %272 = vmatprep.subr.mxu0 0.0
        %273 = vmatpush1.msra.mxu0 0.0
        %274 = vmatprep.subr.mxu0 0.0
        %275 = vmatpush1.msra.mxu0 0.0
        %276 = vmatprep.subr.mxu0 0.0
        %277 = vmatpush1.msra.mxu0 0.0
        %278 = vmatprep.subr.mxu0 0.0
        %279 = vmatpush1.msra.mxu0 0.0
        %280 = vmatprep.subr.mxu0 0.0
        %281 = vmatpush1.msra.mxu0 0.0
        %282 = vmatprep.subr.mxu0 0.0
        %283 = vmatpush1.msra.mxu0 0.0
        %284 = vmatprep.subr.mxu0 0.0
        %285 = vmatpush1.msra.mxu0 0.0
        %286 = vmatprep.subr.mxu0 0.0
        %287 = vmatpush1.msra.mxu0 0.0
        %288 = vmatprep.mubr.f32.mxu0 0.0
        %289 = vmatmul.mubr.f32.gmra.mrb[0].mxu0 %v222
        %v290 = vpop.f32.mrb[0].mxu0
        %v291 = vadd.f32 0.0, %v290
        %v292 = vpop.f32.mrb[0].mxu0
        %293 = vdwg.mxu0
        %v294 = vadd.f32 %v212, %v291
        %v295 = vxor.u32 %v294, 2147483648
        %v296 = vmul.f32 %v295, 1.442695
        %v297 = vpow.pop %v296
        %v298 = vadd.f32 %v297, 1.0
        %v299 = vrcp.pop %v298
        %v300 = vmul.f32 1.0, %v299
        %302 = vrot.lane.b32.xlu0 %v219, 64
        %v303 = vpop.permute.xlu0 %302
        %v305 = vadd.f32 %v291, %v303
        %307 = vrot.lane.b32.xlu0 %v305, 64
        %v308 = vpop.permute.xlu0 %307
        %v310 = vmul.f32 %v300, %v308
        %312 = vrot.lane.b32.xlu0 %v310, 64
        %v313 = vpop.permute.xlu0 %312
        %v315 = vadd.f32 %v212, %v313
        %v316 = vtanh.pop %v315
        %v317 = vsub.f32 1.0, %v300
        %319 = vrot.lane.b32.xlu0 %v316, 96
        %v320 = vpop.permute.xlu0 %319
        %v322 = vmul.f32 %v317, %v320
        %v323 = vmul.f32 %v300, 0.0
        %v324 = vadd.f32 %v322, %v323
        %326 = vrot.lane.b32.xlu0 %v324, 96
        %v327 = vpop.permute.xlu0 %326
        %v328 = vsel %vm220, %v327, 0
        %330 = vmatprep.subr.mxu0 0.0
        %331 = vmatpush1.msra.mxu0 %v215
        %332 = vmatprep.subr.mxu0 0.0
        %333 = vmatpush1.msra.mxu0 %v216
        %334 = vmatprep.subr.mxu0 0.0
        %335 = vmatpush1.msra.mxu0 %v217
        %336 = vmatprep.subr.mxu0 0.0
        %337 = vmatpush1.msra.mxu0 %v218
        %338 = vmatprep.subr.mxu0 0.0
        %339 = vmatpush1.msra.mxu0 0.0
        %340 = vmatprep.subr.mxu0 0.0
        %341 = vmatpush1.msra.mxu0 0.0
        %342 = vmatprep.subr.mxu0 0.0
        %343 = vmatpush1.msra.mxu0 0.0
        %344 = vmatprep.subr.mxu0 0.0
        %345 = vmatpush1.msra.mxu0 0.0
        %346 = vmatprep.subr.mxu0 0.0
        %347 = vmatpush1.msra.mxu0 0.0
        %348 = vmatprep.subr.mxu0 0.0
        %349 = vmatpush1.msra.mxu0 0.0
        %350 = vmatprep.subr.mxu0 0.0
        %351 = vmatpush1.msra.mxu0 0.0
        %352 = vmatprep.subr.mxu0 0.0
        %353 = vmatpush1.msra.mxu0 0.0
        %354 = vmatprep.subr.mxu0 0.0
        %355 = vmatpush1.msra.mxu0 0.0
        %356 = vmatprep.subr.mxu0 0.0
        %357 = vmatpush1.msra.mxu0 0.0
        %358 = vmatprep.subr.mxu0 0.0
        %359 = vmatpush1.msra.mxu0 0.0
        %360 = vmatprep.subr.mxu0 0.0
        %361 = vmatpush1.msra.mxu0 0.0
        %362 = vmatprep.subr.mxu0 0.0
        %363 = vmatpush1.msra.mxu0 0.0
        %364 = vmatprep.subr.mxu0 0.0
        %365 = vmatpush1.msra.mxu0 0.0
        %366 = vmatprep.subr.mxu0 0.0
        %367 = vmatpush1.msra.mxu0 0.0
        %368 = vmatprep.subr.mxu0 0.0
        %369 = vmatpush1.msra.mxu0 0.0
        %370 = vmatprep.subr.mxu0 0.0
        %371 = vmatpush1.msra.mxu0 0.0
        %372 = vmatprep.subr.mxu0 0.0
        %373 = vmatpush1.msra.mxu0 0.0
        %374 = vmatprep.subr.mxu0 0.0
        %375 = vmatpush1.msra.mxu0 0.0
        %376 = vmatprep.subr.mxu0 0.0
        %377 = vmatpush1.msra.mxu0 0.0
        %378 = vmatprep.subr.mxu0 0.0
        %379 = vmatpush1.msra.mxu0 0.0
        %380 = vmatprep.subr.mxu0 0.0
        %381 = vmatpush1.msra.mxu0 0.0
        %382 = vmatprep.subr.mxu0 0.0
        %383 = vmatpush1.msra.mxu0 0.0
        %384 = vmatprep.subr.mxu0 0.0
        %385 = vmatpush1.msra.mxu0 0.0
        %386 = vmatprep.subr.mxu0 0.0
        %387 = vmatpush1.msra.mxu0 0.0
        %388 = vmatprep.subr.mxu0 0.0
        %389 = vmatpush1.msra.mxu0 0.0
        %390 = vmatprep.subr.mxu0 0.0
        %391 = vmatpush1.msra.mxu0 0.0
        %392 = vmatprep.subr.mxu0 0.0
        %393 = vmatpush1.msra.mxu0 0.0
        %394 = vmatprep.mubr.f32.mxu0 0.0
        %395 = vmatmul.mubr.f32.gmra.mrb[0].mxu0 %v328
        %v396 = vpop.f32.mrb[0].mxu0
        %v397 = vadd.f32 0.0, %v396
        %v398 = vpop.f32.mrb[0].mxu0
        %399 = vdwg.mxu0
        %v400 = vadd.f32 %v212, %v397
        %v401 = vxor.u32 %v400, 2147483648
        %v402 = vmul.f32 %v401, 1.442695
        %v403 = vpow.pop %v402
        %v404 = vadd.f32 %v403, 1.0
        %v405 = vrcp.pop %v404
        %v406 = vmul.f32 1.0, %v405
        %v407 = vadd.f32 %v397, %v303
        %409 = vrot.lane.b32.xlu0 %v407, 64
        %v410 = vpop.permute.xlu0 %409
        %v412 = vmul.f32 %v406, %v410
        %414 = vrot.lane.b32.xlu0 %v412, 64
        %v415 = vpop.permute.xlu0 %414
        %v417 = vadd.f32 %v212, %v415
        %v418 = vtanh.pop %v417
        %v419 = vsub.f32 1.0, %v406
        %421 = vrot.lane.b32.xlu0 %v418, 96
        %v422 = vpop.permute.xlu0 %421
        %v424 = vmul.f32 %v419, %v422
        %v425 = vmul.f32 %v406, %v324
        %v426 = vadd.f32 %v424, %v425
        %428 = vrot.lane.b32.xlu0 %v426, 96
        %v429 = vpop.permute.xlu0 %428
        %v430 = vsel %vm220, %v429, 0
        %432 = vmatprep.subr.mxu0 0.0
        %433 = vmatpush1.msra.mxu0 %v215
        %434 = vmatprep.subr.mxu0 0.0
        %435 = vmatpush1.msra.mxu0 %v216
        %436 = vmatprep.subr.mxu0 0.0
        %437 = vmatpush1.msra.mxu0 %v217
        %438 = vmatprep.subr.mxu0 0.0
        %439 = vmatpush1.msra.mxu0 %v218
        %440 = vmatprep.subr.mxu0 0.0
        %441 = vmatpush1.msra.mxu0 0.0
        %442 = vmatprep.subr.mxu0 0.0
        %443 = vmatpush1.msra.mxu0 0.0
        %444 = vmatprep.subr.mxu0 0.0
        %445 = vmatpush1.msra.mxu0 0.0
        %446 = vmatprep.subr.mxu0 0.0
        %447 = vmatpush1.msra.mxu0 0.0
        %448 = vmatprep.subr.mxu0 0.0
        %449 = vmatpush1.msra.mxu0 0.0
        %450 = vmatprep.subr.mxu0 0.0
        %451 = vmatpush1.msra.mxu0 0.0
        %452 = vmatprep.subr.mxu0 0.0
        %453 = vmatpush1.msra.mxu0 0.0
        %454 = vmatprep.subr.mxu0 0.0
        %455 = vmatpush1.msra.mxu0 0.0
        %456 = vmatprep.subr.mxu0 0.0
        %457 = vmatpush1.msra.mxu0 0.0
        %458 = vmatprep.subr.mxu0 0.0
        %459 = vmatpush1.msra.mxu0 0.0
        %460 = vmatprep.subr.mxu0 0.0
        %461 = vmatpush1.msra.mxu0 0.0
        %462 = vmatprep.subr.mxu0 0.0
        %463 = vmatpush1.msra.mxu0 0.0
        %464 = vmatprep.subr.mxu0 0.0
        %465 = vmatpush1.msra.mxu0 0.0
        %466 = vmatprep.subr.mxu0 0.0
        %467 = vmatpush1.msra.mxu0 0.0
        %468 = vmatprep.subr.mxu0 0.0
        %469 = vmatpush1.msra.mxu0 0.0
        %470 = vmatprep.subr.mxu0 0.0
        %471 = vmatpush1.msra.mxu0 0.0
        %472 = vmatprep.subr.mxu0 0.0
        %473 = vmatpush1.msra.mxu0 0.0
        %474 = vmatprep.subr.mxu0 0.0
        %475 = vmatpush1.msra.mxu0 0.0
        %476 = vmatprep.subr.mxu0 0.0
        %477 = vmatpush1.msra.mxu0 0.0
        %478 = vmatprep.subr.mxu0 0.0
        %479 = vmatpush1.msra.mxu0 0.0
        %480 = vmatprep.subr.mxu0 0.0
        %481 = vmatpush1.msra.mxu0 0.0
        %482 = vmatprep.subr.mxu0 0.0
        %483 = vmatpush1.msra.mxu0 0.0
        %484 = vmatprep.subr.mxu0 0.0
        %485 = vmatpush1.msra.mxu0 0.0
        %486 = vmatprep.subr.mxu0 0.0
        %487 = vmatpush1.msra.mxu0 0.0
        %488 = vmatprep.subr.mxu0 0.0
        %489 = vmatpush1.msra.mxu0 0.0
        %490 = vmatprep.subr.mxu0 0.0
        %491 = vmatpush1.msra.mxu0 0.0
        %492 = vmatprep.subr.mxu0 0.0
        %493 = vmatpush1.msra.mxu0 0.0
        %494 = vmatprep.subr.mxu0 0.0
        %495 = vmatpush1.msra.mxu0 0.0
        %496 = vmatprep.mubr.f32.mxu0 0.0
        %497 = vmatmul.mubr.f32.gmra.mrb[0].mxu0 %v430
        %v498 = vpop.f32.mrb[0].mxu0
        %v499 = vadd.f32 0.0, %v498
        %v500 = vpop.f32.mrb[0].mxu0
        %501 = vdwg.mxu0
        %v502 = vadd.f32 %v212, %v499
        %v503 = vxor.u32 %v502, 2147483648
        %v504 = vmul.f32 %v503, 1.442695
        %v505 = vpow.pop %v504
        %v506 = vadd.f32 %v505, 1.0
        %v507 = vrcp.pop %v506
        %v508 = vmul.f32 1.0, %v507
        %v509 = vadd.f32 %v499, %v303
        %511 = vrot.lane.b32.xlu0 %v509, 64
        %v512 = vpop.permute.xlu0 %511
        %v514 = vmul.f32 %v508, %v512
        %516 = vrot.lane.b32.xlu0 %v514, 64
        %v517 = vpop.permute.xlu0 %516
        %v519 = vadd.f32 %v212, %v517
        %v520 = vtanh.pop %v519
        %v521 = vsub.f32 1.0, %v508
        %523 = vrot.lane.b32.xlu0 %v520, 96
        %v524 = vpop.permute.xlu0 %523
        %v526 = vmul.f32 %v521, %v524
        %v527 = vmul.f32 %v508, %v426
        %v528 = vadd.f32 %v526, %v527
        %530 = vrot.lane.b32.xlu0 %v528, 96
        %v531 = vpop.permute.xlu0 %530
        %v532 = vsel %vm220, %v531, 0
        %534 = vmatprep.subr.mxu0 0.0
        %535 = vmatpush1.msra.mxu0 %v215
        %536 = vmatprep.subr.mxu0 0.0
        %537 = vmatpush1.msra.mxu0 %v216
        %538 = vmatprep.subr.mxu0 0.0
        %539 = vmatpush1.msra.mxu0 %v217
        %540 = vmatprep.subr.mxu0 0.0
        %541 = vmatpush1.msra.mxu0 %v218
        %542 = vmatprep.subr.mxu0 0.0
        %543 = vmatpush1.msra.mxu0 0.0
        %544 = vmatprep.subr.mxu0 0.0
        %545 = vmatpush1.msra.mxu0 0.0
        %546 = vmatprep.subr.mxu0 0.0
        %547 = vmatpush1.msra.mxu0 0.0
        %548 = vmatprep.subr.mxu0 0.0
        %549 = vmatpush1.msra.mxu0 0.0
        %550 = vmatprep.subr.mxu0 0.0
        %551 = vmatpush1.msra.mxu0 0.0
        %552 = vmatprep.subr.mxu0 0.0
        %553 = vmatpush1.msra.mxu0 0.0
        %554 = vmatprep.subr.mxu0 0.0
        %555 = vmatpush1.msra.mxu0 0.0
        %556 = vmatprep.subr.mxu0 0.0
        %557 = vmatpush1.msra.mxu0 0.0
        %558 = vmatprep.subr.mxu0 0.0
        %559 = vmatpush1.msra.mxu0 0.0
        %560 = vmatprep.subr.mxu0 0.0
        %561 = vmatpush1.msra.mxu0 0.0
        %562 = vmatprep.subr.mxu0 0.0
        %563 = vmatpush1.msra.mxu0 0.0
        %564 = vmatprep.subr.mxu0 0.0
        %565 = vmatpush1.msra.mxu0 0.0
        %566 = vmatprep.subr.mxu0 0.0
        %567 = vmatpush1.msra.mxu0 0.0
        %568 = vmatprep.subr.mxu0 0.0
        %569 = vmatpush1.msra.mxu0 0.0
        %570 = vmatprep.subr.mxu0 0.0
        %571 = vmatpush1.msra.mxu0 0.0
        %572 = vmatprep.subr.mxu0 0.0
        %573 = vmatpush1.msra.mxu0 0.0
        %574 = vmatprep.subr.mxu0 0.0
        %575 = vmatpush1.msra.mxu0 0.0
        %576 = vmatprep.subr.mxu0 0.0
        %577 = vmatpush1.msra.mxu0 0.0
        %578 = vmatprep.subr.mxu0 0.0
        %579 = vmatpush1.msra.mxu0 0.0
        %580 = vmatprep.subr.mxu0 0.0
        %581 = vmatpush1.msra.mxu0 0.0
        %582 = vmatprep.subr.mxu0 0.0
        %583 = vmatpush1.msra.mxu0 0.0
        %584 = vmatprep.subr.mxu0 0.0
        %585 = vmatpush1.msra.mxu0 0.0
        %586 = vmatprep.subr.mxu0 0.0
        %587 = vmatpush1.msra.mxu0 0.0
        %588 = vmatprep.subr.mxu0 0.0
        %589 = vmatpush1.msra.mxu0 0.0
        %590 = vmatprep.subr.mxu0 0.0
        %591 = vmatpush1.msra.mxu0 0.0
        %592 = vmatprep.subr.mxu0 0.0
        %593 = vmatpush1.msra.mxu0 0.0
        %594 = vmatprep.subr.mxu0 0.0
        %595 = vmatpush1.msra.mxu0 0.0
        %596 = vmatprep.subr.mxu0 0.0
        %597 = vmatpush1.msra.mxu0 0.0
        %598 = vmatprep.mubr.f32.mxu0 0.0
        %599 = vmatmul.mubr.f32.gmra.mrb[0].mxu0 %v532
        %v600 = vpop.f32.mrb[0].mxu0
        %v601 = vadd.f32 0.0, %v600
        %v602 = vpop.f32.mrb[0].mxu0
        %603 = vdwg.mxu0
        %v604 = vadd.f32 %v212, %v601
        %v605 = vxor.u32 %v604, 2147483648
        %v606 = vmul.f32 %v605, 1.442695
        %v607 = vpow.pop %v606
        %v608 = vadd.f32 %v607, 1.0
        %v609 = vrcp.pop %v608
        %v610 = vmul.f32 1.0, %v609
        %v611 = vadd.f32 %v601, %v303
        %613 = vrot.lane.b32.xlu0 %v611, 64
        %v614 = vpop.permute.xlu0 %613
        %v616 = vmul.f32 %v610, %v614
        %618 = vrot.lane.b32.xlu0 %v616, 64
        %v619 = vpop.permute.xlu0 %618
        %v621 = vadd.f32 %v212, %v619
        %v622 = vtanh.pop %v621
        %v623 = vsub.f32 1.0, %v610
        %625 = vrot.lane.b32.xlu0 %v622, 96
        %v626 = vpop.permute.xlu0 %625
        %v628 = vmul.f32 %v623, %v626
        %v629 = vmul.f32 %v610, %v528
        %v630 = vadd.f32 %v628, %v629
        %632 = vrot.lane.b32.xlu0 %v630, 96
        %v633 = vpop.permute.xlu0 %632
        %v634 = vsel %vm220, %v633, 0
        %636 = vmatprep.subr.mxu0 0.0
        %637 = vmatpush1.msra.mxu0 %v215
        %638 = vmatprep.subr.mxu0 0.0
        %639 = vmatpush1.msra.mxu0 %v216
        %640 = vmatprep.subr.mxu0 0.0
        %641 = vmatpush1.msra.mxu0 %v217
        %642 = vmatprep.subr.mxu0 0.0
        %643 = vmatpush1.msra.mxu0 %v218
        %644 = vmatprep.subr.mxu0 0.0
        %645 = vmatpush1.msra.mxu0 0.0
        %646 = vmatprep.subr.mxu0 0.0
        %647 = vmatpush1.msra.mxu0 0.0
        %648 = vmatprep.subr.mxu0 0.0
        %649 = vmatpush1.msra.mxu0 0.0
        %650 = vmatprep.subr.mxu0 0.0
        %651 = vmatpush1.msra.mxu0 0.0
        %652 = vmatprep.subr.mxu0 0.0
        %653 = vmatpush1.msra.mxu0 0.0
        %654 = vmatprep.subr.mxu0 0.0
        %655 = vmatpush1.msra.mxu0 0.0
        %656 = vmatprep.subr.mxu0 0.0
        %657 = vmatpush1.msra.mxu0 0.0
        %658 = vmatprep.subr.mxu0 0.0
        %659 = vmatpush1.msra.mxu0 0.0
        %660 = vmatprep.subr.mxu0 0.0
        %661 = vmatpush1.msra.mxu0 0.0
        %662 = vmatprep.subr.mxu0 0.0
        %663 = vmatpush1.msra.mxu0 0.0
        %664 = vmatprep.subr.mxu0 0.0
        %665 = vmatpush1.msra.mxu0 0.0
        %666 = vmatprep.subr.mxu0 0.0
        %667 = vmatpush1.msra.mxu0 0.0
        %668 = vmatprep.subr.mxu0 0.0
        %669 = vmatpush1.msra.mxu0 0.0
        %670 = vmatprep.subr.mxu0 0.0
        %671 = vmatpush1.msra.mxu0 0.0
        %672 = vmatprep.subr.mxu0 0.0
        %673 = vmatpush1.msra.mxu0 0.0
        %674 = vmatprep.subr.mxu0 0.0
        %675 = vmatpush1.msra.mxu0 0.0
        %676 = vmatprep.subr.mxu0 0.0
        %677 = vmatpush1.msra.mxu0 0.0
        %678 = vmatprep.subr.mxu0 0.0
        %679 = vmatpush1.msra.mxu0 0.0
        %680 = vmatprep.subr.mxu0 0.0
        %681 = vmatpush1.msra.mxu0 0.0
        %682 = vmatprep.subr.mxu0 0.0
        %683 = vmatpush1.msra.mxu0 0.0
        %684 = vmatprep.subr.mxu0 0.0
        %685 = vmatpush1.msra.mxu0 0.0
        %686 = vmatprep.subr.mxu0 0.0
        %687 = vmatpush1.msra.mxu0 0.0
        %688 = vmatprep.subr.mxu0 0.0
        %689 = vmatpush1.msra.mxu0 0.0
        %690 = vmatprep.subr.mxu0 0.0
        %691 = vmatpush1.msra.mxu0 0.0
        %692 = vmatprep.subr.mxu0 0.0
        %693 = vmatpush1.msra.mxu0 0.0
        %694 = vmatprep.subr.mxu0 0.0
        %695 = vmatpush1.msra.mxu0 0.0
        %696 = vmatprep.subr.mxu0 0.0
        %697 = vmatpush1.msra.mxu0 0.0
        %698 = vmatprep.subr.mxu0 0.0
        %699 = vmatpush1.msra.mxu0 0.0
        %700 = vmatprep.mubr.f32.mxu0 0.0
        %701 = vmatmul.mubr.f32.gmra.mrb[0].mxu0 %v634
        %v702 = vpop.f32.mrb[0].mxu0
        %v703 = vadd.f32 0.0, %v702
        %v704 = vpop.f32.mrb[0].mxu0
        %705 = vdwg.mxu0
        %v706 = vadd.f32 %v212, %v703
        %v707 = vxor.u32 %v706, 2147483648
        %v708 = vmul.f32 %v707, 1.442695
        %v709 = vpow.pop %v708
        %v710 = vadd.f32 %v709, 1.0
        %v711 = vrcp.pop %v710
        %v712 = vmul.f32 1.0, %v711
        %v713 = vadd.f32 %v703, %v303
        %715 = vrot.lane.b32.xlu0 %v713, 64
        %v716 = vpop.permute.xlu0 %715
        %v718 = vmul.f32 %v712, %v716
        %720 = vrot.lane.b32.xlu0 %v718, 64
        %v721 = vpop.permute.xlu0 %720
        %v723 = vadd.f32 %v212, %v721
        %v724 = vtanh.pop %v723
        %v725 = vsub.f32 1.0, %v712
        %727 = vrot.lane.b32.xlu0 %v724, 96
        %v728 = vpop.permute.xlu0 %727
        %v730 = vmul.f32 %v725, %v728
        %v731 = vmul.f32 %v712, %v630
        %v732 = vadd.f32 %v730, %v731
        %734 = vrot.lane.b32.xlu0 %v732, 96
        %v735 = vpop.permute.xlu0 %734
        %v736 = vsel %vm220, %v735, 0
        %738 = vmatprep.subr.mxu0 0.0
        %739 = vmatpush1.msra.mxu0 %v215
        %740 = vmatprep.subr.mxu0 0.0
        %741 = vmatpush1.msra.mxu0 %v216
        %742 = vmatprep.subr.mxu0 0.0
        %743 = vmatpush1.msra.mxu0 %v217
        %744 = vmatprep.subr.mxu0 0.0
        %745 = vmatpush1.msra.mxu0 %v218
        %746 = vmatprep.subr.mxu0 0.0
        %747 = vmatpush1.msra.mxu0 0.0
        %748 = vmatprep.subr.mxu0 0.0
        %749 = vmatpush1.msra.mxu0 0.0
        %750 = vmatprep.subr.mxu0 0.0
        %751 = vmatpush1.msra.mxu0 0.0
        %752 = vmatprep.subr.mxu0 0.0
        %753 = vmatpush1.msra.mxu0 0.0
        %754 = vmatprep.subr.mxu0 0.0
        %755 = vmatpush1.msra.mxu0 0.0
        %756 = vmatprep.subr.mxu0 0.0
        %757 = vmatpush1.msra.mxu0 0.0
        %758 = vmatprep.subr.mxu0 0.0
        %759 = vmatpush1.msra.mxu0 0.0
        %760 = vmatprep.subr.mxu0 0.0
        %761 = vmatpush1.msra.mxu0 0.0
        %762 = vmatprep.subr.mxu0 0.0
        %763 = vmatpush1.msra.mxu0 0.0
        %764 = vmatprep.subr.mxu0 0.0
        %765 = vmatpush1.msra.mxu0 0.0
        %766 = vmatprep.subr.mxu0 0.0
        %767 = vmatpush1.msra.mxu0 0.0
        %768 = vmatprep.subr.mxu0 0.0
        %769 = vmatpush1.msra.mxu0 0.0
        %770 = vmatprep.subr.mxu0 0.0
        %771 = vmatpush1.msra.mxu0 0.0
        %772 = vmatprep.subr.mxu0 0.0
        %773 = vmatpush1.msra.mxu0 0.0
        %774 = vmatprep.subr.mxu0 0.0
        %775 = vmatpush1.msra.mxu0 0.0
        %776 = vmatprep.subr.mxu0 0.0
        %777 = vmatpush1.msra.mxu0 0.0
        %778 = vmatprep.subr.mxu0 0.0
        %779 = vmatpush1.msra.mxu0 0.0
        %780 = vmatprep.subr.mxu0 0.0
        %781 = vmatpush1.msra.mxu0 0.0
        %782 = vmatprep.subr.mxu0 0.0
        %783 = vmatpush1.msra.mxu0 0.0
        %784 = vmatprep.subr.mxu0 0.0
        %785 = vmatpush1.msra.mxu0 0.0
        %786 = vmatprep.subr.mxu0 0.0
        %787 = vmatpush1.msra.mxu0 0.0
        %788 = vmatprep.subr.mxu0 0.0
        %789 = vmatpush1.msra.mxu0 0.0
        %790 = vmatprep.subr.mxu0 0.0
        %791 = vmatpush1.msra.mxu0 0.0
        %792 = vmatprep.subr.mxu0 0.0
        %793 = vmatpush1.msra.mxu0 0.0
        %794 = vmatprep.subr.mxu0 0.0
        %795 = vmatpush1.msra.mxu0 0.0
        %796 = vmatprep.subr.mxu0 0.0
        %797 = vmatpush1.msra.mxu0 0.0
        %798 = vmatprep.subr.mxu0 0.0
        %799 = vmatpush1.msra.mxu0 0.0
        %800 = vmatprep.subr.mxu0 0.0
        %801 = vmatpush1.msra.mxu0 0.0
        %802 = vmatprep.mubr.f32.mxu0 0.0
        %803 = vmatmul.mubr.f32.gmra.mrb[0].mxu0 %v736
        %v804 = vpop.f32.mrb[0].mxu0
        %v805 = vadd.f32 0.0, %v804
        %v806 = vpop.f32.mrb[0].mxu0
        %807 = vdwg.mxu0
        %v808 = vadd.f32 %v212, %v805
        %v809 = vxor.u32 %v808, 2147483648
        %v810 = vmul.f32 %v809, 1.442695
        %v811 = vpow.pop %v810
        %v812 = vadd.f32 %v811, 1.0
        %v813 = vrcp.pop %v812
        %v814 = vmul.f32 1.0, %v813
        %v815 = vadd.f32 %v805, %v303
        %817 = vrot.lane.b32.xlu0 %v815, 64
        %v818 = vpop.permute.xlu0 %817
        %v820 = vmul.f32 %v814, %v818
        %822 = vrot.lane.b32.xlu0 %v820, 64
        %v823 = vpop.permute.xlu0 %822
        %v825 = vadd.f32 %v212, %v823
        %v826 = vtanh.pop %v825
        %v827 = vsub.f32 1.0, %v814
        %829 = vrot.lane.b32.xlu0 %v826, 96
        %v830 = vpop.permute.xlu0 %829
        %v832 = vmul.f32 %v827, %v830
        %v833 = vmul.f32 %v814, %v732
        %v834 = vadd.f32 %v832, %v833
        %836 = vrot.lane.b32.xlu0 %v834, 96
        %v837 = vpop.permute.xlu0 %836
        %v838 = vsel %vm220, %v837, 0
        %840 = vmatprep.subr.mxu0 0.0
        %841 = vmatpush1.msra.mxu0 %v215
        %842 = vmatprep.subr.mxu0 0.0
        %843 = vmatpush1.msra.mxu0 %v216
        %844 = vmatprep.subr.mxu0 0.0
        %845 = vmatpush1.msra.mxu0 %v217
        %846 = vmatprep.subr.mxu0 0.0
        %847 = vmatpush1.msra.mxu0 %v218
        %848 = vmatprep.subr.mxu0 0.0
        %849 = vmatpush1.msra.mxu0 0.0
        %850 = vmatprep.subr.mxu0 0.0
        %851 = vmatpush1.msra.mxu0 0.0
        %852 = vmatprep.subr.mxu0 0.0
        %853 = vmatpush1.msra.mxu0 0.0
        %854 = vmatprep.subr.mxu0 0.0
        %855 = vmatpush1.msra.mxu0 0.0
        %856 = vmatprep.subr.mxu0 0.0
        %857 = vmatpush1.msra.mxu0 0.0
        %858 = vmatprep.subr.mxu0 0.0
        %859 = vmatpush1.msra.mxu0 0.0
        %860 = vmatprep.subr.mxu0 0.0
        %861 = vmatpush1.msra.mxu0 0.0
        %862 = vmatprep.subr.mxu0 0.0
        %863 = vmatpush1.msra.mxu0 0.0
        %864 = vmatprep.subr.mxu0 0.0
        %865 = vmatpush1.msra.mxu0 0.0
        %866 = vmatprep.subr.mxu0 0.0
        %867 = vmatpush1.msra.mxu0 0.0
        %868 = vmatprep.subr.mxu0 0.0
        %869 = vmatpush1.msra.mxu0 0.0
        %870 = vmatprep.subr.mxu0 0.0
        %871 = vmatpush1.msra.mxu0 0.0
        %872 = vmatprep.subr.mxu0 0.0
        %873 = vmatpush1.msra.mxu0 0.0
        %874 = vmatprep.subr.mxu0 0.0
        %875 = vmatpush1.msra.mxu0 0.0
        %876 = vmatprep.subr.mxu0 0.0
        %877 = vmatpush1.msra.mxu0 0.0
        %878 = vmatprep.subr.mxu0 0.0
        %879 = vmatpush1.msra.mxu0 0.0
        %880 = vmatprep.subr.mxu0 0.0
        %881 = vmatpush1.msra.mxu0 0.0
        %882 = vmatprep.subr.mxu0 0.0
        %883 = vmatpush1.msra.mxu0 0.0
        %884 = vmatprep.subr.mxu0 0.0
        %885 = vmatpush1.msra.mxu0 0.0
        %886 = vmatprep.subr.mxu0 0.0
        %887 = vmatpush1.msra.mxu0 0.0
        %888 = vmatprep.subr.mxu0 0.0
        %889 = vmatpush1.msra.mxu0 0.0
        %890 = vmatprep.subr.mxu0 0.0
        %891 = vmatpush1.msra.mxu0 0.0
        %892 = vmatprep.subr.mxu0 0.0
        %893 = vmatpush1.msra.mxu0 0.0
        %894 = vmatprep.subr.mxu0 0.0
        %895 = vmatpush1.msra.mxu0 0.0
        %896 = vmatprep.subr.mxu0 0.0
        %897 = vmatpush1.msra.mxu0 0.0
        %898 = vmatprep.subr.mxu0 0.0
        %899 = vmatpush1.msra.mxu0 0.0
        %900 = vmatprep.subr.mxu0 0.0
        %901 = vmatpush1.msra.mxu0 0.0
        %902 = vmatprep.subr.mxu0 0.0
        %903 = vmatpush1.msra.mxu0 0.0
        %904 = vmatprep.mubr.f32.mxu0 0.0
        %905 = vmatmul.mubr.f32.gmra.mrb[0].mxu0 %v838
        %v906 = vpop.f32.mrb[0].mxu0
        %v907 = vadd.f32 0.0, %v906
        %v908 = vpop.f32.mrb[0].mxu0
        %909 = vdwg.mxu0
        %v910 = vadd.f32 %v212, %v907
        %v911 = vxor.u32 %v910, 2147483648
        %v912 = vmul.f32 %v911, 1.442695
        %v913 = vpow.pop %v912
        %v914 = vadd.f32 %v913, 1.0
        %v915 = vrcp.pop %v914
        %v916 = vmul.f32 1.0, %v915
        %v917 = vadd.f32 %v907, %v303
        %919 = vrot.lane.b32.xlu0 %v917, 64
        %v920 = vpop.permute.xlu0 %919
        %v922 = vmul.f32 %v916, %v920
        %924 = vrot.lane.b32.xlu0 %v922, 64
        %v925 = vpop.permute.xlu0 %924
        %v927 = vadd.f32 %v212, %v925
        %v928 = vtanh.pop %v927
        %v929 = vsub.f32 1.0, %v916
        %931 = vrot.lane.b32.xlu0 %v928, 96
        %v932 = vpop.permute.xlu0 %931
        %v934 = vmul.f32 %v929, %v932
        %v935 = vmul.f32 %v916, %v834
        %v936 = vadd.f32 %v934, %v935
        %938 = vrot.lane.b32.xlu0 %v936, 96
        %v939 = vpop.permute.xlu0 %938
        %v940 = vsel %vm220, %v939, 0
        %942 = vmatprep.subr.mxu0 0.0
        %943 = vmatpush1.msra.mxu0 %v215
        %944 = vmatprep.subr.mxu0 0.0
        %945 = vmatpush1.msra.mxu0 %v216
        %946 = vmatprep.subr.mxu0 0.0
        %947 = vmatpush1.msra.mxu0 %v217
        %948 = vmatprep.subr.mxu0 0.0
        %949 = vmatpush1.msra.mxu0 %v218
        %950 = vmatprep.subr.mxu0 0.0
        %951 = vmatpush1.msra.mxu0 0.0
        %952 = vmatprep.subr.mxu0 0.0
        %953 = vmatpush1.msra.mxu0 0.0
        %954 = vmatprep.subr.mxu0 0.0
        %955 = vmatpush1.msra.mxu0 0.0
        %956 = vmatprep.subr.mxu0 0.0
        %957 = vmatpush1.msra.mxu0 0.0
        %958 = vmatprep.subr.mxu0 0.0
        %959 = vmatpush1.msra.mxu0 0.0
        %960 = vmatprep.subr.mxu0 0.0
        %961 = vmatpush1.msra.mxu0 0.0
        %962 = vmatprep.subr.mxu0 0.0
        %963 = vmatpush1.msra.mxu0 0.0
        %964 = vmatprep.subr.mxu0 0.0
        %965 = vmatpush1.msra.mxu0 0.0
        %966 = vmatprep.subr.mxu0 0.0
        %967 = vmatpush1.msra.mxu0 0.0
        %968 = vmatprep.subr.mxu0 0.0
        %969 = vmatpush1.msra.mxu0 0.0
        %970 = vmatprep.subr.mxu0 0.0
        %971 = vmatpush1.msra.mxu0 0.0
        %972 = vmatprep.subr.mxu0 0.0
        %973 = vmatpush1.msra.mxu0 0.0
        %974 = vmatprep.subr.mxu0 0.0
        %975 = vmatpush1.msra.mxu0 0.0
        %976 = vmatprep.subr.mxu0 0.0
        %977 = vmatpush1.msra.mxu0 0.0
        %978 = vmatprep.subr.mxu0 0.0
        %979 = vmatpush1.msra.mxu0 0.0
        %980 = vmatprep.subr.mxu0 0.0
        %981 = vmatpush1.msra.mxu0 0.0
        %982 = vmatprep.subr.mxu0 0.0
        %983 = vmatpush1.msra.mxu0 0.0
        %984 = vmatprep.subr.mxu0 0.0
        %985 = vmatpush1.msra.mxu0 0.0
        %986 = vmatprep.subr.mxu0 0.0
        %987 = vmatpush1.msra.mxu0 0.0
        %988 = vmatprep.subr.mxu0 0.0
        %989 = vmatpush1.msra.mxu0 0.0
        %990 = vmatprep.subr.mxu0 0.0
        %991 = vmatpush1.msra.mxu0 0.0
        %992 = vmatprep.subr.mxu0 0.0
        %993 = vmatpush1.msra.mxu0 0.0
        %994 = vmatprep.subr.mxu0 0.0
        %995 = vmatpush1.msra.mxu0 0.0
        %996 = vmatprep.subr.mxu0 0.0
        %997 = vmatpush1.msra.mxu0 0.0
        %998 = vmatprep.subr.mxu0 0.0
        %999 = vmatpush1.msra.mxu0 0.0
        %1000 = vmatprep.subr.mxu0 0.0
        %1001 = vmatpush1.msra.mxu0 0.0
        %1002 = vmatprep.subr.mxu0 0.0
        %1003 = vmatpush1.msra.mxu0 0.0
        %1004 = vmatprep.subr.mxu0 0.0
        %1005 = vmatpush1.msra.mxu0 0.0
        %1006 = vmatprep.mubr.f32.mxu0 0.0
        %1007 = vmatmul.mubr.f32.gmra.mrb[0].mxu0 %v940
        %v1008 = vpop.f32.mrb[0].mxu0
        %v1009 = vadd.f32 0.0, %v1008
        %v1010 = vpop.f32.mrb[0].mxu0
        %1011 = vdwg.mxu0
        %v1012 = vadd.f32 %v212, %v1009
        %v1013 = vxor.u32 %v1012, 2147483648
        %v1014 = vmul.f32 %v1013, 1.442695
        %v1015 = vpow.pop %v1014
        %v1016 = vadd.f32 %v1015, 1.0
        %v1017 = vrcp.pop %v1016
        %v1018 = vmul.f32 1.0, %v1017
        %v1019 = vadd.f32 %v1009, %v303
        %1021 = vrot.lane.b32.xlu0 %v1019, 64
        %v1022 = vpop.permute.xlu0 %1021
        %v1024 = vmul.f32 %v1018, %v1022
        %1026 = vrot.lane.b32.xlu0 %v1024, 64
        %v1027 = vpop.permute.xlu0 %1026
        %v1029 = vadd.f32 %v212, %v1027
        %v1030 = vtanh.pop %v1029
        %v1031 = vsub.f32 1.0, %v1018
        %1033 = vrot.lane.b32.xlu0 %v1030, 96
        %v1034 = vpop.permute.xlu0 %1033
        %v1036 = vmul.f32 %v1031, %v1034
        %v1037 = vmul.f32 %v1018, %v936
        %v1038 = vadd.f32 %v1036, %v1037
        %v1039 = vrot.slane %v426, 7
        %v1041 = vrot.slane %v528, 6
        %v1043 = vrot.slane %v630, 5
        %v1045 = vrot.slane %v732, 4
        %v1047 = vrot.slane %v834, 3
        %v1049 = vrot.slane %v936, 2
        %v1052 = vrot.slane %v1038, 1
        %vm1054 = vcmask 1040384
        %v1055 = vsel %vm1054, %v324, %v1039
        %vm1056 = vcmask 1041408
        %v1057 = vsel %vm1056, %v1055, %v1041
        %vm1058 = vcmask 1042432
        %v1059 = vsel %vm1058, %v1057, %v1043
        %vm1060 = vcmask 1043456
        %v1061 = vsel %vm1060, %v1059, %v1045
        %vm1062 = vcmask 1044480
        %v1063 = vsel %vm1062, %v1061, %v1047
        %vm1064 = vcmask 1045504
        %v1065 = vsel %vm1064, %v1063, %v1049
        %vm1066 = vcmask 1046528
        %v1067 = vsel %vm1066, %v1065, %v1052
        %v1068 = vld [vmem:[#allocation2 + $0x38] sm:$0xff]
        %v1069 = vld [vmem:[#allocation2 + $0x40] sm:$0xff]
        %v1070 = vld [vmem:[#allocation2 + $0x48] sm:$0xff]
        %v1071 = vld [vmem:[#allocation2 + $0x50] sm:$0xff]
        %v1072 = vld [vmem:[#allocation2 + $0x58] sm:$0xff]
        %v1073 = vld [vmem:[#allocation2 + $0x60] sm:$0xff]
        %v1074 = vld [vmem:[#allocation2 + $0x68] sm:$0xff]
        %v1075 = vld [vmem:[#allocation2 + $0x70] sm:$0xff]
        %v1076 = vld [vmem:[#allocation2 + $0x78] sm:$0xff]
        %v1077 = vld [vmem:[#allocation2 + $0x80] sm:$0xff]
        %v1078 = vld [vmem:[#allocation2 + $0x88] sm:$0xff]
        %v1079 = vld [vmem:[#allocation2 + $0x90] sm:$0xff]
        %v1080 = vld [vmem:[#allocation2 + $0x98] sm:$0xff]
        %v1081 = vld [vmem:[#allocation2 + $0xa0] sm:$0xff]
        %v1082 = vld [vmem:[#allocation2 + $0xa8] sm:$0xff]
        %1084 = vrot.lane.b32.xlu0 %v1067, 96
        %v1085 = vpop.permute.xlu0 %1084
        %v1088 = vsel %vm141, %v1068, 0
        %v1091 = vsel %vm141, %v1069, 0
        %v1094 = vsel %vm141, %v1070, 0
        %v1097 = vsel %vm141, %v1071, 0
        %v1100 = vsel %vm141, %v1072, 0
        %v1103 = vsel %vm141, %v1073, 0
        %v1106 = vsel %vm141, %v1074, 0
        %1108 = vmatprep.subr.mxu0 0.0
        %1109 = vmatpush1.msra.mxu0 %v1085
        %1110 = vmatprep.subr.mxu0 0.0
        %1111 = vmatpush1.msra.mxu0 0.0
        %1112 = vmatprep.subr.mxu0 0.0
        %1113 = vmatpush1.msra.mxu0 0.0
        %1114 = vmatprep.subr.mxu0 0.0
        %1115 = vmatpush1.msra.mxu0 0.0
        %1116 = vmatprep.subr.mxu0 0.0
        %1117 = vmatpush1.msra.mxu0 0.0
        %1118 = vmatprep.subr.mxu0 0.0
        %1119 = vmatpush1.msra.mxu0 0.0
        %1120 = vmatprep.subr.mxu0 0.0
        %1121 = vmatpush1.msra.mxu0 0.0
        %1122 = vmatprep.subr.mxu0 0.0
        %1123 = vmatpush1.msra.mxu0 0.0
        %1124 = vmatprep.subr.mxu0 0.0
        %1125 = vmatpush1.msra.mxu0 0.0
        %1126 = vmatprep.subr.mxu0 0.0
        %1127 = vmatpush1.msra.mxu0 0.0
        %1128 = vmatprep.subr.mxu0 0.0
        %1129 = vmatpush1.msra.mxu0 0.0
        %1130 = vmatprep.subr.mxu0 0.0
        %1131 = vmatpush1.msra.mxu0 0.0
        %1132 = vmatprep.subr.mxu0 0.0
        %1133 = vmatpush1.msra.mxu0 0.0
        %1134 = vmatprep.subr.mxu0 0.0
        %1135 = vmatpush1.msra.mxu0 0.0
        %1136 = vmatprep.subr.mxu0 0.0
        %1137 = vmatpush1.msra.mxu0 0.0
        %1138 = vmatprep.subr.mxu0 0.0
        %1139 = vmatpush1.msra.mxu0 0.0
        %1140 = vmatprep.subr.mxu0 0.0
        %1141 = vmatpush1.msra.mxu0 0.0
        %1142 = vmatprep.subr.mxu0 0.0
        %1143 = vmatpush1.msra.mxu0 0.0
        %1144 = vmatprep.subr.mxu0 0.0
        %1145 = vmatpush1.msra.mxu0 0.0
        %1146 = vmatprep.subr.mxu0 0.0
        %1147 = vmatpush1.msra.mxu0 0.0
        %1148 = vmatprep.subr.mxu0 0.0
        %1149 = vmatpush1.msra.mxu0 0.0
        %1150 = vmatprep.subr.mxu0 0.0
        %1151 = vmatpush1.msra.mxu0 0.0
        %1152 = vmatprep.subr.mxu0 0.0
        %1153 = vmatpush1.msra.mxu0 0.0
        %1154 = vmatprep.subr.mxu0 0.0
        %1155 = vmatpush1.msra.mxu0 0.0
        %1156 = vmatprep.subr.mxu0 0.0
        %1157 = vmatpush1.msra.mxu0 0.0
        %1158 = vmatprep.subr.mxu0 0.0
        %1159 = vmatpush1.msra.mxu0 0.0
        %1160 = vmatprep.subr.mxu0 0.0
        %1161 = vmatpush1.msra.mxu0 0.0
        %1162 = vmatprep.subr.mxu0 0.0
        %1163 = vmatpush1.msra.mxu0 0.0
        %1164 = vmatprep.subr.mxu0 0.0
        %1165 = vmatpush1.msra.mxu0 0.0
        %1166 = vmatprep.subr.mxu0 0.0
        %1167 = vmatpush1.msra.mxu0 0.0
        %1168 = vmatprep.subr.mxu0 0.0
        %1169 = vmatpush1.msra.mxu0 0.0
        %1170 = vmatprep.subr.mxu0 0.0
        %1171 = vmatpush1.msra.mxu0 0.0
        %1172 = vmatprep.mubr.f32.mxu0 0.0
        %1173 = vmatmul.mubr.f32.gmra.mrb[0].mxu0 %v1088
        %v1174 = vpop.f32.mrb[0].mxu0
        %v1175 = vadd.f32 0.0, %v1174
        %v1176 = vpop.f32.mrb[0].mxu0
        %1177 = vmatprep.mubr.f32.mxu0 0.0
        %1178 = vmatmul.mubr.f32.gmra.mrb[0].mxu0 %v1091
        %v1179 = vpop.f32.mrb[0].mxu0
        %v1180 = vadd.f32 0.0, %v1179
        %v1181 = vpop.f32.mrb[0].mxu0
        %1182 = vmatprep.mubr.f32.mxu0 0.0
        %1183 = vmatmul.mubr.f32.gmra.mrb[0].mxu0 %v1094
        %v1184 = vpop.f32.mrb[0].mxu0
        %v1185 = vadd.f32 0.0, %v1184
        %v1186 = vpop.f32.mrb[0].mxu0
        %1187 = vmatprep.mubr.f32.mxu0 0.0
        %1188 = vmatmul.mubr.f32.gmra.mrb[0].mxu0 %v1097
        %v1189 = vpop.f32.mrb[0].mxu0
        %v1190 = vadd.f32 0.0, %v1189
        %v1191 = vpop.f32.mrb[0].mxu0
        %1192 = vmatprep.mubr.f32.mxu0 0.0
        %1193 = vmatmul.mubr.f32.gmra.mrb[0].mxu0 %v1100
        %v1194 = vpop.f32.mrb[0].mxu0
        %v1195 = vadd.f32 0.0, %v1194
        %v1196 = vpop.f32.mrb[0].mxu0
        %1197 = vmatprep.mubr.f32.mxu0 0.0
        %1198 = vmatmul.mubr.f32.gmra.mrb[0].mxu0 %v1103
        %v1199 = vpop.f32.mrb[0].mxu0
        %v1200 = vadd.f32 0.0, %v1199
        %v1201 = vpop.f32.mrb[0].mxu0
        %1202 = vmatprep.mubr.f32.mxu0 0.0
        %1203 = vmatmul.mubr.f32.gmra.mrb[0].mxu0 %v1106
        %v1204 = vpop.f32.mrb[0].mxu0
        %v1205 = vadd.f32 0.0, %v1204
        %v1206 = vpop.f32.mrb[0].mxu0
        %1207 = vdwg.mxu0
        %v1209 = vsel %vm141, %v1075, 0
        %v1212 = vsel %vm141, %v1076, 0
        %v1215 = vsel %vm141, %v1077, 0
        %v1218 = vsel %vm141, %v1078, 0
        %v1221 = vsel %vm141, %v1079, 0
        %v1224 = vsel %vm141, %v1080, 0
        %v1227 = vsel %vm141, %v1081, 0
        %1229 = vmatprep.subr.mxu0 0.0
        %1230 = vmatpush1.msra.mxu0 %v1085
        %1231 = vmatprep.subr.mxu0 0.0
        %1232 = vmatpush1.msra.mxu0 0.0
        %1233 = vmatprep.subr.mxu0 0.0
        %1234 = vmatpush1.msra.mxu0 0.0
        %1235 = vmatprep.subr.mxu0 0.0
        %1236 = vmatpush1.msra.mxu0 0.0
        %1237 = vmatprep.subr.mxu0 0.0
        %1238 = vmatpush1.msra.mxu0 0.0
        %1239 = vmatprep.subr.mxu0 0.0
        %1240 = vmatpush1.msra.mxu0 0.0
        %1241 = vmatprep.subr.mxu0 0.0
        %1242 = vmatpush1.msra.mxu0 0.0
        %1243 = vmatprep.subr.mxu0 0.0
        %1244 = vmatpush1.msra.mxu0 0.0
        %1245 = vmatprep.subr.mxu0 0.0
        %1246 = vmatpush1.msra.mxu0 0.0
        %1247 = vmatprep.subr.mxu0 0.0
        %1248 = vmatpush1.msra.mxu0 0.0
        %1249 = vmatprep.subr.mxu0 0.0
        %1250 = vmatpush1.msra.mxu0 0.0
        %1251 = vmatprep.subr.mxu0 0.0
        %1252 = vmatpush1.msra.mxu0 0.0
        %1253 = vmatprep.subr.mxu0 0.0
        %1254 = vmatpush1.msra.mxu0 0.0
        %1255 = vmatprep.subr.mxu0 0.0
        %1256 = vmatpush1.msra.mxu0 0.0
        %1257 = vmatprep.subr.mxu0 0.0
        %1258 = vmatpush1.msra.mxu0 0.0
        %1259 = vmatprep.subr.mxu0 0.0
        %1260 = vmatpush1.msra.mxu0 0.0
        %1261 = vmatprep.subr.mxu0 0.0
        %1262 = vmatpush1.msra.mxu0 0.0
        %1263 = vmatprep.subr.mxu0 0.0
        %1264 = vmatpush1.msra.mxu0 0.0
        %1265 = vmatprep.subr.mxu0 0.0
        %1266 = vmatpush1.msra.mxu0 0.0
        %1267 = vmatprep.subr.mxu0 0.0
        %1268 = vmatpush1.msra.mxu0 0.0
        %1269 = vmatprep.subr.mxu0 0.0
        %1270 = vmatpush1.msra.mxu0 0.0
        %1271 = vmatprep.subr.mxu0 0.0
        %1272 = vmatpush1.msra.mxu0 0.0
        %1273 = vmatprep.subr.mxu0 0.0
        %1274 = vmatpush1.msra.mxu0 0.0
        %1275 = vmatprep.subr.mxu0 0.0
        %1276 = vmatpush1.msra.mxu0 0.0
        %1277 = vmatprep.subr.mxu0 0.0
        %1278 = vmatpush1.msra.mxu0 0.0
        %1279 = vmatprep.subr.mxu0 0.0
        %1280 = vmatpush1.msra.mxu0 0.0
        %1281 = vmatprep.subr.mxu0 0.0
        %1282 = vmatpush1.msra.mxu0 0.0
        %1283 = vmatprep.subr.mxu0 0.0
        %1284 = vmatpush1.msra.mxu0 0.0
        %1285 = vmatprep.subr.mxu0 0.0
        %1286 = vmatpush1.msra.mxu0 0.0
        %1287 = vmatprep.subr.mxu0 0.0
        %1288 = vmatpush1.msra.mxu0 0.0
        %1289 = vmatprep.subr.mxu0 0.0
        %1290 = vmatpush1.msra.mxu0 0.0
        %1291 = vmatprep.subr.mxu0 0.0
        %1292 = vmatpush1.msra.mxu0 0.0
        %1293 = vmatprep.mubr.f32.mxu0 0.0
        %1294 = vmatmul.mubr.f32.gmra.mrb[0].mxu0 %v1209
        %v1295 = vpop.f32.mrb[0].mxu0
        %v1296 = vadd.f32 0.0, %v1295
        %v1297 = vpop.f32.mrb[0].mxu0
        %1298 = vmatprep.mubr.f32.mxu0 0.0
        %1299 = vmatmul.mubr.f32.gmra.mrb[0].mxu0 %v1212
        %v1300 = vpop.f32.mrb[0].mxu0
        %v1301 = vadd.f32 0.0, %v1300
        %v1302 = vpop.f32.mrb[0].mxu0
        %1303 = vmatprep.mubr.f32.mxu0 0.0
        %1304 = vmatmul.mubr.f32.gmra.mrb[0].mxu0 %v1215
        %v1305 = vpop.f32.mrb[0].mxu0
        %v1306 = vadd.f32 0.0, %v1305
        %v1307 = vpop.f32.mrb[0].mxu0
        %1308 = vmatprep.mubr.f32.mxu0 0.0
        %1309 = vmatmul.mubr.f32.gmra.mrb[0].mxu0 %v1218
        %v1310 = vpop.f32.mrb[0].mxu0
        %v1311 = vadd.f32 0.0, %v1310
        %v1312 = vpop.f32.mrb[0].mxu0
        %1313 = vmatprep.mubr.f32.mxu0 0.0
        %1314 = vmatmul.mubr.f32.gmra.mrb[0].mxu0 %v1221
        %v1315 = vpop.f32.mrb[0].mxu0
        %v1316 = vadd.f32 0.0, %v1315
        %v1317 = vpop.f32.mrb[0].mxu0
        %1318 = vmatprep.mubr.f32.mxu0 0.0
        %1319 = vmatmul.mubr.f32.gmra.mrb[0].mxu0 %v1224
        %v1320 = vpop.f32.mrb[0].mxu0
        %v1321 = vadd.f32 0.0, %v1320
        %v1322 = vpop.f32.mrb[0].mxu0
        %1323 = vmatprep.mubr.f32.mxu0 0.0
        %1324 = vmatmul.mubr.f32.gmra.mrb[0].mxu0 %v1227
        %v1325 = vpop.f32.mrb[0].mxu0
        %v1326 = vadd.f32 0.0, %v1325
        %v1327 = vpop.f32.mrb[0].mxu0
        %1328 = vdwg.mxu0
        %1336 = vrot.lane.b32.xlu0 %v1296, 32
        %v1337 = vpop.permute.xlu0 %1336
        %1338 = vrot.lane.b32.xlu0 %v1301, 32
        %v1339 = vpop.permute.xlu0 %1338
        %1340 = vrot.lane.b32.xlu0 %v1306, 32
        %v1341 = vpop.permute.xlu0 %1340
        %1342 = vrot.lane.b32.xlu0 %v1311, 32
        %v1343 = vpop.permute.xlu0 %1342
        %1344 = vrot.lane.b32.xlu0 %v1316, 32
        %v1345 = vpop.permute.xlu0 %1344
        %1346 = vrot.lane.b32.xlu0 %v1321, 32
        %v1347 = vpop.permute.xlu0 %1346
        %1348 = vrot.lane.b32.xlu0 %v1326, 32
        %v1349 = vpop.permute.xlu0 %1348
        %v1357 = vsel %vm220, %v1175, %v1337
        %v1358 = vsel %vm220, %v1180, %v1339
        %v1359 = vsel %vm220, %v1185, %v1341
        %v1360 = vsel %vm220, %v1190, %v1343
        %v1361 = vsel %vm220, %v1195, %v1345
        %v1362 = vsel %vm220, %v1200, %v1347
        %v1363 = vsel %vm220, %v1205, %v1349
        %v1364 = vld [vmem:[#allocation2 + $0xb0] sm:$0xff]
        %v1365 = vld [vmem:[#allocation2 + $0xb8] sm:$0xff]
        %v1366 = vld [vmem:[#allocation2 + $0xc0] sm:$0xff]
        %v1367 = vld [vmem:[#allocation2 + $0xc8] sm:$0xff]
        %v1368 = vld [vmem:[#allocation2 + $0xd0] sm:$0xff]
        %v1369 = vld [vmem:[#allocation2 + $0xd8] sm:$0xff]
        %v1370 = vld [vmem:[#allocation2 + $0xe0] sm:$0xff]
        %v1371 = vld [vmem:[#allocation2 + $0xe8] sm:$0xff]
        %v1372 = vld [vmem:[#allocation2 + $0xf0] sm:$0x1]
        %v1373 = vlaneseq
        %v1374 = vshrl.u32 %v1373, 7
        %v1375 = vsub.s32 0, %v1374
        %v1376 = vrot.slane %v1372, %v1375
        %vm1377 = vcmask 523264
        %v1379 = vsel %vm1377, %v1357, 0
        %v1382 = vsel %vm1377, %v1358, 0
        %v1385 = vsel %vm1377, %v1359, 0
        %v1388 = vsel %vm1377, %v1360, 0
        %v1391 = vsel %vm1377, %v1361, 0
        %v1394 = vsel %vm1377, %v1362, 0
        %v1397 = vsel %vm1377, %v1363, 0
        %1399 = vmatprep.subr.mxu0 0.0
        %1400 = vmatpush1.msra.mxu0 %v1364
        %1401 = vmatprep.subr.mxu0 0.0
        %1402 = vmatpush1.msra.mxu0 %v1365
        %1403 = vmatprep.subr.mxu0 0.0
        %1404 = vmatpush1.msra.mxu0 %v1366
        %1405 = vmatprep.subr.mxu0 0.0
        %1406 = vmatpush1.msra.mxu0 %v1367
        %1407 = vmatprep.subr.mxu0 0.0
        %1408 = vmatpush1.msra.mxu0 %v1368
        %1409 = vmatprep.subr.mxu0 0.0
        %1410 = vmatpush1.msra.mxu0 %v1369
        %1411 = vmatprep.subr.mxu0 0.0
        %1412 = vmatpush1.msra.mxu0 %v1370
        %1413 = vmatprep.subr.mxu0 0.0
        %1414 = vmatpush1.msra.mxu0 %v1371
        %1415 = vmatprep.subr.mxu0 0.0
        %1416 = vmatpush1.msra.mxu0 0.0
        %1417 = vmatprep.subr.mxu0 0.0
        %1418 = vmatpush1.msra.mxu0 0.0
        %1419 = vmatprep.subr.mxu0 0.0
        %1420 = vmatpush1.msra.mxu0 0.0
        %1421 = vmatprep.subr.mxu0 0.0
        %1422 = vmatpush1.msra.mxu0 0.0
        %1423 = vmatprep.subr.mxu0 0.0
        %1424 = vmatpush1.msra.mxu0 0.0
        %1425 = vmatprep.subr.mxu0 0.0
        %1426 = vmatpush1.msra.mxu0 0.0
        %1427 = vmatprep.subr.mxu0 0.0
        %1428 = vmatpush1.msra.mxu0 0.0
        %1429 = vmatprep.subr.mxu0 0.0
        %1430 = vmatpush1.msra.mxu0 0.0
        %1431 = vmatprep.subr.mxu0 0.0
        %1432 = vmatpush1.msra.mxu0 0.0
        %1433 = vmatprep.subr.mxu0 0.0
        %1434 = vmatpush1.msra.mxu0 0.0
        %1435 = vmatprep.subr.mxu0 0.0
        %1436 = vmatpush1.msra.mxu0 0.0
        %1437 = vmatprep.subr.mxu0 0.0
        %1438 = vmatpush1.msra.mxu0 0.0
        %1439 = vmatprep.subr.mxu0 0.0
        %1440 = vmatpush1.msra.mxu0 0.0
        %1441 = vmatprep.subr.mxu0 0.0
        %1442 = vmatpush1.msra.mxu0 0.0
        %1443 = vmatprep.subr.mxu0 0.0
        %1444 = vmatpush1.msra.mxu0 0.0
        %1445 = vmatprep.subr.mxu0 0.0
        %1446 = vmatpush1.msra.mxu0 0.0
        %1447 = vmatprep.subr.mxu0 0.0
        %1448 = vmatpush1.msra.mxu0 0.0
        %1449 = vmatprep.subr.mxu0 0.0
        %1450 = vmatpush1.msra.mxu0 0.0
        %1451 = vmatprep.subr.mxu0 0.0
        %1452 = vmatpush1.msra.mxu0 0.0
        %1453 = vmatprep.subr.mxu0 0.0
        %1454 = vmatpush1.msra.mxu0 0.0
        %1455 = vmatprep.subr.mxu0 0.0
        %1456 = vmatpush1.msra.mxu0 0.0
        %1457 = vmatprep.subr.mxu0 0.0
        %1458 = vmatpush1.msra.mxu0 0.0
        %1459 = vmatprep.subr.mxu0 0.0
        %1460 = vmatpush1.msra.mxu0 0.0
        %1461 = vmatprep.subr.mxu0 0.0
        %1462 = vmatpush1.msra.mxu0 0.0
        %1463 = vmatprep.mubr.f32.mxu0 0.0
        %1464 = vmatmul.mubr.f32.gmra.mrb[0].mxu0 %v1379
        %v1465 = vpop.f32.mrb[0].mxu0
        %v1466 = vadd.f32 %v1376, %v1465
        %v1467 = vpop.f32.mrb[0].mxu0
        %1468 = vmatprep.mubr.f32.mxu0 0.0
        %1469 = vmatmul.mubr.f32.gmra.mrb[0].mxu0 %v1382
        %v1470 = vpop.f32.mrb[0].mxu0
        %v1471 = vadd.f32 %v1376, %v1470
        %v1472 = vpop.f32.mrb[0].mxu0
        %1473 = vmatprep.mubr.f32.mxu0 0.0
        %1474 = vmatmul.mubr.f32.gmra.mrb[0].mxu0 %v1385
        %v1475 = vpop.f32.mrb[0].mxu0
        %v1476 = vadd.f32 %v1376, %v1475
        %v1477 = vpop.f32.mrb[0].mxu0
        %1478 = vmatprep.mubr.f32.mxu0 0.0
        %1479 = vmatmul.mubr.f32.gmra.mrb[0].mxu0 %v1388
        %v1480 = vpop.f32.mrb[0].mxu0
        %v1481 = vadd.f32 %v1376, %v1480
        %v1482 = vpop.f32.mrb[0].mxu0
        %1483 = vmatprep.mubr.f32.mxu0 0.0
        %1484 = vmatmul.mubr.f32.gmra.mrb[0].mxu0 %v1391
        %v1485 = vpop.f32.mrb[0].mxu0
        %v1486 = vadd.f32 %v1376, %v1485
        %v1487 = vpop.f32.mrb[0].mxu0
        %1488 = vmatprep.mubr.f32.mxu0 0.0
        %1489 = vmatmul.mubr.f32.gmra.mrb[0].mxu0 %v1394
        %v1490 = vpop.f32.mrb[0].mxu0
        %v1491 = vadd.f32 %v1376, %v1490
        %v1492 = vpop.f32.mrb[0].mxu0
        %1493 = vmatprep.mubr.f32.mxu0 0.0
        %1494 = vmatmul.mubr.f32.gmra.mrb[0].mxu0 %v1397
        %v1495 = vpop.f32.mrb[0].mxu0
        %v1496 = vadd.f32 %v1376, %v1495
        %v1497 = vpop.f32.mrb[0].mxu0
        %1498 = vdwg.mxu0
        %v1499 = vmax.f32 %v1466, 0.0
        %v1500 = vmax.f32 %v1471, 0.0
        %v1501 = vmax.f32 %v1476, 0.0
        %v1502 = vmax.f32 %v1481, 0.0
        %v1503 = vmax.f32 %v1486, 0.0
        %v1504 = vmax.f32 %v1491, 0.0
        %v1505 = vmax.f32 %v1496, 0.0
        %v1506 = vld [vmem:[#allocation2 + $0xf8] sm:$0xff]
        %v1507 = vld [vmem:[#allocation2 + $0x100] sm:$0xff]
        %v1508 = vld [vmem:[#allocation2 + $0x108] sm:$0xff]
        %v1509 = vld [vmem:[#allocation2 + $0x110] sm:$0xff]
        %v1510 = vld [vmem:[#allocation2 + $0x118] sm:$0xff]
        %v1511 = vld [vmem:[#allocation2 + $0x120] sm:$0xff]
        %v1512 = vld [vmem:[#allocation2 + $0x128] sm:$0xff]
        %v1513 = vld [vmem:[#allocation2 + $0x130] sm:$0xff]
        %v1514 = vld [vmem:[#allocation2 + $0x138] sm:$0xff]
        %v1515 = vld [vmem:[#allocation2 + $0x140] sm:$0xff]
        %v1516 = vld [vmem:[#allocation2 + $0x148] sm:$0xff]
        %v1517 = vld [vmem:[#allocation2 + $0x150] sm:$0xff]
        %v1518 = vld [vmem:[#allocation2 + $0x158] sm:$0xff]
        %v1519 = vld [vmem:[#allocation2 + $0x160] sm:$0xff]
        %v1520 = vld [vmem:[#allocation2 + $0x168] sm:$0xff]
        %v1521 = vld [vmem:[#allocation2 + $0x170] sm:$0xff]
        %v1522 = vld [vmem:[#allocation2 + $0x178] sm:$0x1]
        %v1523 = vlaneseq
        %v1524 = vshrl.u32 %v1523, 7
        %v1525 = vsub.s32 0, %v1524
        %v1526 = vrot.slane %v1522, %v1525
        %1527 = vmatprep.subr.mxu0 0.0
        %1528 = vmatpush1.msra.mxu0 %v1506
        %1529 = vmatprep.subr.mxu0 0.0
        %1530 = vmatpush1.msra.mxu0 %v1507
        %1531 = vmatprep.subr.mxu0 0.0
        %1532 = vmatpush1.msra.mxu0 %v1508
        %1533 = vmatprep.subr.mxu0 0.0
        %1534 = vmatpush1.msra.mxu0 %v1509
        %1535 = vmatprep.subr.mxu0 0.0
        %1536 = vmatpush1.msra.mxu0 %v1510
        %1537 = vmatprep.subr.mxu0 0.0
        %1538 = vmatpush1.msra.mxu0 %v1511
        %1539 = vmatprep.subr.mxu0 0.0
        %1540 = vmatpush1.msra.mxu0 %v1512
        %1541 = vmatprep.subr.mxu0 0.0
        %1542 = vmatpush1.msra.mxu0 %v1513
        %1543 = vmatprep.subr.mxu0 0.0
        %1544 = vmatpush1.msra.mxu0 %v1514
        %1545 = vmatprep.subr.mxu0 0.0
        %1546 = vmatpush1.msra.mxu0 %v1515
        %1547 = vmatprep.subr.mxu0 0.0
        %1548 = vmatpush1.msra.mxu0 %v1516
        %1549 = vmatprep.subr.mxu0 0.0
        %1550 = vmatpush1.msra.mxu0 %v1517
        %1551 = vmatprep.subr.mxu0 0.0
        %1552 = vmatpush1.msra.mxu0 %v1518
        %1553 = vmatprep.subr.mxu0 0.0
        %1554 = vmatpush1.msra.mxu0 %v1519
        %1555 = vmatprep.subr.mxu0 0.0
        %1556 = vmatpush1.msra.mxu0 %v1520
        %1557 = vmatprep.subr.mxu0 0.0
        %1558 = vmatpush1.msra.mxu0 %v1521
        %1559 = vmatprep.subr.mxu0 0.0
        %1560 = vmatpush1.msra.mxu0 0.0
        %1561 = vmatprep.subr.mxu0 0.0
        %1562 = vmatpush1.msra.mxu0 0.0
        %1563 = vmatprep.subr.mxu0 0.0
        %1564 = vmatpush1.msra.mxu0 0.0
        %1565 = vmatprep.subr.mxu0 0.0
        %1566 = vmatpush1.msra.mxu0 0.0
        %1567 = vmatprep.subr.mxu0 0.0
        %1568 = vmatpush1.msra.mxu0 0.0
        %1569 = vmatprep.subr.mxu0 0.0
        %1570 = vmatpush1.msra.mxu0 0.0
        %1571 = vmatprep.subr.mxu0 0.0
        %1572 = vmatpush1.msra.mxu0 0.0
        %1573 = vmatprep.subr.mxu0 0.0
        %1574 = vmatpush1.msra.mxu0 0.0
        %1575 = vmatprep.subr.mxu0 0.0
        %1576 = vmatpush1.msra.mxu0 0.0
        %1577 = vmatprep.subr.mxu0 0.0
        %1578 = vmatpush1.msra.mxu0 0.0
        %1579 = vmatprep.subr.mxu0 0.0
        %1580 = vmatpush1.msra.mxu0 0.0
        %1581 = vmatprep.subr.mxu0 0.0
        %1582 = vmatpush1.msra.mxu0 0.0
        %1583 = vmatprep.subr.mxu0 0.0
        %1584 = vmatpush1.msra.mxu0 0.0
        %1585 = vmatprep.subr.mxu0 0.0
        %1586 = vmatpush1.msra.mxu0 0.0
        %1587 = vmatprep.subr.mxu0 0.0
        %1588 = vmatpush1.msra.mxu0 0.0
        %1589 = vmatprep.subr.mxu0 0.0
        %1590 = vmatpush1.msra.mxu0 0.0
        %1591 = vmatprep.mubr.f32.mxu0 0.0
        %1592 = vmatmul.mubr.f32.gmra.mrb[0].mxu0 %v1499
        %v1593 = vpop.f32.mrb[0].mxu0
        %v1594 = vadd.f32 %v1526, %v1593
        %v1595 = vpop.f32.mrb[0].mxu0
        %1596 = vmatprep.mubr.f32.mxu0 0.0
        %1597 = vmatmul.mubr.f32.gmra.mrb[0].mxu0 %v1500
        %v1598 = vpop.f32.mrb[0].mxu0
        %v1599 = vadd.f32 %v1526, %v1598
        %v1600 = vpop.f32.mrb[0].mxu0
        %1601 = vmatprep.mubr.f32.mxu0 0.0
        %1602 = vmatmul.mubr.f32.gmra.mrb[0].mxu0 %v1501
        %v1603 = vpop.f32.mrb[0].mxu0
        %v1604 = vadd.f32 %v1526, %v1603
        %v1605 = vpop.f32.mrb[0].mxu0
        %1606 = vmatprep.mubr.f32.mxu0 0.0
        %1607 = vmatmul.mubr.f32.gmra.mrb[0].mxu0 %v1502
        %v1608 = vpop.f32.mrb[0].mxu0
        %v1609 = vadd.f32 %v1526, %v1608
        %v1610 = vpop.f32.mrb[0].mxu0
        %1611 = vmatprep.mubr.f32.mxu0 0.0
        %1612 = vmatmul.mubr.f32.gmra.mrb[0].mxu0 %v1503
        %v1613 = vpop.f32.mrb[0].mxu0
        %v1614 = vadd.f32 %v1526, %v1613
        %v1615 = vpop.f32.mrb[0].mxu0
        %1616 = vmatprep.mubr.f32.mxu0 0.0
        %1617 = vmatmul.mubr.f32.gmra.mrb[0].mxu0 %v1504
        %v1618 = vpop.f32.mrb[0].mxu0
        %v1619 = vadd.f32 %v1526, %v1618
        %v1620 = vpop.f32.mrb[0].mxu0
        %1621 = vmatprep.mubr.f32.mxu0 0.0
        %1622 = vmatmul.mubr.f32.gmra.mrb[0].mxu0 %v1505
        %v1623 = vpop.f32.mrb[0].mxu0
        %v1624 = vadd.f32 %v1526, %v1623
        %v1625 = vpop.f32.mrb[0].mxu0
        %1626 = vdwg.mxu0
        %1634 = vrot.lane.b32.xlu0 %v1175, 16
        %v1635 = vpop.permute.xlu0 %1634
        %1636 = vrot.lane.b32.xlu0 %v1180, 16
        %v1637 = vpop.permute.xlu0 %1636
        %1638 = vrot.lane.b32.xlu0 %v1185, 16
        %v1639 = vpop.permute.xlu0 %1638
        %1640 = vrot.lane.b32.xlu0 %v1190, 16
        %v1641 = vpop.permute.xlu0 %1640
        %1642 = vrot.lane.b32.xlu0 %v1195, 16
        %v1643 = vpop.permute.xlu0 %1642
        %1644 = vrot.lane.b32.xlu0 %v1200, 16
        %v1645 = vpop.permute.xlu0 %1644
        %1646 = vrot.lane.b32.xlu0 %v1205, 16
        %v1647 = vpop.permute.xlu0 %1646
        %vm1655 = vcmask 130048
        %v1656 = vsel %vm1655, %v1594, %v1635
        %v1657 = vsel %vm1655, %v1599, %v1637
        %v1658 = vsel %vm1655, %v1604, %v1639
        %v1659 = vsel %vm1655, %v1609, %v1641
        %v1660 = vsel %vm1655, %v1614, %v1643
        %v1661 = vsel %vm1655, %v1619, %v1645
        %v1662 = vsel %vm1655, %v1624, %v1647
        %v1663 = vld [vmem:[#allocation2 + $0x1a8] sm:$0xff]
        %v1664 = vld [vmem:[#allocation2 + $0x1b0] sm:$0xff]
        %v1665 = vld [vmem:[#allocation2 + $0x1b8] sm:$0xff]
        %v1666 = vld [vmem:[#allocation2 + $0x1c0] sm:$0xff]
        %v1667 = vld [vmem:[#allocation2 + $0x1c8] sm:$0xff]
        %v1668 = vld [vmem:[#allocation2 + $0x1d0] sm:$0xff]
        %v1669 = vld [vmem:[#allocation2 + $0x1d8] sm:$0x1]
        %v1670 = vlaneseq
        %v1671 = vshrl.u32 %v1670, 7
        %v1672 = vsub.s32 0, %v1671
        %v1673 = vrot.slane %v1669, %v1672
        %vm1674 = vcmask 392192
        %v1676 = vsel %vm1674, %v1656, 0
        %v1679 = vsel %vm1674, %v1657, 0
        %v1682 = vsel %vm1674, %v1658, 0
        %v1685 = vsel %vm1674, %v1659, 0
        %v1688 = vsel %vm1674, %v1660, 0
        %v1691 = vsel %vm1674, %v1661, 0
        %v1694 = vsel %vm1674, %v1662, 0
        %1696 = vmatprep.subr.mxu0 0.0
        %1697 = vmatpush1.msra.mxu0 %v1663
        %1698 = vmatprep.subr.mxu0 0.0
        %1699 = vmatpush1.msra.mxu0 %v1664
        %1700 = vmatprep.subr.mxu0 0.0
        %1701 = vmatpush1.msra.mxu0 %v1665
        %1702 = vmatprep.subr.mxu0 0.0
        %1703 = vmatpush1.msra.mxu0 %v1666
        %1704 = vmatprep.subr.mxu0 0.0
        %1705 = vmatpush1.msra.mxu0 %v1667
        %1706 = vmatprep.subr.mxu0 0.0
        %1707 = vmatpush1.msra.mxu0 %v1668
        %1708 = vmatprep.subr.mxu0 0.0
        %1709 = vmatpush1.msra.mxu0 0.0
        %1710 = vmatprep.subr.mxu0 0.0
        %1711 = vmatpush1.msra.mxu0 0.0
        %1712 = vmatprep.subr.mxu0 0.0
        %1713 = vmatpush1.msra.mxu0 0.0
        %1714 = vmatprep.subr.mxu0 0.0
        %1715 = vmatpush1.msra.mxu0 0.0
        %1716 = vmatprep.subr.mxu0 0.0
        %1717 = vmatpush1.msra.mxu0 0.0
        %1718 = vmatprep.subr.mxu0 0.0
        %1719 = vmatpush1.msra.mxu0 0.0
        %1720 = vmatprep.subr.mxu0 0.0
        %1721 = vmatpush1.msra.mxu0 0.0
        %1722 = vmatprep.subr.mxu0 0.0
        %1723 = vmatpush1.msra.mxu0 0.0
        %1724 = vmatprep.subr.mxu0 0.0
        %1725 = vmatpush1.msra.mxu0 0.0
        %1726 = vmatprep.subr.mxu0 0.0
        %1727 = vmatpush1.msra.mxu0 0.0
        %1728 = vmatprep.subr.mxu0 0.0
        %1729 = vmatpush1.msra.mxu0 0.0
        %1730 = vmatprep.subr.mxu0 0.0
        %1731 = vmatpush1.msra.mxu0 0.0
        %1732 = vmatprep.subr.mxu0 0.0
        %1733 = vmatpush1.msra.mxu0 0.0
        %1734 = vmatprep.subr.mxu0 0.0
        %1735 = vmatpush1.msra.mxu0 0.0
        %1736 = vmatprep.subr.mxu0 0.0
        %1737 = vmatpush1.msra.mxu0 0.0
        %1738 = vmatprep.subr.mxu0 0.0
        %1739 = vmatpush1.msra.mxu0 0.0
        %1740 = vmatprep.subr.mxu0 0.0
        %1741 = vmatpush1.msra.mxu0 0.0
        %1742 = vmatprep.subr.mxu0 0.0
        %1743 = vmatpush1.msra.mxu0 0.0
        %1744 = vmatprep.subr.mxu0 0.0
        %1745 = vmatpush1.msra.mxu0 0.0
        %1746 = vmatprep.subr.mxu0 0.0
        %1747 = vmatpush1.msra.mxu0 0.0
        %1748 = vmatprep.subr.mxu0 0.0
        %1749 = vmatpush1.msra.mxu0 0.0
        %1750 = vmatprep.subr.mxu0 0.0
        %1751 = vmatpush1.msra.mxu0 0.0
        %1752 = vmatprep.subr.mxu0 0.0
        %1753 = vmatpush1.msra.mxu0 0.0
        %1754 = vmatprep.subr.mxu0 0.0
        %1755 = vmatpush1.msra.mxu0 0.0
        %1756 = vmatprep.subr.mxu0 0.0
        %1757 = vmatpush1.msra.mxu0 0.0
        %1758 = vmatprep.subr.mxu0 0.0
        %1759 = vmatpush1.msra.mxu0 0.0
        %1760 = vmatprep.mubr.f32.mxu0 0.0
        %1761 = vmatmul.mubr.f32.gmra.mrb[0].mxu0 %v1676
        %v1762 = vpop.f32.mrb[0].mxu0
        %v1763 = vadd.f32 %v1673, %v1762
        %v1764 = vpop.f32.mrb[0].mxu0
        %1765 = vmatprep.mubr.f32.mxu0 0.0
        %1766 = vmatmul.mubr.f32.gmra.mrb[0].mxu0 %v1679
        %v1767 = vpop.f32.mrb[0].mxu0
        %v1768 = vadd.f32 %v1673, %v1767
        %v1769 = vpop.f32.mrb[0].mxu0
        %1770 = vmatprep.mubr.f32.mxu0 0.0
        %1771 = vmatmul.mubr.f32.gmra.mrb[0].mxu0 %v1682
        %v1772 = vpop.f32.mrb[0].mxu0
        %v1773 = vadd.f32 %v1673, %v1772
        %v1774 = vpop.f32.mrb[0].mxu0
        %1775 = vmatprep.mubr.f32.mxu0 0.0
        %1776 = vmatmul.mubr.f32.gmra.mrb[0].mxu0 %v1685
        %v1777 = vpop.f32.mrb[0].mxu0
        %v1778 = vadd.f32 %v1673, %v1777
        %v1779 = vpop.f32.mrb[0].mxu0
        %1780 = vmatprep.mubr.f32.mxu0 0.0
        %1781 = vmatmul.mubr.f32.gmra.mrb[0].mxu0 %v1688
        %v1782 = vpop.f32.mrb[0].mxu0
        %v1783 = vadd.f32 %v1673, %v1782
        %v1784 = vpop.f32.mrb[0].mxu0
        %1785 = vmatprep.mubr.f32.mxu0 0.0
        %1786 = vmatmul.mubr.f32.gmra.mrb[0].mxu0 %v1691
        %v1787 = vpop.f32.mrb[0].mxu0
        %v1788 = vadd.f32 %v1673, %v1787
        %v1789 = vpop.f32.mrb[0].mxu0
        %1790 = vmatprep.mubr.f32.mxu0 0.0
        %1791 = vmatmul.mubr.f32.gmra.mrb[0].mxu0 %v1694
        %v1792 = vpop.f32.mrb[0].mxu0
        %v1793 = vadd.f32 %v1673, %v1792
        %v1794 = vpop.f32.mrb[0].mxu0
        %1795 = vdwg.mxu0
        %v1796 = vmax.f32 %v1763, 0.0
        %v1797 = vmax.f32 %v1768, 0.0
        %v1798 = vmax.f32 %v1773, 0.0
        %v1799 = vmax.f32 %v1778, 0.0
        %v1800 = vmax.f32 %v1783, 0.0
        %v1801 = vmax.f32 %v1788, 0.0
        %v1802 = vmax.f32 %v1793, 0.0
        %v1803 = vld [vmem:[#allocation2 + $0x1e0] sm:$0xff]
        %v1804 = vld [vmem:[#allocation2 + $0x1e8] sm:$0x1]
        %v1805 = vlaneseq
        %v1806 = vshrl.u32 %v1805, 7
        %v1807 = vsub.s32 0, %v1806
        %v1808 = vrot.slane %v1804, %v1807
        %v1810 = vsel %vm141, %v1796, 0
        %v1813 = vsel %vm141, %v1797, 0
        %v1816 = vsel %vm141, %v1798, 0
        %v1819 = vsel %vm141, %v1799, 0
        %v1822 = vsel %vm141, %v1800, 0
        %v1825 = vsel %vm141, %v1801, 0
        %v1828 = vsel %vm141, %v1802, 0
        %1830 = vmatprep.subr.mxu0 0.0
        %1831 = vmatpush1.msra.mxu0 %v1803
        %1832 = vmatprep.subr.mxu0 0.0
        %1833 = vmatpush1.msra.mxu0 0.0
        %1834 = vmatprep.subr.mxu0 0.0
        %1835 = vmatpush1.msra.mxu0 0.0
        %1836 = vmatprep.subr.mxu0 0.0
        %1837 = vmatpush1.msra.mxu0 0.0
        %1838 = vmatprep.subr.mxu0 0.0
        %1839 = vmatpush1.msra.mxu0 0.0
        %1840 = vmatprep.subr.mxu0 0.0
        %1841 = vmatpush1.msra.mxu0 0.0
        %1842 = vmatprep.subr.mxu0 0.0
        %1843 = vmatpush1.msra.mxu0 0.0
        %1844 = vmatprep.subr.mxu0 0.0
        %1845 = vmatpush1.msra.mxu0 0.0
        %1846 = vmatprep.subr.mxu0 0.0
        %1847 = vmatpush1.msra.mxu0 0.0
        %1848 = vmatprep.subr.mxu0 0.0
        %1849 = vmatpush1.msra.mxu0 0.0
        %1850 = vmatprep.subr.mxu0 0.0
        %1851 = vmatpush1.msra.mxu0 0.0
        %1852 = vmatprep.subr.mxu0 0.0
        %1853 = vmatpush1.msra.mxu0 0.0
        %1854 = vmatprep.subr.mxu0 0.0
        %1855 = vmatpush1.msra.mxu0 0.0
        %1856 = vmatprep.subr.mxu0 0.0
        %1857 = vmatpush1.msra.mxu0 0.0
        %1858 = vmatprep.subr.mxu0 0.0
        %1859 = vmatpush1.msra.mxu0 0.0
        %1860 = vmatprep.subr.mxu0 0.0
        %1861 = vmatpush1.msra.mxu0 0.0
        %1862 = vmatprep.subr.mxu0 0.0
        %1863 = vmatpush1.msra.mxu0 0.0
        %1864 = vmatprep.subr.mxu0 0.0
        %1865 = vmatpush1.msra.mxu0 0.0
        %1866 = vmatprep.subr.mxu0 0.0
        %1867 = vmatpush1.msra.mxu0 0.0
        %1868 = vmatprep.subr.mxu0 0.0
        %1869 = vmatpush1.msra.mxu0 0.0
        %1870 = vmatprep.subr.mxu0 0.0
        %1871 = vmatpush1.msra.mxu0 0.0
        %1872 = vmatprep.subr.mxu0 0.0
        %1873 = vmatpush1.msra.mxu0 0.0
        %1874 = vmatprep.subr.mxu0 0.0
        %1875 = vmatpush1.msra.mxu0 0.0
        %1876 = vmatprep.subr.mxu0 0.0
        %1877 = vmatpush1.msra.mxu0 0.0
        %1878 = vmatprep.subr.mxu0 0.0
        %1879 = vmatpush1.msra.mxu0 0.0
        %1880 = vmatprep.subr.mxu0 0.0
        %1881 = vmatpush1.msra.mxu0 0.0
        %1882 = vmatprep.subr.mxu0 0.0
        %1883 = vmatpush1.msra.mxu0 0.0
        %1884 = vmatprep.subr.mxu0 0.0
        %1885 = vmatpush1.msra.mxu0 0.0
        %1886 = vmatprep.subr.mxu0 0.0
        %1887 = vmatpush1.msra.mxu0 0.0
        %1888 = vmatprep.subr.mxu0 0.0
        %1889 = vmatpush1.msra.mxu0 0.0
        %1890 = vmatprep.subr.mxu0 0.0
        %1891 = vmatpush1.msra.mxu0 0.0
        %1892 = vmatprep.subr.mxu0 0.0
        %1893 = vmatpush1.msra.mxu0 0.0
        %1894 = vmatprep.mubr.f32.mxu0 0.0
        %1895 = vmatmul.mubr.f32.gmra.mrb[0].mxu0 %v1810
        %v1896 = vpop.f32.mrb[0].mxu0
        %v1897 = vadd.f32 %v1808, %v1896
        %v1898 = vpop.f32.mrb[0].mxu0
        %1899 = vmatprep.mubr.f32.mxu0 0.0
        %1900 = vmatmul.mubr.f32.gmra.mrb[0].mxu0 %v1813
        %v1901 = vpop.f32.mrb[0].mxu0
        %v1902 = vadd.f32 %v1808, %v1901
        %v1903 = vpop.f32.mrb[0].mxu0
        %1904 = vmatprep.mubr.f32.mxu0 0.0
        %1905 = vmatmul.mubr.f32.gmra.mrb[0].mxu0 %v1816
        %v1906 = vpop.f32.mrb[0].mxu0
        %v1907 = vadd.f32 %v1808, %v1906
        %v1908 = vpop.f32.mrb[0].mxu0
        %1909 = vmatprep.mubr.f32.mxu0 0.0
        %1910 = vmatmul.mubr.f32.gmra.mrb[0].mxu0 %v1819
        %v1911 = vpop.f32.mrb[0].mxu0
        %v1912 = vadd.f32 %v1808, %v1911
        %v1913 = vpop.f32.mrb[0].mxu0
        %1914 = vmatprep.mubr.f32.mxu0 0.0
        %1915 = vmatmul.mubr.f32.gmra.mrb[0].mxu0 %v1822
        %v1916 = vpop.f32.mrb[0].mxu0
        %v1917 = vadd.f32 %v1808, %v1916
        %v1918 = vpop.f32.mrb[0].mxu0
        %1919 = vmatprep.mubr.f32.mxu0 0.0
        %1920 = vmatmul.mubr.f32.gmra.mrb[0].mxu0 %v1825
        %v1921 = vpop.f32.mrb[0].mxu0
        %v1922 = vadd.f32 %v1808, %v1921
        %v1923 = vpop.f32.mrb[0].mxu0
        %1924 = vmatprep.mubr.f32.mxu0 0.0
        %1925 = vmatmul.mubr.f32.gmra.mrb[0].mxu0 %v1828
        %v1926 = vpop.f32.mrb[0].mxu0
        %v1927 = vadd.f32 %v1808, %v1926
        %v1928 = vpop.f32.mrb[0].mxu0
        %1929 = vdwg.mxu0
        %v1930 = vld [vmem:[#allocation2 + $0x180] sm:$0xff]
        %v1931 = vld [vmem:[#allocation2 + $0x188] sm:$0xff]
        %v1932 = vld [vmem:[#allocation2 + $0x190] sm:$0xff]
        %v1933 = vld [vmem:[#allocation2 + $0x198] sm:$0xff]
        %v1934 = vld [vmem:[#allocation2 + $0x1a0] sm:$0x1]
        %v1935 = vlaneseq
        %v1936 = vshrl.u32 %v1935, 7
        %v1937 = vsub.s32 0, %v1936
        %v1938 = vrot.slane %v1934, %v1937
        %v1939 = vsel %vm220, %v1175, 0
        %v1941 = vsel %vm220, %v1180, 0
        %v1943 = vsel %vm220, %v1185, 0
        %v1945 = vsel %vm220, %v1190, 0
        %v1947 = vsel %vm220, %v1195, 0
        %v1949 = vsel %vm220, %v1200, 0
        %v1951 = vsel %vm220, %v1205, 0
        %1953 = vmatprep.subr.mxu0 0.0
        %1954 = vmatpush1.msra.mxu0 %v1930
        %1955 = vmatprep.subr.mxu0 0.0
        %1956 = vmatpush1.msra.mxu0 %v1931
        %1957 = vmatprep.subr.mxu0 0.0
        %1958 = vmatpush1.msra.mxu0 %v1932
        %1959 = vmatprep.subr.mxu0 0.0
        %1960 = vmatpush1.msra.mxu0 %v1933
        %1961 = vmatprep.subr.mxu0 0.0
        %1962 = vmatpush1.msra.mxu0 0.0
        %1963 = vmatprep.subr.mxu0 0.0
        %1964 = vmatpush1.msra.mxu0 0.0
        %1965 = vmatprep.subr.mxu0 0.0
        %1966 = vmatpush1.msra.mxu0 0.0
        %1967 = vmatprep.subr.mxu0 0.0
        %1968 = vmatpush1.msra.mxu0 0.0
        %1969 = vmatprep.subr.mxu0 0.0
        %1970 = vmatpush1.msra.mxu0 0.0
        %1971 = vmatprep.subr.mxu0 0.0
        %1972 = vmatpush1.msra.mxu0 0.0
        %1973 = vmatprep.subr.mxu0 0.0
        %1974 = vmatpush1.msra.mxu0 0.0
        %1975 = vmatprep.subr.mxu0 0.0
        %1976 = vmatpush1.msra.mxu0 0.0
        %1977 = vmatprep.subr.mxu0 0.0
        %1978 = vmatpush1.msra.mxu0 0.0
        %1979 = vmatprep.subr.mxu0 0.0
        %1980 = vmatpush1.msra.mxu0 0.0
        %1981 = vmatprep.subr.mxu0 0.0
        %1982 = vmatpush1.msra.mxu0 0.0
        %1983 = vmatprep.subr.mxu0 0.0
        %1984 = vmatpush1.msra.mxu0 0.0
        %1985 = vmatprep.subr.mxu0 0.0
        %1986 = vmatpush1.msra.mxu0 0.0
        %1987 = vmatprep.subr.mxu0 0.0
        %1988 = vmatpush1.msra.mxu0 0.0
        %1989 = vmatprep.subr.mxu0 0.0
        %1990 = vmatpush1.msra.mxu0 0.0
        %1991 = vmatprep.subr.mxu0 0.0
        %1992 = vmatpush1.msra.mxu0 0.0
        %1993 = vmatprep.subr.mxu0 0.0
        %1994 = vmatpush1.msra.mxu0 0.0
        %1995 = vmatprep.subr.mxu0 0.0
        %1996 = vmatpush1.msra.mxu0 0.0
        %1997 = vmatprep.subr.mxu0 0.0
        %1998 = vmatpush1.msra.mxu0 0.0
        %1999 = vmatprep.subr.mxu0 0.0
        %2000 = vmatpush1.msra.mxu0 0.0
        %2001 = vmatprep.subr.mxu0 0.0
        %2002 = vmatpush1.msra.mxu0 0.0
        %2003 = vmatprep.subr.mxu0 0.0
        %2004 = vmatpush1.msra.mxu0 0.0
        %2005 = vmatprep.subr.mxu0 0.0
        %2006 = vmatpush1.msra.mxu0 0.0
        %2007 = vmatprep.subr.mxu0 0.0
        %2008 = vmatpush1.msra.mxu0 0.0
        %2009 = vmatprep.subr.mxu0 0.0
        %2010 = vmatpush1.msra.mxu0 0.0
        %2011 = vmatprep.subr.mxu0 0.0
        %2012 = vmatpush1.msra.mxu0 0.0
        %2013 = vmatprep.subr.mxu0 0.0
        %2014 = vmatpush1.msra.mxu0 0.0
        %2015 = vmatprep.subr.mxu0 0.0
        %2016 = vmatpush1.msra.mxu0 0.0
        %2017 = vmatprep.mubr.f32.mxu0 0.0
        %2018 = vmatmul.mubr.f32.gmra.mrb[0].mxu0 %v1939
        %v2019 = vpop.f32.mrb[0].mxu0
        %v2020 = vadd.f32 %v1938, %v2019
        %v2021 = vpop.f32.mrb[0].mxu0
        %2022 = vmatprep.mubr.f32.mxu0 0.0
        %2023 = vmatmul.mubr.f32.gmra.mrb[0].mxu0 %v1941
        %v2024 = vpop.f32.mrb[0].mxu0
        %v2025 = vadd.f32 %v1938, %v2024
        %v2026 = vpop.f32.mrb[0].mxu0
        %2027 = vmatprep.mubr.f32.mxu0 0.0
        %2028 = vmatmul.mubr.f32.gmra.mrb[0].mxu0 %v1943
        %v2029 = vpop.f32.mrb[0].mxu0
        %v2030 = vadd.f32 %v1938, %v2029
        %v2031 = vpop.f32.mrb[0].mxu0
        %2032 = vmatprep.mubr.f32.mxu0 0.0
        %2033 = vmatmul.mubr.f32.gmra.mrb[0].mxu0 %v1945
        %v2034 = vpop.f32.mrb[0].mxu0
        %v2035 = vadd.f32 %v1938, %v2034
        %v2036 = vpop.f32.mrb[0].mxu0
        %2037 = vmatprep.mubr.f32.mxu0 0.0
        %2038 = vmatmul.mubr.f32.gmra.mrb[0].mxu0 %v1947
        %v2039 = vpop.f32.mrb[0].mxu0
        %v2040 = vadd.f32 %v1938, %v2039
        %v2041 = vpop.f32.mrb[0].mxu0
        %2042 = vmatprep.mubr.f32.mxu0 0.0
        %2043 = vmatmul.mubr.f32.gmra.mrb[0].mxu0 %v1949
        %v2044 = vpop.f32.mrb[0].mxu0
        %v2045 = vadd.f32 %v1938, %v2044
        %v2046 = vpop.f32.mrb[0].mxu0
        %2047 = vmatprep.mubr.f32.mxu0 0.0
        %2048 = vmatmul.mubr.f32.gmra.mrb[0].mxu0 %v1951
        %v2049 = vpop.f32.mrb[0].mxu0
        %v2050 = vadd.f32 %v1938, %v2049
        %v2051 = vpop.f32.mrb[0].mxu0
        %2052 = vdwg.mxu0
        %2054 = vset.pattern.permute.xlu0 0
        %2055 = vperm.xlu0 %2054, %v1897
        %v2056 = vpop.permute.xlu0 %2055
        %2059 = vset.pattern.permute.xlu0 0
        %2060 = vperm.xlu0 %2059, %v1902
        %v2061 = vpop.permute.xlu0 %2060
        %2064 = vset.pattern.permute.xlu0 0
        %2065 = vperm.xlu0 %2064, %v1907
        %v2066 = vpop.permute.xlu0 %2065
        %2069 = vset.pattern.permute.xlu0 0
        %2070 = vperm.xlu0 %2069, %v1912
        %v2071 = vpop.permute.xlu0 %2070
        %2074 = vset.pattern.permute.xlu0 0
        %2075 = vperm.xlu0 %2074, %v1917
        %v2076 = vpop.permute.xlu0 %2075
        %2079 = vset.pattern.permute.xlu0 0
        %2080 = vperm.xlu0 %2079, %v1922
        %v2081 = vpop.permute.xlu0 %2080
        %2084 = vset.pattern.permute.xlu0 0
        %2085 = vperm.xlu0 %2084, %v1927
        %v2086 = vpop.permute.xlu0 %2085
        %v2088 = vmul.f32 %v2056, %v2020
        %v2089 = vmul.f32 %v2061, %v2025
        %v2090 = vmul.f32 %v2066, %v2030
        %v2091 = vmul.f32 %v2071, %v2035
        %v2092 = vmul.f32 %v2076, %v2040
        %v2093 = vmul.f32 %v2081, %v2045
        %v2094 = vmul.f32 %v2086, %v2050
        %vm2095 = vcmask 457728
        %v2097 = vsel %vm2095, %v1082, 0
        %2099 = vmatprep.subr.mxu0 0.0
        %2100 = vmatpush1.msra.mxu0 %v2088
        %2101 = vmatprep.subr.mxu0 0.0
        %2102 = vmatpush1.msra.mxu0 %v2089
        %2103 = vmatprep.subr.mxu0 0.0
        %2104 = vmatpush1.msra.mxu0 %v2090
        %2105 = vmatprep.subr.mxu0 0.0
        %2106 = vmatpush1.msra.mxu0 %v2091
        %2107 = vmatprep.subr.mxu0 0.0
        %2108 = vmatpush1.msra.mxu0 %v2092
        %2109 = vmatprep.subr.mxu0 0.0
        %2110 = vmatpush1.msra.mxu0 %v2093
        %2111 = vmatprep.subr.mxu0 0.0
        %2112 = vmatpush1.msra.mxu0 %v2094
        %2113 = vmatprep.subr.mxu0 0.0
        %2114 = vmatpush1.msra.mxu0 0.0
        %2115 = vmatprep.subr.mxu0 0.0
        %2116 = vmatpush1.msra.mxu0 0.0
        %2117 = vmatprep.subr.mxu0 0.0
        %2118 = vmatpush1.msra.mxu0 0.0
        %2119 = vmatprep.subr.mxu0 0.0
        %2120 = vmatpush1.msra.mxu0 0.0
        %2121 = vmatprep.subr.mxu0 0.0
        %2122 = vmatpush1.msra.mxu0 0.0
        %2123 = vmatprep.subr.mxu0 0.0
        %2124 = vmatpush1.msra.mxu0 0.0
        %2125 = vmatprep.subr.mxu0 0.0
        %2126 = vmatpush1.msra.mxu0 0.0
        %2127 = vmatprep.subr.mxu0 0.0
        %2128 = vmatpush1.msra.mxu0 0.0
        %2129 = vmatprep.subr.mxu0 0.0
        %2130 = vmatpush1.msra.mxu0 0.0
        %2131 = vmatprep.subr.mxu0 0.0
        %2132 = vmatpush1.msra.mxu0 0.0
        %2133 = vmatprep.subr.mxu0 0.0
        %2134 = vmatpush1.msra.mxu0 0.0
        %2135 = vmatprep.subr.mxu0 0.0
        %2136 = vmatpush1.msra.mxu0 0.0
        %2137 = vmatprep.subr.mxu0 0.0
        %2138 = vmatpush1.msra.mxu0 0.0
        %2139 = vmatprep.subr.mxu0 0.0
        %2140 = vmatpush1.msra.mxu0 0.0
        %2141 = vmatprep.subr.mxu0 0.0
        %2142 = vmatpush1.msra.mxu0 0.0
        %2143 = vmatprep.subr.mxu0 0.0
        %2144 = vmatpush1.msra.mxu0 0.0
        %2145 = vmatprep.subr.mxu0 0.0
        %2146 = vmatpush1.msra.mxu0 0.0
        %2147 = vmatprep.subr.mxu0 0.0
        %2148 = vmatpush1.msra.mxu0 0.0
        %2149 = vmatprep.subr.mxu0 0.0
        %2150 = vmatpush1.msra.mxu0 0.0
        %2151 = vmatprep.subr.mxu0 0.0
        %2152 = vmatpush1.msra.mxu0 0.0
        %2153 = vmatprep.subr.mxu0 0.0
        %2154 = vmatpush1.msra.mxu0 0.0
        %2155 = vmatprep.subr.mxu0 0.0
        %2156 = vmatpush1.msra.mxu0 0.0
        %2157 = vmatprep.subr.mxu0 0.0
        %2158 = vmatpush1.msra.mxu0 0.0
        %2159 = vmatprep.subr.mxu0 0.0
        %2160 = vmatpush1.msra.mxu0 0.0
        %2161 = vmatprep.subr.mxu0 0.0
        %2162 = vmatpush1.msra.mxu0 0.0
        %2163 = vmatprep.mubr.f32.mxu0 0.0
        %2164 = vmatmul.mubr.f32.gmra.mrb[0].mxu0 %v2097
        %v2165 = vpop.f32.mrb[0].mxu0
        %v2166 = vadd.f32 0.0, %v2165
        %v2167 = vpop.f32.mrb[0].mxu0
        %2168 = vdwg.mxu0
        %v2169 = vmax.f32 %v2166, 0.0
        %2170 = vmatprep.subr.mxu0 0.0
        %2171 = vmatpush1.msra.mxu0 %v2169
        %2172 = vmatprep.subr.mxu0 0.0
        %2173 = vmatpush1.msra.mxu0 0.0
        %2174 = vmatprep.subr.mxu0 0.0
        %2175 = vmatpush1.msra.mxu0 0.0
        %2176 = vmatprep.subr.mxu0 0.0
        %2177 = vmatpush1.msra.mxu0 0.0
        %2178 = vmatprep.subr.mxu0 0.0
        %2179 = vmatpush1.msra.mxu0 0.0
        %2180 = vmatprep.subr.mxu0 0.0
        %2181 = vmatpush1.msra.mxu0 0.0
        %2182 = vmatprep.subr.mxu0 0.0
        %2183 = vmatpush1.msra.mxu0 0.0
        %2184 = vmatprep.subr.mxu0 0.0
        %2185 = vmatpush1.msra.mxu0 0.0
        %2186 = vmatprep.subr.mxu0 0.0
        %2187 = vmatpush1.msra.mxu0 0.0
        %2188 = vmatprep.subr.mxu0 0.0
        %2189 = vmatpush1.msra.mxu0 0.0
        %2190 = vmatprep.subr.mxu0 0.0
        %2191 = vmatpush1.msra.mxu0 0.0
        %2192 = vmatprep.subr.mxu0 0.0
        %2193 = vmatpush1.msra.mxu0 0.0
        %2194 = vmatprep.subr.mxu0 0.0
        %2195 = vmatpush1.msra.mxu0 0.0
        %2196 = vmatprep.subr.mxu0 0.0
        %2197 = vmatpush1.msra.mxu0 0.0
        %2198 = vmatprep.subr.mxu0 0.0
        %2199 = vmatpush1.msra.mxu0 0.0
        %2200 = vmatprep.subr.mxu0 0.0
        %2201 = vmatpush1.msra.mxu0 0.0
        %2202 = vmatprep.subr.mxu0 0.0
        %2203 = vmatpush1.msra.mxu0 0.0
        %2204 = vmatprep.subr.mxu0 0.0
        %2205 = vmatpush1.msra.mxu0 0.0
        %2206 = vmatprep.subr.mxu0 0.0
        %2207 = vmatpush1.msra.mxu0 0.0
        %2208 = vmatprep.subr.mxu0 0.0
        %2209 = vmatpush1.msra.mxu0 0.0
        %2210 = vmatprep.subr.mxu0 0.0
        %2211 = vmatpush1.msra.mxu0 0.0
        %2212 = vmatprep.subr.mxu0 0.0
        %2213 = vmatpush1.msra.mxu0 0.0
        %2214 = vmatprep.subr.mxu0 0.0
        %2215 = vmatpush1.msra.mxu0 0.0
        %2216 = vmatprep.subr.mxu0 0.0
        %2217 = vmatpush1.msra.mxu0 0.0
        %2218 = vmatprep.subr.mxu0 0.0
        %2219 = vmatpush1.msra.mxu0 0.0
        %2220 = vmatprep.subr.mxu0 0.0
        %2221 = vmatpush1.msra.mxu0 0.0
        %2222 = vmatprep.subr.mxu0 0.0
        %2223 = vmatpush1.msra.mxu0 0.0
        %2224 = vmatprep.subr.mxu0 0.0
        %2225 = vmatpush1.msra.mxu0 0.0
        %2226 = vmatprep.subr.mxu0 0.0
        %2227 = vmatpush1.msra.mxu0 0.0
        %2228 = vmatprep.subr.mxu0 0.0
        %2229 = vmatpush1.msra.mxu0 0.0
        %2230 = vmatprep.subr.mxu0 0.0
        %2231 = vmatpush1.msra.mxu0 0.0
        %2232 = vmatprep.subr.mxu0 0.0
        %2233 = vmatpush1.msra.mxu0 0.0
        %2234 = vmatprep.mubr.f32.mxu0 0.0
        %2235 = vmatmul.mubr.f32.gmra.mrb[0].mxu0 %v1088
        %v2236 = vpop.f32.mrb[0].mxu0
        %v2237 = vadd.f32 0.0, %v2236
        %v2238 = vpop.f32.mrb[0].mxu0
        %2239 = vmatprep.mubr.f32.mxu0 0.0
        %2240 = vmatmul.mubr.f32.gmra.mrb[0].mxu0 %v1091
        %v2241 = vpop.f32.mrb[0].mxu0
        %v2242 = vadd.f32 0.0, %v2241
        %v2243 = vpop.f32.mrb[0].mxu0
        %2244 = vmatprep.mubr.f32.mxu0 0.0
        %2245 = vmatmul.mubr.f32.gmra.mrb[0].mxu0 %v1094
        %v2246 = vpop.f32.mrb[0].mxu0
        %v2247 = vadd.f32 0.0, %v2246
        %v2248 = vpop.f32.mrb[0].mxu0
        %2249 = vmatprep.mubr.f32.mxu0 0.0
        %2250 = vmatmul.mubr.f32.gmra.mrb[0].mxu0 %v1097
        %v2251 = vpop.f32.mrb[0].mxu0
        %v2252 = vadd.f32 0.0, %v2251
        %v2253 = vpop.f32.mrb[0].mxu0
        %2254 = vmatprep.mubr.f32.mxu0 0.0
        %2255 = vmatmul.mubr.f32.gmra.mrb[0].mxu0 %v1100
        %v2256 = vpop.f32.mrb[0].mxu0
        %v2257 = vadd.f32 0.0, %v2256
        %v2258 = vpop.f32.mrb[0].mxu0
        %2259 = vmatprep.mubr.f32.mxu0 0.0
        %2260 = vmatmul.mubr.f32.gmra.mrb[0].mxu0 %v1103
        %v2261 = vpop.f32.mrb[0].mxu0
        %v2262 = vadd.f32 0.0, %v2261
        %v2263 = vpop.f32.mrb[0].mxu0
        %2264 = vmatprep.mubr.f32.mxu0 0.0
        %2265 = vmatmul.mubr.f32.gmra.mrb[0].mxu0 %v1106
        %v2266 = vpop.f32.mrb[0].mxu0
        %v2267 = vadd.f32 0.0, %v2266
        %v2268 = vpop.f32.mrb[0].mxu0
        %2269 = vdwg.mxu0
        %2277 = vrot.lane.b32.xlu0 %v2237, 16
        %v2278 = vpop.permute.xlu0 %2277
        %2279 = vrot.lane.b32.xlu0 %v2242, 16
        %v2280 = vpop.permute.xlu0 %2279
        %2281 = vrot.lane.b32.xlu0 %v2247, 16
        %v2282 = vpop.permute.xlu0 %2281
        %2283 = vrot.lane.b32.xlu0 %v2252, 16
        %v2284 = vpop.permute.xlu0 %2283
        %2285 = vrot.lane.b32.xlu0 %v2257, 16
        %v2286 = vpop.permute.xlu0 %2285
        %2287 = vrot.lane.b32.xlu0 %v2262, 16
        %v2288 = vpop.permute.xlu0 %2287
        %2289 = vrot.lane.b32.xlu0 %v2267, 16
        %v2290 = vpop.permute.xlu0 %2289
        %v2298 = vsel %vm1655, %v1594, %v2278
        %v2299 = vsel %vm1655, %v1599, %v2280
        %v2300 = vsel %vm1655, %v1604, %v2282
        %v2301 = vsel %vm1655, %v1609, %v2284
        %v2302 = vsel %vm1655, %v1614, %v2286
        %v2303 = vsel %vm1655, %v1619, %v2288
        %v2304 = vsel %vm1655, %v1624, %v2290
        %v2305 = vld [vmem:[#allocation2 + $0x208] sm:$0xff]
        %v2306 = vld [vmem:[#allocation2 + $0x210] sm:$0xff]
        %v2307 = vld [vmem:[#allocation2 + $0x218] sm:$0xff]
        %v2308 = vld [vmem:[#allocation2 + $0x220] sm:$0xff]
        %v2309 = vld [vmem:[#allocation2 + $0x228] sm:$0x1]
        %v2310 = vlaneseq
        %v2311 = vshrl.u32 %v2310, 7
        %v2312 = vsub.s32 0, %v2311
        %v2313 = vrot.slane %v2309, %v2312
        %v2315 = vsel %vm220, %v2298, 0
        %v2318 = vsel %vm220, %v2299, 0
        %v2321 = vsel %vm220, %v2300, 0
        %v2324 = vsel %vm220, %v2301, 0
        %v2327 = vsel %vm220, %v2302, 0
        %v2330 = vsel %vm220, %v2303, 0
        %v2333 = vsel %vm220, %v2304, 0
        %2335 = vmatprep.subr.mxu0 0.0
        %2336 = vmatpush1.msra.mxu0 %v2305
        %2337 = vmatprep.subr.mxu0 0.0
        %2338 = vmatpush1.msra.mxu0 %v2306
        %2339 = vmatprep.subr.mxu0 0.0
        %2340 = vmatpush1.msra.mxu0 %v2307
        %2341 = vmatprep.subr.mxu0 0.0
        %2342 = vmatpush1.msra.mxu0 %v2308
        %2343 = vmatprep.subr.mxu0 0.0
        %2344 = vmatpush1.msra.mxu0 0.0
        %2345 = vmatprep.subr.mxu0 0.0
        %2346 = vmatpush1.msra.mxu0 0.0
        %2347 = vmatprep.subr.mxu0 0.0
        %2348 = vmatpush1.msra.mxu0 0.0
        %2349 = vmatprep.subr.mxu0 0.0
        %2350 = vmatpush1.msra.mxu0 0.0
        %2351 = vmatprep.subr.mxu0 0.0
        %2352 = vmatpush1.msra.mxu0 0.0
        %2353 = vmatprep.subr.mxu0 0.0
        %2354 = vmatpush1.msra.mxu0 0.0
        %2355 = vmatprep.subr.mxu0 0.0
        %2356 = vmatpush1.msra.mxu0 0.0
        %2357 = vmatprep.subr.mxu0 0.0
        %2358 = vmatpush1.msra.mxu0 0.0
        %2359 = vmatprep.subr.mxu0 0.0
        %2360 = vmatpush1.msra.mxu0 0.0
        %2361 = vmatprep.subr.mxu0 0.0
        %2362 = vmatpush1.msra.mxu0 0.0
        %2363 = vmatprep.subr.mxu0 0.0
        %2364 = vmatpush1.msra.mxu0 0.0
        %2365 = vmatprep.subr.mxu0 0.0
        %2366 = vmatpush1.msra.mxu0 0.0
        %2367 = vmatprep.subr.mxu0 0.0
        %2368 = vmatpush1.msra.mxu0 0.0
        %2369 = vmatprep.subr.mxu0 0.0
        %2370 = vmatpush1.msra.mxu0 0.0
        %2371 = vmatprep.subr.mxu0 0.0
        %2372 = vmatpush1.msra.mxu0 0.0
        %2373 = vmatprep.subr.mxu0 0.0
        %2374 = vmatpush1.msra.mxu0 0.0
        %2375 = vmatprep.subr.mxu0 0.0
        %2376 = vmatpush1.msra.mxu0 0.0
        %2377 = vmatprep.subr.mxu0 0.0
        %2378 = vmatpush1.msra.mxu0 0.0
        %2379 = vmatprep.subr.mxu0 0.0
        %2380 = vmatpush1.msra.mxu0 0.0
        %2381 = vmatprep.subr.mxu0 0.0
        %2382 = vmatpush1.msra.mxu0 0.0
        %2383 = vmatprep.subr.mxu0 0.0
        %2384 = vmatpush1.msra.mxu0 0.0
        %2385 = vmatprep.subr.mxu0 0.0
        %2386 = vmatpush1.msra.mxu0 0.0
        %2387 = vmatprep.subr.mxu0 0.0
        %2388 = vmatpush1.msra.mxu0 0.0
        %2389 = vmatprep.subr.mxu0 0.0
        %2390 = vmatpush1.msra.mxu0 0.0
        %2391 = vmatprep.subr.mxu0 0.0
        %2392 = vmatpush1.msra.mxu0 0.0
        %2393 = vmatprep.subr.mxu0 0.0
        %2394 = vmatpush1.msra.mxu0 0.0
        %2395 = vmatprep.subr.mxu0 0.0
        %2396 = vmatpush1.msra.mxu0 0.0
        %2397 = vmatprep.subr.mxu0 0.0
        %2398 = vmatpush1.msra.mxu0 0.0
        %2399 = vmatprep.mubr.f32.mxu0 0.0
        %2400 = vmatmul.mubr.f32.gmra.mrb[0].mxu0 %v2315
        %v2401 = vpop.f32.mrb[0].mxu0
        %v2402 = vadd.f32 %v2313, %v2401
        %v2403 = vpop.f32.mrb[0].mxu0
        %2404 = vmatprep.mubr.f32.mxu0 0.0
        %2405 = vmatmul.mubr.f32.gmra.mrb[0].mxu0 %v2318
        %v2406 = vpop.f32.mrb[0].mxu0
        %v2407 = vadd.f32 %v2313, %v2406
        %v2408 = vpop.f32.mrb[0].mxu0
        %2409 = vmatprep.mubr.f32.mxu0 0.0
        %2410 = vmatmul.mubr.f32.gmra.mrb[0].mxu0 %v2321
        %v2411 = vpop.f32.mrb[0].mxu0
        %v2412 = vadd.f32 %v2313, %v2411
        %v2413 = vpop.f32.mrb[0].mxu0
        %2414 = vmatprep.mubr.f32.mxu0 0.0
        %2415 = vmatmul.mubr.f32.gmra.mrb[0].mxu0 %v2324
        %v2416 = vpop.f32.mrb[0].mxu0
        %v2417 = vadd.f32 %v2313, %v2416
        %v2418 = vpop.f32.mrb[0].mxu0
        %2419 = vmatprep.mubr.f32.mxu0 0.0
        %2420 = vmatmul.mubr.f32.gmra.mrb[0].mxu0 %v2327
        %v2421 = vpop.f32.mrb[0].mxu0
        %v2422 = vadd.f32 %v2313, %v2421
        %v2423 = vpop.f32.mrb[0].mxu0
        %2424 = vmatprep.mubr.f32.mxu0 0.0
        %2425 = vmatmul.mubr.f32.gmra.mrb[0].mxu0 %v2330
        %v2426 = vpop.f32.mrb[0].mxu0
        %v2427 = vadd.f32 %v2313, %v2426
        %v2428 = vpop.f32.mrb[0].mxu0
        %2429 = vmatprep.mubr.f32.mxu0 0.0
        %2430 = vmatmul.mubr.f32.gmra.mrb[0].mxu0 %v2333
        %v2431 = vpop.f32.mrb[0].mxu0
        %v2432 = vadd.f32 %v2313, %v2431
        %v2433 = vpop.f32.mrb[0].mxu0
        %2434 = vdwg.mxu0
        %v2435 = vmax.f32 %v2402, 0.0
        %v2436 = vmax.f32 %v2407, 0.0
        %v2437 = vmax.f32 %v2412, 0.0
        %v2438 = vmax.f32 %v2417, 0.0
        %v2439 = vmax.f32 %v2422, 0.0
        %v2440 = vmax.f32 %v2427, 0.0
        %v2441 = vmax.f32 %v2432, 0.0
        %v2442 = vld [vmem:[#allocation2 + $0x230] sm:$0xff]
        %v2443 = vld [vmem:[#allocation2 + $0x238] sm:$0x1]
        %v2444 = vlaneseq
        %v2445 = vshrl.u32 %v2444, 7
        %v2446 = vsub.s32 0, %v2445
        %v2447 = vrot.slane %v2443, %v2446
        %v2449 = vsel %vm141, %v2435, 0
        %v2452 = vsel %vm141, %v2436, 0
        %v2455 = vsel %vm141, %v2437, 0
        %v2458 = vsel %vm141, %v2438, 0
        %v2461 = vsel %vm141, %v2439, 0
        %v2464 = vsel %vm141, %v2440, 0
        %v2467 = vsel %vm141, %v2441, 0
        %2469 = vmatprep.subr.mxu0 0.0
        %2470 = vmatpush1.msra.mxu0 %v2442
        %2471 = vmatprep.subr.mxu0 0.0
        %2472 = vmatpush1.msra.mxu0 0.0
        %2473 = vmatprep.subr.mxu0 0.0
        %2474 = vmatpush1.msra.mxu0 0.0
        %2475 = vmatprep.subr.mxu0 0.0
        %2476 = vmatpush1.msra.mxu0 0.0
        %2477 = vmatprep.subr.mxu0 0.0
        %2478 = vmatpush1.msra.mxu0 0.0
        %2479 = vmatprep.subr.mxu0 0.0
        %2480 = vmatpush1.msra.mxu0 0.0
        %2481 = vmatprep.subr.mxu0 0.0
        %2482 = vmatpush1.msra.mxu0 0.0
        %2483 = vmatprep.subr.mxu0 0.0
        %2484 = vmatpush1.msra.mxu0 0.0
        %2485 = vmatprep.subr.mxu0 0.0
        %2486 = vmatpush1.msra.mxu0 0.0
        %2487 = vmatprep.subr.mxu0 0.0
        %2488 = vmatpush1.msra.mxu0 0.0
        %2489 = vmatprep.subr.mxu0 0.0
        %2490 = vmatpush1.msra.mxu0 0.0
        %2491 = vmatprep.subr.mxu0 0.0
        %2492 = vmatpush1.msra.mxu0 0.0
        %2493 = vmatprep.subr.mxu0 0.0
        %2494 = vmatpush1.msra.mxu0 0.0
        %2495 = vmatprep.subr.mxu0 0.0
        %2496 = vmatpush1.msra.mxu0 0.0
        %2497 = vmatprep.subr.mxu0 0.0
        %2498 = vmatpush1.msra.mxu0 0.0
        %2499 = vmatprep.subr.mxu0 0.0
        %2500 = vmatpush1.msra.mxu0 0.0
        %2501 = vmatprep.subr.mxu0 0.0
        %2502 = vmatpush1.msra.mxu0 0.0
        %2503 = vmatprep.subr.mxu0 0.0
        %2504 = vmatpush1.msra.mxu0 0.0
        %2505 = vmatprep.subr.mxu0 0.0
        %2506 = vmatpush1.msra.mxu0 0.0
        %2507 = vmatprep.subr.mxu0 0.0
        %2508 = vmatpush1.msra.mxu0 0.0
        %2509 = vmatprep.subr.mxu0 0.0
        %2510 = vmatpush1.msra.mxu0 0.0
        %2511 = vmatprep.subr.mxu0 0.0
        %2512 = vmatpush1.msra.mxu0 0.0
        %2513 = vmatprep.subr.mxu0 0.0
        %2514 = vmatpush1.msra.mxu0 0.0
        %2515 = vmatprep.subr.mxu0 0.0
        %2516 = vmatpush1.msra.mxu0 0.0
        %2517 = vmatprep.subr.mxu0 0.0
        %2518 = vmatpush1.msra.mxu0 0.0
        %2519 = vmatprep.subr.mxu0 0.0
        %2520 = vmatpush1.msra.mxu0 0.0
        %2521 = vmatprep.subr.mxu0 0.0
        %2522 = vmatpush1.msra.mxu0 0.0
        %2523 = vmatprep.subr.mxu0 0.0
        %2524 = vmatpush1.msra.mxu0 0.0
        %2525 = vmatprep.subr.mxu0 0.0
        %2526 = vmatpush1.msra.mxu0 0.0
        %2527 = vmatprep.subr.mxu0 0.0
        %2528 = vmatpush1.msra.mxu0 0.0
        %2529 = vmatprep.subr.mxu0 0.0
        %2530 = vmatpush1.msra.mxu0 0.0
        %2531 = vmatprep.subr.mxu0 0.0
        %2532 = vmatpush1.msra.mxu0 0.0
        %2533 = vmatprep.mubr.f32.mxu0 0.0
        %2534 = vmatmul.mubr.f32.gmra.mrb[0].mxu0 %v2449
        %v2535 = vpop.f32.mrb[0].mxu0
        %v2536 = vadd.f32 %v2447, %v2535
        %v2537 = vpop.f32.mrb[0].mxu0
        %2538 = vmatprep.mubr.f32.mxu0 0.0
        %2539 = vmatmul.mubr.f32.gmra.mrb[0].mxu0 %v2452
        %v2540 = vpop.f32.mrb[0].mxu0
        %v2541 = vadd.f32 %v2447, %v2540
        %v2542 = vpop.f32.mrb[0].mxu0
        %2543 = vmatprep.mubr.f32.mxu0 0.0
        %2544 = vmatmul.mubr.f32.gmra.mrb[0].mxu0 %v2455
        %v2545 = vpop.f32.mrb[0].mxu0
        %v2546 = vadd.f32 %v2447, %v2545
        %v2547 = vpop.f32.mrb[0].mxu0
        %2548 = vmatprep.mubr.f32.mxu0 0.0
        %2549 = vmatmul.mubr.f32.gmra.mrb[0].mxu0 %v2458
        %v2550 = vpop.f32.mrb[0].mxu0
        %v2551 = vadd.f32 %v2447, %v2550
        %v2552 = vpop.f32.mrb[0].mxu0
        %2553 = vmatprep.mubr.f32.mxu0 0.0
        %2554 = vmatmul.mubr.f32.gmra.mrb[0].mxu0 %v2461
        %v2555 = vpop.f32.mrb[0].mxu0
        %v2556 = vadd.f32 %v2447, %v2555
        %v2557 = vpop.f32.mrb[0].mxu0
        %2558 = vmatprep.mubr.f32.mxu0 0.0
        %2559 = vmatmul.mubr.f32.gmra.mrb[0].mxu0 %v2464
        %v2560 = vpop.f32.mrb[0].mxu0
        %v2561 = vadd.f32 %v2447, %v2560
        %v2562 = vpop.f32.mrb[0].mxu0
        %2563 = vmatprep.mubr.f32.mxu0 0.0
        %2564 = vmatmul.mubr.f32.gmra.mrb[0].mxu0 %v2467
        %v2565 = vpop.f32.mrb[0].mxu0
        %v2566 = vadd.f32 %v2447, %v2565
        %v2567 = vpop.f32.mrb[0].mxu0
        %2568 = vdwg.mxu0
        %v2569 = vld [vmem:[#allocation2 + $0x1f0] sm:$0xff]
        %v2570 = vld [vmem:[#allocation2 + $0x1f8] sm:$0xff]
        %v2571 = vld [vmem:[#allocation2 + $0x200] sm:$0x1]
        %v2572 = vlaneseq
        %v2573 = vshrl.u32 %v2572, 7
        %v2574 = vsub.s32 0, %v2573
        %v2575 = vrot.slane %v2571, %v2574
        %v2576 = vsel %vm1655, %v2237, 0
        %v2578 = vsel %vm1655, %v2242, 0
        %v2580 = vsel %vm1655, %v2247, 0
        %v2582 = vsel %vm1655, %v2252, 0
        %v2584 = vsel %vm1655, %v2257, 0
        %v2586 = vsel %vm1655, %v2262, 0
        %v2588 = vsel %vm1655, %v2267, 0
        %2590 = vmatprep.subr.mxu0 0.0
        %2591 = vmatpush1.msra.mxu0 %v2569
        %2592 = vmatprep.subr.mxu0 0.0
        %2593 = vmatpush1.msra.mxu0 %v2570
        %2594 = vmatprep.subr.mxu0 0.0
        %2595 = vmatpush1.msra.mxu0 0.0
        %2596 = vmatprep.subr.mxu0 0.0
        %2597 = vmatpush1.msra.mxu0 0.0
        %2598 = vmatprep.subr.mxu0 0.0
        %2599 = vmatpush1.msra.mxu0 0.0
        %2600 = vmatprep.subr.mxu0 0.0
        %2601 = vmatpush1.msra.mxu0 0.0
        %2602 = vmatprep.subr.mxu0 0.0
        %2603 = vmatpush1.msra.mxu0 0.0
        %2604 = vmatprep.subr.mxu0 0.0
        %2605 = vmatpush1.msra.mxu0 0.0
        %2606 = vmatprep.subr.mxu0 0.0
        %2607 = vmatpush1.msra.mxu0 0.0
        %2608 = vmatprep.subr.mxu0 0.0
        %2609 = vmatpush1.msra.mxu0 0.0
        %2610 = vmatprep.subr.mxu0 0.0
        %2611 = vmatpush1.msra.mxu0 0.0
        %2612 = vmatprep.subr.mxu0 0.0
        %2613 = vmatpush1.msra.mxu0 0.0
        %2614 = vmatprep.subr.mxu0 0.0
        %2615 = vmatpush1.msra.mxu0 0.0
        %2616 = vmatprep.subr.mxu0 0.0
        %2617 = vmatpush1.msra.mxu0 0.0
        %2618 = vmatprep.subr.mxu0 0.0
        %2619 = vmatpush1.msra.mxu0 0.0
        %2620 = vmatprep.subr.mxu0 0.0
        %2621 = vmatpush1.msra.mxu0 0.0
        %2622 = vmatprep.subr.mxu0 0.0
        %2623 = vmatpush1.msra.mxu0 0.0
        %2624 = vmatprep.subr.mxu0 0.0
        %2625 = vmatpush1.msra.mxu0 0.0
        %2626 = vmatprep.subr.mxu0 0.0
        %2627 = vmatpush1.msra.mxu0 0.0
        %2628 = vmatprep.subr.mxu0 0.0
        %2629 = vmatpush1.msra.mxu0 0.0
        %2630 = vmatprep.subr.mxu0 0.0
        %2631 = vmatpush1.msra.mxu0 0.0
        %2632 = vmatprep.subr.mxu0 0.0
        %2633 = vmatpush1.msra.mxu0 0.0
        %2634 = vmatprep.subr.mxu0 0.0
        %2635 = vmatpush1.msra.mxu0 0.0
        %2636 = vmatprep.subr.mxu0 0.0
        %2637 = vmatpush1.msra.mxu0 0.0
        %2638 = vmatprep.subr.mxu0 0.0
        %2639 = vmatpush1.msra.mxu0 0.0
        %2640 = vmatprep.subr.mxu0 0.0
        %2641 = vmatpush1.msra.mxu0 0.0
        %2642 = vmatprep.subr.mxu0 0.0
        %2643 = vmatpush1.msra.mxu0 0.0
        %2644 = vmatprep.subr.mxu0 0.0
        %2645 = vmatpush1.msra.mxu0 0.0
        %2646 = vmatprep.subr.mxu0 0.0
        %2647 = vmatpush1.msra.mxu0 0.0
        %2648 = vmatprep.subr.mxu0 0.0
        %2649 = vmatpush1.msra.mxu0 0.0
        %2650 = vmatprep.subr.mxu0 0.0
        %2651 = vmatpush1.msra.mxu0 0.0
        %2652 = vmatprep.subr.mxu0 0.0
        %2653 = vmatpush1.msra.mxu0 0.0
        %2654 = vmatprep.mubr.f32.mxu0 0.0
        %2655 = vmatmul.mubr.f32.gmra.mrb[0].mxu0 %v2576
        %v2656 = vpop.f32.mrb[0].mxu0
        %v2657 = vadd.f32 %v2575, %v2656
        %v2658 = vpop.f32.mrb[0].mxu0
        %2659 = vmatprep.mubr.f32.mxu0 0.0
        %2660 = vmatmul.mubr.f32.gmra.mrb[0].mxu0 %v2578
        %v2661 = vpop.f32.mrb[0].mxu0
        %v2662 = vadd.f32 %v2575, %v2661
        %v2663 = vpop.f32.mrb[0].mxu0
        %2664 = vmatprep.mubr.f32.mxu0 0.0
        %2665 = vmatmul.mubr.f32.gmra.mrb[0].mxu0 %v2580
        %v2666 = vpop.f32.mrb[0].mxu0
        %v2667 = vadd.f32 %v2575, %v2666
        %v2668 = vpop.f32.mrb[0].mxu0
        %2669 = vmatprep.mubr.f32.mxu0 0.0
        %2670 = vmatmul.mubr.f32.gmra.mrb[0].mxu0 %v2582
        %v2671 = vpop.f32.mrb[0].mxu0
        %v2672 = vadd.f32 %v2575, %v2671
        %v2673 = vpop.f32.mrb[0].mxu0
        %2674 = vmatprep.mubr.f32.mxu0 0.0
        %2675 = vmatmul.mubr.f32.gmra.mrb[0].mxu0 %v2584
        %v2676 = vpop.f32.mrb[0].mxu0
        %v2677 = vadd.f32 %v2575, %v2676
        %v2678 = vpop.f32.mrb[0].mxu0
        %2679 = vmatprep.mubr.f32.mxu0 0.0
        %2680 = vmatmul.mubr.f32.gmra.mrb[0].mxu0 %v2586
        %v2681 = vpop.f32.mrb[0].mxu0
        %v2682 = vadd.f32 %v2575, %v2681
        %v2683 = vpop.f32.mrb[0].mxu0
        %2684 = vmatprep.mubr.f32.mxu0 0.0
        %2685 = vmatmul.mubr.f32.gmra.mrb[0].mxu0 %v2588
        %v2686 = vpop.f32.mrb[0].mxu0
        %v2687 = vadd.f32 %v2575, %v2686
        %v2688 = vpop.f32.mrb[0].mxu0
        %2689 = vdwg.mxu0
        %2691 = vset.pattern.permute.xlu0 0
        %2692 = vperm.xlu0 %2691, %v2536
        %v2693 = vpop.permute.xlu0 %2692
        %2696 = vset.pattern.permute.xlu0 0
        %2697 = vperm.xlu0 %2696, %v2541
        %v2698 = vpop.permute.xlu0 %2697
        %2701 = vset.pattern.permute.xlu0 0
        %2702 = vperm.xlu0 %2701, %v2546
        %v2703 = vpop.permute.xlu0 %2702
        %2706 = vset.pattern.permute.xlu0 0
        %2707 = vperm.xlu0 %2706, %v2551
        %v2708 = vpop.permute.xlu0 %2707
        %2711 = vset.pattern.permute.xlu0 0
        %2712 = vperm.xlu0 %2711, %v2556
        %v2713 = vpop.permute.xlu0 %2712
        %2716 = vset.pattern.permute.xlu0 0
        %2717 = vperm.xlu0 %2716, %v2561
        %v2718 = vpop.permute.xlu0 %2717
        %2721 = vset.pattern.permute.xlu0 0
        %2722 = vperm.xlu0 %2721, %v2566
        %v2723 = vpop.permute.xlu0 %2722
        %v2725 = vmul.f32 %v2693, %v2657
        %v2726 = vmul.f32 %v2698, %v2662
        %v2727 = vmul.f32 %v2703, %v2667
        %v2728 = vmul.f32 %v2708, %v2672
        %v2729 = vmul.f32 %v2713, %v2677
        %v2730 = vmul.f32 %v2718, %v2682
        %v2731 = vmul.f32 %v2723, %v2687
        %2732 = vmatprep.subr.mxu0 0.0
        %2733 = vmatpush1.msra.mxu0 %v2725
        %2734 = vmatprep.subr.mxu0 0.0
        %2735 = vmatpush1.msra.mxu0 %v2726
        %2736 = vmatprep.subr.mxu0 0.0
        %2737 = vmatpush1.msra.mxu0 %v2727
        %2738 = vmatprep.subr.mxu0 0.0
        %2739 = vmatpush1.msra.mxu0 %v2728
        %2740 = vmatprep.subr.mxu0 0.0
        %2741 = vmatpush1.msra.mxu0 %v2729
        %2742 = vmatprep.subr.mxu0 0.0
        %2743 = vmatpush1.msra.mxu0 %v2730
        %2744 = vmatprep.subr.mxu0 0.0
        %2745 = vmatpush1.msra.mxu0 %v2731
        %2746 = vmatprep.subr.mxu0 0.0
        %2747 = vmatpush1.msra.mxu0 0.0
        %2748 = vmatprep.subr.mxu0 0.0
        %2749 = vmatpush1.msra.mxu0 0.0
        %2750 = vmatprep.subr.mxu0 0.0
        %2751 = vmatpush1.msra.mxu0 0.0
        %2752 = vmatprep.subr.mxu0 0.0
        %2753 = vmatpush1.msra.mxu0 0.0
        %2754 = vmatprep.subr.mxu0 0.0
        %2755 = vmatpush1.msra.mxu0 0.0
        %2756 = vmatprep.subr.mxu0 0.0
        %2757 = vmatpush1.msra.mxu0 0.0
        %2758 = vmatprep.subr.mxu0 0.0
        %2759 = vmatpush1.msra.mxu0 0.0
        %2760 = vmatprep.subr.mxu0 0.0
        %2761 = vmatpush1.msra.mxu0 0.0
        %2762 = vmatprep.subr.mxu0 0.0
        %2763 = vmatpush1.msra.mxu0 0.0
        %2764 = vmatprep.subr.mxu0 0.0
        %2765 = vmatpush1.msra.mxu0 0.0
        %2766 = vmatprep.subr.mxu0 0.0
        %2767 = vmatpush1.msra.mxu0 0.0
        %2768 = vmatprep.subr.mxu0 0.0
        %2769 = vmatpush1.msra.mxu0 0.0
        %2770 = vmatprep.subr.mxu0 0.0
        %2771 = vmatpush1.msra.mxu0 0.0
        %2772 = vmatprep.subr.mxu0 0.0
        %2773 = vmatpush1.msra.mxu0 0.0
        %2774 = vmatprep.subr.mxu0 0.0
        %2775 = vmatpush1.msra.mxu0 0.0
        %2776 = vmatprep.subr.mxu0 0.0
        %2777 = vmatpush1.msra.mxu0 0.0
        %2778 = vmatprep.subr.mxu0 0.0
        %2779 = vmatpush1.msra.mxu0 0.0
        %2780 = vmatprep.subr.mxu0 0.0
        %2781 = vmatpush1.msra.mxu0 0.0
        %2782 = vmatprep.subr.mxu0 0.0
        %2783 = vmatpush1.msra.mxu0 0.0
        %2784 = vmatprep.subr.mxu0 0.0
        %2785 = vmatpush1.msra.mxu0 0.0
        %2786 = vmatprep.subr.mxu0 0.0
        %2787 = vmatpush1.msra.mxu0 0.0
        %2788 = vmatprep.subr.mxu0 0.0
        %2789 = vmatpush1.msra.mxu0 0.0
        %2790 = vmatprep.subr.mxu0 0.0
        %2791 = vmatpush1.msra.mxu0 0.0
        %2792 = vmatprep.subr.mxu0 0.0
        %2793 = vmatpush1.msra.mxu0 0.0
        %2794 = vmatprep.subr.mxu0 0.0
        %2795 = vmatpush1.msra.mxu0 0.0
        %2796 = vmatprep.mubr.f32.mxu0 0.0
        %2797 = vmatmul.mubr.f32.gmra.mrb[0].mxu0 %v2097
        %v2798 = vpop.f32.mrb[0].mxu0
        %v2799 = vadd.f32 0.0, %v2798
        %v2800 = vpop.f32.mrb[0].mxu0
        %2801 = vdwg.mxu0
        %2802 = vst.msk [vmem:[%s136] sm:$0xff] %vm141, %v2799
        %s2803 = sand.u32 %s67, 1
        %s2804 = scalar_lea.sflag [#allocation4], %s2803
        %s2805 = sand.u32 %s67, 1
        %s2806 = smul.addr %s2805, 8
        %s2807 = scalar_lea.vmem [#allocation5], %s2806
        // Predicated region
        $region33: #{fwd.1} parent=27 // pred_check
          %p2808 = pneg %p77
        $region34: #{fwd.1} parent=27 // pred_check_branch
          %2810 = sbr.rel (%p2808) target = $region36
        $region35: #{fwd.1} parent=27 // pred_region
          %s2812 = ssub.s32 128, 128
          %2813 = vsyncadd %s2804, %s2812
          %s2814 = smul.addr %s17, 128
          %s2815 = scalar_lea.hbm %s2, %s2814
          %s2817 = sshll.u32 %s2807, 4
          %s2818 = int_to_ptr.vmem [resolvable:$true] %s2817
          %2820 = dma.vmem_to_hbm [thread:$0]  %s2818, 128, %s2815, %s2804
        $region36: #{fwd.1} parent=27 // pred_fallthru
          _
      $region28: #{fwd.1} parent=5 // pred_fallthru
        _
      %p2821 = scmp.le.s32.totalorder 2, %s12
      // Predicated region
      $region37: #{fwd.1} parent=5 // pred_check
        %p2822 = pneg %p2821
      $region38: #{fwd.1} parent=5 // pred_check_branch
        %2824 = sbr.rel (%p2822) target = $region40
      $region39: #{fwd.1} parent=5 // pred_region
        %s2825 = ssub.s32 %s12, 2
        // Predicated region
        $region41: #{fwd.1} parent=39 // pred_check
          %p2826 = pneg %p83
        $region42: #{fwd.1} parent=39 // pred_check_branch
          %2828 = sbr.rel (%p2826) target = $region44
        $region43: #{fwd.1} parent=39 // pred_region
          %s2829 = sand.u32 %s68, 1
          %s2830 = scalar_lea.sflag [#allocation4], %s2829
          %s2831 = sand.u32 %s68, 1
          %s2832 = smul.addr %s2831, 8
          %s2833 = scalar_lea.vmem [#allocation5], %s2832
          %2834 = dma.done %s2830, 128
        $region44: #{fwd.1} parent=39 // pred_fallthru
          _
      $region40: #{fwd.1} parent=5 // pred_fallthru
        _
    $region6: #{fwd.1} parent=1 // loop_footer
      %s16 = sadd.s32 1, %s12
    $region7: #{fwd.1} parent=1 // loop_footer_branch
      %11 = sbr.rel target = $region3
    $region8: #{fwd.1} parent=1 // loop_exit
      _
    %2835 = vsyncpa [#allocation3], 1
    %s2836 = scalar_lea.sflag [#allocation3], 1
    %2837 = vsyncpa %s2836, 1
    %2838 = vsyncpa [#allocation4], 1
    %s2839 = scalar_lea.sflag [#allocation4], 1
    %2840 = vsyncpa %s2839, 1

</llo_original>
